<compile_context>
chip_gen: v5e
topology: v5e:2x2
jax: 0.10.0
libtpu: 0.0.40
codegen_flags: <defaults>
</compile_context>

<pallas_src>
import functools
import math

import numpy as np
import jax
import jax.numpy as jnp
from jax.experimental import pallas as pl
from jax.experimental.pallas import tpu as pltpu

# ---------------- model hyper-parameters (small, consistent with the module) ----
NX = 6          # feature dim of x / y
TX = 4          # history length
TY = 6          # future horizon (= y.shape[0])
BS = 2          # batch size
N_HEAD = 2
N_LAYER = 2
NH_LIN = 64     # dim_feedforward
NH_EMB = 32     # d_model
N_ACTION = 5
MAX_LEN = 64    # positional-encoding buffer length
LN_EPS = 1e-5
NEG_INF = -1e30


def make_pe(max_len, d_model):
    position = np.arange(max_len, dtype=np.float32)[:, None]
    div_term = np.exp(np.arange(0, d_model, 2, dtype=np.float32)
                      * (-math.log(10000.0) / d_model))
    pe = np.zeros((max_len, d_model), np.float32)
    pe[:, 0::2] = np.sin(position * div_term)
    pe[:, 1::2] = np.cos(position * div_term)
    return jnp.asarray(pe)                     # (max_len, d_model)


# ======================= single fused forward-pass kernel ======================

def _vae_forward_kernel(
    # --- data ---
    xy_ref,        # (B*S_all, NX)  batch-major flattened [x ; y]
    act_ref,       # (B, A)
    kpm_ref,       # (B, S_enc)     additive key-padding bias (-1e30 / 0)
    dmask_ref,     # (L_dec+1, L_dec+1) additive decoder attention bias
    pe_enc_ref,    # (B*S_enc, D)   pre-tiled positional encoding
    pe_dec_ref,    # (B*L_dec, D)
    # --- input / output projections ---
    w_mu_std_ref, w_enc_proj_ref, b_enc_proj_ref,
    w_dec_act_ref, w_dec_in_ref, b_dec_in_ref,
    w_dec_out_ref, b_dec_out_ref,
    # --- encoder transformer stack (stacked over layers, leading dim = L) ---
    e_wqkv, e_bqkv, e_wo, e_bo, e_wff1, e_bff1, e_wff2, e_bff2,
    e_g1, e_be1, e_g2, e_be2,
    # --- decoder transformer stack ---
    d_wqkv, d_bqkv, d_wo, d_bo, d_wff1, d_bff1, d_wff2, d_bff2,
    d_g1, d_be1, d_g2, d_be2,
    # --- decoder per-layer conditioning linears ---
    w_cond_ref, b_cond_ref,
    # --- outputs ---
    yp_ref,        # (B, Ty, NX)
    mu_ref,        # (B, D)
    logvar_ref,    # (B, D)
    *, B, Tx, Ty, S_all, S_enc, L_dec, n_head):

    f32 = jnp.float32
    D = w_enc_proj_ref.shape[1]
    dh = D // n_head
    n_layer = e_wqkv.shape[0]
    scale = 1.0 / math.sqrt(dh)

    def matmul(a, w, b=None):
        r = jnp.dot(a, w, preferred_element_type=f32)
        return r if b is None else r + b

    def layernorm(x, g, beta):
        m = jnp.mean(x, axis=-1, keepdims=True)
        xc = x - m
        var = jnp.mean(xc * xc, axis=-1, keepdims=True)
        return xc * jax.lax.rsqrt(var + LN_EPS) * g + beta

    def gelu(h):
        # TODO(synk): tanh-approximate gelu (PyTorch default F.gelu is exact erf).
        c = 0.7978845608028654   # sqrt(2/pi)
        return 0.5 * h * (1.0 + jnp.tanh(c * (h + 0.044715 * h * h * h)))

    def mha(slab, S, wqkv, bqkv, wo, bo, bias_list):
        # slab: (B*S, D) batch-major; bias_list[b]: (1,S) or (S,S) additive.
        qkv = matmul(slab, wqkv, bqkv)                          # (B*S, 3D)
        rows = []
        for b in range(B):
            r0 = b * S
            heads = []
            for h in range(n_head):
                q = qkv[r0:r0 + S, h * dh:(h + 1) * dh]
                k = qkv[r0:r0 + S, D + h * dh:D + (h + 1) * dh]
                v = qkv[r0:r0 + S, 2 * D + h * dh:2 * D + (h + 1) * dh]
                s = jax.lax.dot_general(q, k, (((1,), (1,)), ((), ())),
                                        preferred_element_type=f32) * scale
                s = s + bias_list[b]
                m = jnp.max(s, axis=-1, keepdims=True)
                p = jnp.exp(s - m)
                denom = jnp.sum(p, axis=-1, keepdims=True)
                o = jnp.dot(p, v, preferred_element_type=f32)
                # fold softmax normalization into the p@v epilogue (EUP recip)
                heads.append(o * pl.reciprocal(denom, approx=True))
            rows.append(jnp.concatenate(heads, axis=-1))        # (S, D)
        attn = jnp.concatenate(rows, axis=0)                    # (B*S, D)
        return matmul(attn, wo, bo)

    def encoder_layer(slab, S, bias_list, wqkv, bqkv, wo, bo,
                      wff1, bff1, wff2, bff2, g1, be1, g2, be2):
        # PyTorch nn.TransformerEncoderLayer, post-norm, gelu, eval mode.
        a = mha(slab, S, wqkv, bqkv, wo, bo, bias_list)
        h1 = layernorm(slab + a, g1, be1)
        ff = matmul(gelu(matmul(h1, wff1, bff1)), wff2, bff2)
        return layernorm(h1 + ff, g2, be2)

    act = act_ref[...].astype(f32)                              # (B, A)
    xy = xy_ref[...].astype(f32)                                # (B*S_all, NX)

    # ------------------------------- encoder -----------------------------------
    hact2 = matmul(act, w_mu_std_ref[...])                      # (B, 2D), bias-free
    hy = matmul(xy, w_enc_proj_ref[...], b_enc_proj_ref[...])   # (B*S_all, D)
    parts = []
    for b in range(B):
        parts.append(hact2[b:b + 1, 0:D])                       # mu token
        parts.append(hact2[b:b + 1, D:2 * D])                   # logvar token
        parts.append(hy[b * S_all:(b + 1) * S_all, :])
    eslab = jnp.concatenate(parts, axis=0) + pe_enc_ref[...]    # (B*S_enc, D)

    kpm = kpm_ref[...]                                          # (B, S_enc)
    enc_bias = [kpm[b:b + 1, :] for b in range(B)]              # per-key bias rows
    for l in range(n_layer):
        eslab = encoder_layer(eslab, S_enc, enc_bias,
                              e_wqkv[l], e_bqkv[l], e_wo[l], e_bo[l],
                              e_wff1[l], e_bff1[l], e_wff2[l], e_bff2[l],
                              e_g1[l], e_be1[l], e_g2[l], e_be2[l])

    mu = jnp.concatenate(
        [eslab[b * S_enc:b * S_enc + 1, :] for b in range(B)], axis=0)
    logvar = jnp.concatenate(
        [eslab[b * S_enc + 1:b * S_enc + 2, :] for b in range(B)], axis=0)
    mu_ref[...] = mu.astype(mu_ref.dtype)
    logvar_ref[...] = logvar.astype(logvar_ref.dtype)

    # ------------------------------- decoder -----------------------------------
    z = mu                                                      # eval-mode reparameterize
    hact_d = z + matmul(act, w_dec_act_ref[...])                # (B, D)

    x_hist = jnp.concatenate(
        [xy[b * S_all:b * S_all + Tx, :] for b in range(B)], axis=0)   # (B*Tx, NX)
    hx = matmul(x_hist, w_dec_in_ref[...], b_dec_in_ref[...])          # (B*Tx, D)

    parts = []
    for b in range(B):
        parts.append(hx[b * Tx:(b + 1) * Tx, :])
        last = hx[b * Tx + Tx - 1:b * Tx + Tx, :]               # last history step
        parts.append(jnp.broadcast_to(last, (Ty, D)))           # idx = [...,Tx-1]*Ty
    out = jnp.concatenate(parts, axis=0) + pe_dec_ref[...]      # (B*L_dec, D)

    dbias = dmask_ref[...]                                      # (L_dec+1, L_dec+1)
    dec_bias = [dbias] * B
    Ld, Ld1 = L_dec, L_dec + 1
    for l in range(n_layer):
        cond = matmul(hact_d, w_cond_ref[l], b_cond_ref[l])     # (B, D)
        parts = []
        for b in range(B):
            parts.append(cond[b:b + 1, :])                      # prepend cond row
            parts.append(out[b * Ld:(b + 1) * Ld, :])
        slab = jnp.concatenate(parts, axis=0)                   # (B*(Ld+1), D)
        slab = encoder_layer(slab, Ld1, dec_bias,
                             d_wqkv[l], d_bqkv[l], d_wo[l], d_bo[l],
                             d_wff1[l], d_bff1[l], d_wff2[l], d_bff2[l],
                             d_g1[l], d_be1[l], d_g2[l], d_be2[l])
        out = jnp.concatenate(
            [slab[b * Ld1 + 1:(b + 1) * Ld1, :] for b in range(B)], axis=0)

    yt = jnp.concatenate(
        [out[b * Ld + Tx:(b + 1) * Ld, :] for b in range(B)], axis=0)  # (B*Ty, D)
    yp = matmul(yt, w_dec_out_ref[...], b_dec_out_ref[...])            # (B*Ty, NX)
    for b in range(B):
        x_last = xy[b * S_all + Tx - 1:b * S_all + Tx, :]              # (1, NX)
        yp_ref[b] = (yp[b * Ty:(b + 1) * Ty, :] + x_last).astype(yp_ref.dtype)


# ================================ model forward ================================

def vae_forward(params, x, y, act, fn_mask):
    """x:(Tx,B,nx)  y:(Ty,B,nx)  act:(B,n_action)  fn_mask:(B,Ty) or (B,Tx+Ty) bool."""
    Tx, B, _ = x.shape
    Ty = y.shape[0]
    D = NH_EMB
    S_all = Tx + Ty
    S_enc = S_all + 2
    L_dec = Tx + Ty
    Ld1 = L_dec + 1

    if fn_mask.shape[1] == Ty:
        fn_mask = jnp.concatenate(
            [jnp.zeros((B, Tx), dtype=jnp.bool_), fn_mask], axis=1)

    # encoder key-padding bias for [mu_tok, logvar_tok] + sequence (True = masked)
    kpm = jnp.concatenate([fn_mask[:, :1], fn_mask[:, :1], fn_mask], axis=1)
    kpm_bias = jnp.where(kpm, NEG_INF, 0.0).astype(jnp.float32)        # (B, S_enc)

    # static decoder attention mask -> additive bias (built exactly like PyTorch)
    m1 = np.zeros((Tx + 1, Ld1), np.float32); m1[:, :Tx + 1] = 1.0
    m2 = np.tril(np.ones((Ty, Ld1), np.float32), k=Tx)
    am = np.concatenate([m1, m2], axis=0)                              # (Ld1, Ld1)
    dec_bias = jnp.asarray(np.where(am == 0.0, NEG_INF, 0.0).astype(np.float32))

    # batch-major flattened data slab (tiny layout plumbing stays outside kernel)
    xy = jnp.transpose(jnp.concatenate([x, y], axis=0), (1, 0, 2)).reshape(
        B * S_all, NX)

    pe = params["pe"]
    pe_enc = jnp.tile(pe[:S_enc], (B, 1))                              # (B*S_enc, D)
    pe_dec = jnp.tile(pe[:L_dec], (B, 1))                              # (B*L_dec, D)

    enc, dec = params["enc"], params["dec"]
    inputs = (
        xy, act.astype(jnp.float32), kpm_bias, dec_bias, pe_enc, pe_dec,
        params["w_mu_std"], params["w_enc_proj"], params["b_enc_proj"],
        params["w_dec_act"], params["w_dec_in"], params["b_dec_in"],
        params["w_dec_out"], params["b_dec_out"],
        enc["w_qkv"], enc["b_qkv"], enc["w_o"], enc["b_o"],
        enc["w_ff1"], enc["b_ff1"], enc["w_ff2"], enc["b_ff2"],
        enc["g1"], enc["be1"], enc["g2"], enc["be2"],
        dec["w_qkv"], dec["b_qkv"], dec["w_o"], dec["b_o"],
        dec["w_ff1"], dec["b_ff1"], dec["w_ff2"], dec["b_ff2"],
        dec["g1"], dec["be1"], dec["g2"], dec["be2"],
        params["w_cond"], params["b_cond"],
    )

    kernel = functools.partial(
        _vae_forward_kernel, B=B, Tx=Tx, Ty=Ty, S_all=S_all,
        S_enc=S_enc, L_dec=L_dec, n_head=N_HEAD)

    yp_btn, mu, logvar = pl.pallas_call(
        kernel,
        out_shape=(jax.ShapeDtypeStruct((B, Ty, NX), jnp.float32),
                   jax.ShapeDtypeStruct((B, D), jnp.float32),
                   jax.ShapeDtypeStruct((B, D), jnp.float32)),
        in_specs=[pl.BlockSpec(memory_space=pltpu.MemorySpace.VMEM)] * len(inputs),
        out_specs=(pl.BlockSpec(memory_space=pltpu.MemorySpace.VMEM),) * 3,
    )(*inputs)

    yp = jnp.transpose(yp_btn, (1, 0, 2))                              # (Ty, B, nx)
    return yp, mu, logvar


# ============================== parameter creation =============================

def init_params(key):
    D, F_, A, L = NH_EMB, NH_LIN, N_ACTION, N_LAYER
    keys = iter(jax.random.split(key, 64))

    def w(shape, fan_in):
        return jax.random.normal(next(keys), shape, jnp.float32) / np.sqrt(fan_in)

    def stacked_layer_block():
        return dict(
            w_qkv=w((L, D, 3 * D), D), b_qkv=jnp.zeros((L, 1, 3 * D), jnp.float32),
            w_o=w((L, D, D), D),       b_o=jnp.zeros((L, 1, D), jnp.float32),
            w_ff1=w((L, D, F_), D),    b_ff1=jnp.zeros((L, 1, F_), jnp.float32),
            w_ff2=w((L, F_, D), F_),   b_ff2=jnp.zeros((L, 1, D), jnp.float32),
            g1=jnp.ones((L, 1, D), jnp.float32), be1=jnp.zeros((L, 1, D), jnp.float32),
            g2=jnp.ones((L, 1, D), jnp.float32), be2=jnp.zeros((L, 1, D), jnp.float32),
        )

    return dict(
        w_mu_std=w((A, 2 * D), A),                                  # bias=False
        w_enc_proj=w((NX, D), NX), b_enc_proj=jnp.zeros((1, D), jnp.float32),
        w_dec_act=w((A, D), A),                                     # bias=False
        w_dec_in=w((NX, D), NX), b_dec_in=jnp.zeros((1, D), jnp.float32),
        w_dec_out=w((D, NX), D), b_dec_out=jnp.zeros((1, NX), jnp.float32),
        enc=stacked_layer_block(),
        dec=stacked_layer_block(),
        w_cond=w((N_LAYER, D, D), D),
        b_cond=jnp.zeros((N_LAYER, 1, D), jnp.float32),
        pe=make_pe(MAX_LEN, D),
    )


# ===================================== main ====================================

if __name__ == "__main__":
    key = jax.random.PRNGKey(0)
    kp, kx, ky, ka = jax.random.split(key, 4)

    params = init_params(kp)
    x = jax.random.normal(kx, (TX, BS, NX), jnp.float32)            # history
    y = jax.random.normal(ky, (TY, BS, NX), jnp.float32)            # future
    act = jax.nn.one_hot(jnp.arange(BS) % N_ACTION, N_ACTION, dtype=jnp.float32)
    fn_mask = jnp.zeros((BS, TY), dtype=jnp.bool_)                  # no padding

    yp, mu, logvar = jax.jit(vae_forward)(params, x, y, act, fn_mask)
    jax.block_until_ready((yp, mu, logvar))

    assert yp.shape == (TY, BS, NX), yp.shape
    assert mu.shape == (BS, NH_EMB), mu.shape
    assert logvar.shape == (BS, NH_EMB), logvar.shape
    assert np.all(np.isfinite(np.asarray(yp)))
    assert np.all(np.isfinite(np.asarray(mu)))
    assert np.all(np.isfinite(np.asarray(logvar)))
    print("KERNEL_OK")
</pallas_src>

<mosaic_0001>
module attributes {stable_mosaic.version = 11 : i64} {
  func.func @_vae_forward_kernel(%arg0: memref<20x6xf32, #tpu.memory_space<vmem>>, %arg1: memref<2x5xf32, #tpu.memory_space<vmem>>, %arg2: memref<2x12xf32, #tpu.memory_space<vmem>>, %arg3: memref<11x11xf32, #tpu.memory_space<vmem>>, %arg4: memref<24x32xf32, #tpu.memory_space<vmem>>, %arg5: memref<20x32xf32, #tpu.memory_space<vmem>>, %arg6: memref<5x64xf32, #tpu.memory_space<vmem>>, %arg7: memref<6x32xf32, #tpu.memory_space<vmem>>, %arg8: memref<1x32xf32, #tpu.memory_space<vmem>>, %arg9: memref<5x32xf32, #tpu.memory_space<vmem>>, %arg10: memref<6x32xf32, #tpu.memory_space<vmem>>, %arg11: memref<1x32xf32, #tpu.memory_space<vmem>>, %arg12: memref<32x6xf32, #tpu.memory_space<vmem>>, %arg13: memref<1x6xf32, #tpu.memory_space<vmem>>, %arg14: memref<2x32x96xf32, #tpu.memory_space<vmem>>, %arg15: memref<2x1x96xf32, #tpu.memory_space<vmem>>, %arg16: memref<2x32x32xf32, #tpu.memory_space<vmem>>, %arg17: memref<2x1x32xf32, #tpu.memory_space<vmem>>, %arg18: memref<2x32x64xf32, #tpu.memory_space<vmem>>, %arg19: memref<2x1x64xf32, #tpu.memory_space<vmem>>, %arg20: memref<2x64x32xf32, #tpu.memory_space<vmem>>, %arg21: memref<2x1x32xf32, #tpu.memory_space<vmem>>, %arg22: memref<2x1x32xf32, #tpu.memory_space<vmem>>, %arg23: memref<2x1x32xf32, #tpu.memory_space<vmem>>, %arg24: memref<2x1x32xf32, #tpu.memory_space<vmem>>, %arg25: memref<2x1x32xf32, #tpu.memory_space<vmem>>, %arg26: memref<2x32x96xf32, #tpu.memory_space<vmem>>, %arg27: memref<2x1x96xf32, #tpu.memory_space<vmem>>, %arg28: memref<2x32x32xf32, #tpu.memory_space<vmem>>, %arg29: memref<2x1x32xf32, #tpu.memory_space<vmem>>, %arg30: memref<2x32x64xf32, #tpu.memory_space<vmem>>, %arg31: memref<2x1x64xf32, #tpu.memory_space<vmem>>, %arg32: memref<2x64x32xf32, #tpu.memory_space<vmem>>, %arg33: memref<2x1x32xf32, #tpu.memory_space<vmem>>, %arg34: memref<2x1x32xf32, #tpu.memory_space<vmem>>, %arg35: memref<2x1x32xf32, #tpu.memory_space<vmem>>, %arg36: memref<2x1x32xf32, #tpu.memory_space<vmem>>, %arg37: memref<2x1x32xf32, #tpu.memory_space<vmem>>, %arg38: memref<2x32x32xf32, #tpu.memory_space<vmem>>, %arg39: memref<2x1x32xf32, #tpu.memory_space<vmem>>, %arg40: memref<2x6x6xf32, #tpu.memory_space<vmem>>, %arg41: memref<2x32xf32, #tpu.memory_space<vmem>>, %arg42: memref<2x32xf32, #tpu.memory_space<vmem>>) attributes {dimension_semantics = [], scalar_prefetch = 0 : i64, scratch_operands = 0 : i64, tpu.core_type = #tpu.core_type<tc>} {
    %c0 = arith.constant 0 : index
    %c0_0 = arith.constant 0 : index
    %0 = vector.load %arg1[%c0, %c0_0] : memref<2x5xf32, #tpu.memory_space<vmem>>, vector<2x5xf32>
    %c0_1 = arith.constant 0 : index
    %c0_2 = arith.constant 0 : index
    %1 = vector.load %arg0[%c0_1, %c0_2] : memref<20x6xf32, #tpu.memory_space<vmem>>, vector<20x6xf32>
    %c0_3 = arith.constant 0 : index
    %c0_4 = arith.constant 0 : index
    %2 = vector.load %arg6[%c0_3, %c0_4] : memref<5x64xf32, #tpu.memory_space<vmem>>, vector<5x64xf32>
    %cst = arith.constant dense<0.000000e+00> : vector<2x64xf32>
    %3 = tpu.matmul %0, %2, %cst {dimension_numbers = #tpu.dot_dimension_numbers<[1], [0], [0], [1], [0, 0, 1, 1], [], []>} : vector<2x5xf32>, vector<5x64xf32>, vector<2x64xf32> -> vector<2x64xf32>
    %c0_5 = arith.constant 0 : index
    %c0_6 = arith.constant 0 : index
    %4 = vector.load %arg7[%c0_5, %c0_6] : memref<6x32xf32, #tpu.memory_space<vmem>>, vector<6x32xf32>
    %c0_7 = arith.constant 0 : index
    %c0_8 = arith.constant 0 : index
    %5 = vector.load %arg8[%c0_7, %c0_8] : memref<1x32xf32, #tpu.memory_space<vmem>>, vector<1x32xf32>
    %cst_9 = arith.constant dense<0.000000e+00> : vector<20x32xf32>
    %6 = tpu.matmul %1, %4, %cst_9 {dimension_numbers = #tpu.dot_dimension_numbers<[1], [0], [0], [1], [0, 0, 1, 1], [], []>} : vector<20x6xf32>, vector<6x32xf32>, vector<20x32xf32> -> vector<20x32xf32>
    %7 = vector.broadcast %5 : vector<1x32xf32> to vector<20x32xf32>
    %8 = arith.addf %6, %7 : vector<20x32xf32>
    %9 = vector.extract_strided_slice %3 {offsets = [0, 0], sizes = [1, 32], strides = [1, 1]} : vector<2x64xf32> to vector<1x32xf32>
    %10 = vector.extract_strided_slice %3 {offsets = [0, 32], sizes = [1, 32], strides = [1, 1]} : vector<2x64xf32> to vector<1x32xf32>
    %11 = vector.extract_strided_slice %8 {offsets = [0, 0], sizes = [10, 32], strides = [1, 1]} : vector<20x32xf32> to vector<10x32xf32>
    %12 = vector.extract_strided_slice %3 {offsets = [1, 0], sizes = [1, 32], strides = [1, 1]} : vector<2x64xf32> to vector<1x32xf32>
    %13 = vector.extract_strided_slice %3 {offsets = [1, 32], sizes = [1, 32], strides = [1, 1]} : vector<2x64xf32> to vector<1x32xf32>
    %14 = vector.extract_strided_slice %8 {offsets = [10, 0], sizes = [10, 32], strides = [1, 1]} : vector<20x32xf32> to vector<10x32xf32>
    %15 = tpu.concatenate %9, %10, %11, %12, %13, %14 in 0 : vector<1x32xf32>, vector<1x32xf32>, vector<10x32xf32>, vector<1x32xf32>, vector<1x32xf32>, vector<10x32xf32> -> vector<24x32xf32>
    %c0_10 = arith.constant 0 : index
    %c0_11 = arith.constant 0 : index
    %16 = vector.load %arg4[%c0_10, %c0_11] : memref<24x32xf32, #tpu.memory_space<vmem>>, vector<24x32xf32>
    %17 = arith.addf %15, %16 : vector<24x32xf32>
    %c0_12 = arith.constant 0 : index
    %c0_13 = arith.constant 0 : index
    %18 = vector.load %arg2[%c0_12, %c0_13] : memref<2x12xf32, #tpu.memory_space<vmem>>, vector<2x12xf32>
    %19 = vector.extract_strided_slice %18 {offsets = [0, 0], sizes = [1, 12], strides = [1, 1]} : vector<2x12xf32> to vector<1x12xf32>
    %20 = vector.extract_strided_slice %18 {offsets = [1, 0], sizes = [1, 12], strides = [1, 1]} : vector<2x12xf32> to vector<1x12xf32>
    %c0_14 = arith.constant 0 : index
    %c0_15 = arith.constant 0 : index
    %c0_16 = arith.constant 0 : index
    %21 = vector.load %arg14[%c0_14, %c0_15, %c0_16] : memref<2x32x96xf32, #tpu.memory_space<vmem>>, vector<1x32x96xf32>
    %22 = vector.shape_cast %21 : vector<1x32x96xf32> to vector<32x96xf32>
    %c0_17 = arith.constant 0 : index
    %c0_18 = arith.constant 0 : index
    %c0_19 = arith.constant 0 : index
    %23 = vector.load %arg15[%c0_17, %c0_18, %c0_19] : memref<2x1x96xf32, #tpu.memory_space<vmem>>, vector<1x1x96xf32>
    %24 = vector.shape_cast %23 : vector<1x1x96xf32> to vector<1x96xf32>
    %c0_20 = arith.constant 0 : index
    %c0_21 = arith.constant 0 : index
    %c0_22 = arith.constant 0 : index
    %25 = vector.load %arg16[%c0_20, %c0_21, %c0_22] : memref<2x32x32xf32, #tpu.memory_space<vmem>>, vector<1x32x32xf32>
    %26 = vector.shape_cast %25 : vector<1x32x32xf32> to vector<32x32xf32>
    %c0_23 = arith.constant 0 : index
    %c0_24 = arith.constant 0 : index
    %c0_25 = arith.constant 0 : index
    %27 = vector.load %arg17[%c0_23, %c0_24, %c0_25] : memref<2x1x32xf32, #tpu.memory_space<vmem>>, vector<1x1x32xf32>
    %28 = vector.shape_cast %27 : vector<1x1x32xf32> to vector<1x32xf32>
    %c0_26 = arith.constant 0 : index
    %c0_27 = arith.constant 0 : index
    %c0_28 = arith.constant 0 : index
    %29 = vector.load %arg18[%c0_26, %c0_27, %c0_28] : memref<2x32x64xf32, #tpu.memory_space<vmem>>, vector<1x32x64xf32>
    %30 = vector.shape_cast %29 : vector<1x32x64xf32> to vector<32x64xf32>
    %c0_29 = arith.constant 0 : index
    %c0_30 = arith.constant 0 : index
    %c0_31 = arith.constant 0 : index
    %31 = vector.load %arg19[%c0_29, %c0_30, %c0_31] : memref<2x1x64xf32, #tpu.memory_space<vmem>>, vector<1x1x64xf32>
    %32 = vector.shape_cast %31 : vector<1x1x64xf32> to vector<1x64xf32>
    %c0_32 = arith.constant 0 : index
    %c0_33 = arith.constant 0 : index
    %c0_34 = arith.constant 0 : index
    %33 = vector.load %arg20[%c0_32, %c0_33, %c0_34] : memref<2x64x32xf32, #tpu.memory_space<vmem>>, vector<1x64x32xf32>
    %34 = vector.shape_cast %33 : vector<1x64x32xf32> to vector<64x32xf32>
    %c0_35 = arith.constant 0 : index
    %c0_36 = arith.constant 0 : index
    %c0_37 = arith.constant 0 : index
    %35 = vector.load %arg21[%c0_35, %c0_36, %c0_37] : memref<2x1x32xf32, #tpu.memory_space<vmem>>, vector<1x1x32xf32>
    %36 = vector.shape_cast %35 : vector<1x1x32xf32> to vector<1x32xf32>
    %c0_38 = arith.constant 0 : index
    %c0_39 = arith.constant 0 : index
    %c0_40 = arith.constant 0 : index
    %37 = vector.load %arg22[%c0_38, %c0_39, %c0_40] : memref<2x1x32xf32, #tpu.memory_space<vmem>>, vector<1x1x32xf32>
    %38 = vector.shape_cast %37 : vector<1x1x32xf32> to vector<1x32xf32>
    %c0_41 = arith.constant 0 : index
    %c0_42 = arith.constant 0 : index
    %c0_43 = arith.constant 0 : index
    %39 = vector.load %arg23[%c0_41, %c0_42, %c0_43] : memref<2x1x32xf32, #tpu.memory_space<vmem>>, vector<1x1x32xf32>
    %40 = vector.shape_cast %39 : vector<1x1x32xf32> to vector<1x32xf32>
    %c0_44 = arith.constant 0 : index
    %c0_45 = arith.constant 0 : index
    %c0_46 = arith.constant 0 : index
    %41 = vector.load %arg24[%c0_44, %c0_45, %c0_46] : memref<2x1x32xf32, #tpu.memory_space<vmem>>, vector<1x1x32xf32>
    %42 = vector.shape_cast %41 : vector<1x1x32xf32> to vector<1x32xf32>
    %c0_47 = arith.constant 0 : index
    %c0_48 = arith.constant 0 : index
    %c0_49 = arith.constant 0 : index
    %43 = vector.load %arg25[%c0_47, %c0_48, %c0_49] : memref<2x1x32xf32, #tpu.memory_space<vmem>>, vector<1x1x32xf32>
    %44 = vector.shape_cast %43 : vector<1x1x32xf32> to vector<1x32xf32>
    %cst_50 = arith.constant dense<0.000000e+00> : vector<24x96xf32>
    %45 = tpu.matmul %17, %22, %cst_50 {dimension_numbers = #tpu.dot_dimension_numbers<[1], [0], [0], [1], [0, 0, 1, 1], [], []>} : vector<24x32xf32>, vector<32x96xf32>, vector<24x96xf32> -> vector<24x96xf32>
    %46 = vector.broadcast %24 : vector<1x96xf32> to vector<24x96xf32>
    %47 = arith.addf %45, %46 : vector<24x96xf32>
    %48 = vector.extract_strided_slice %47 {offsets = [0, 0], sizes = [12, 16], strides = [1, 1]} : vector<24x96xf32> to vector<12x16xf32>
    %49 = vector.extract_strided_slice %47 {offsets = [0, 32], sizes = [12, 16], strides = [1, 1]} : vector<24x96xf32> to vector<12x16xf32>
    %50 = vector.extract_strided_slice %47 {offsets = [0, 64], sizes = [12, 16], strides = [1, 1]} : vector<24x96xf32> to vector<12x16xf32>
    %cst_51 = arith.constant dense<0.000000e+00> : vector<12x12xf32>
    %51 = tpu.matmul %48, %49, %cst_51 {dimension_numbers = #tpu.dot_dimension_numbers<[1], [1], [0], [0], [0, 0, 1, 0], [], []>} : vector<12x16xf32>, vector<12x16xf32>, vector<12x12xf32> -> vector<12x12xf32>
    %cst_52 = arith.constant 2.500000e-01 : f32
    %52 = vector.broadcast %cst_52 : f32 to vector<12x12xf32>
    %53 = arith.mulf %51, %52 : vector<12x12xf32>
    %54 = vector.broadcast %19 : vector<1x12xf32> to vector<12x12xf32>
    %55 = arith.addf %53, %54 : vector<12x12xf32>
    %cst_53 = arith.constant dense<0xFF800000> : vector<12xf32>
    %56 = vector.multi_reduction <maximumf>, %55, %cst_53 [1] : vector<12x12xf32> to vector<12xf32>
    %57 = vector.shape_cast %56 : vector<12xf32> to vector<12x1xf32>
    %58 = vector.broadcast %57 : vector<12x1xf32> to vector<12x12xf32>
    %59 = arith.subf %55, %58 : vector<12x12xf32>
    %60 = math.exp %59 : vector<12x12xf32>
    %cst_54 = arith.constant dense<0.000000e+00> : vector<12xf32>
    %61 = vector.multi_reduction <add>, %60, %cst_54 [1] : vector<12x12xf32> to vector<12xf32>
    %62 = vector.shape_cast %61 : vector<12xf32> to vector<12x1xf32>
    %cst_55 = arith.constant dense<0.000000e+00> : vector<12x16xf32>
    %63 = tpu.matmul %60, %50, %cst_55 {dimension_numbers = #tpu.dot_dimension_numbers<[1], [0], [0], [1], [0, 0, 1, 1], [], []>} : vector<12x12xf32>, vector<12x16xf32>, vector<12x16xf32> -> vector<12x16xf32>
    %64 = tpu.reciprocal %62 {approx = true} : vector<12x1xf32> -> vector<12x1xf32>
    %65 = vector.broadcast %64 : vector<12x1xf32> to vector<12x16xf32>
    %66 = arith.mulf %63, %65 : vector<12x16xf32>
    %67 = vector.extract_strided_slice %47 {offsets = [0, 16], sizes = [12, 16], strides = [1, 1]} : vector<24x96xf32> to vector<12x16xf32>
    %68 = vector.extract_strided_slice %47 {offsets = [0, 48], sizes = [12, 16], strides = [1, 1]} : vector<24x96xf32> to vector<12x16xf32>
    %69 = vector.extract_strided_slice %47 {offsets = [0, 80], sizes = [12, 16], strides = [1, 1]} : vector<24x96xf32> to vector<12x16xf32>
    %cst_56 = arith.constant dense<0.000000e+00> : vector<12x12xf32>
    %70 = tpu.matmul %67, %68, %cst_56 {dimension_numbers = #tpu.dot_dimension_numbers<[1], [1], [0], [0], [0, 0, 1, 0], [], []>} : vector<12x16xf32>, vector<12x16xf32>, vector<12x12xf32> -> vector<12x12xf32>
    %cst_57 = arith.constant 2.500000e-01 : f32
    %71 = vector.broadcast %cst_57 : f32 to vector<12x12xf32>
    %72 = arith.mulf %70, %71 : vector<12x12xf32>
    %73 = vector.broadcast %19 : vector<1x12xf32> to vector<12x12xf32>
    %74 = arith.addf %72, %73 : vector<12x12xf32>
    %cst_58 = arith.constant dense<0xFF800000> : vector<12xf32>
    %75 = vector.multi_reduction <maximumf>, %74, %cst_58 [1] : vector<12x12xf32> to vector<12xf32>
    %76 = vector.shape_cast %75 : vector<12xf32> to vector<12x1xf32>
    %77 = vector.broadcast %76 : vector<12x1xf32> to vector<12x12xf32>
    %78 = arith.subf %74, %77 : vector<12x12xf32>
    %79 = math.exp %78 : vector<12x12xf32>
    %cst_59 = arith.constant dense<0.000000e+00> : vector<12xf32>
    %80 = vector.multi_reduction <add>, %79, %cst_59 [1] : vector<12x12xf32> to vector<12xf32>
    %81 = vector.shape_cast %80 : vector<12xf32> to vector<12x1xf32>
    %cst_60 = arith.constant dense<0.000000e+00> : vector<12x16xf32>
    %82 = tpu.matmul %79, %69, %cst_60 {dimension_numbers = #tpu.dot_dimension_numbers<[1], [0], [0], [1], [0, 0, 1, 1], [], []>} : vector<12x12xf32>, vector<12x16xf32>, vector<12x16xf32> -> vector<12x16xf32>
    %83 = tpu.reciprocal %81 {approx = true} : vector<12x1xf32> -> vector<12x1xf32>
    %84 = vector.broadcast %83 : vector<12x1xf32> to vector<12x16xf32>
    %85 = arith.mulf %82, %84 : vector<12x16xf32>
    %86 = tpu.concatenate %66, %85 in 1 : vector<12x16xf32>, vector<12x16xf32> -> vector<12x32xf32>
    %87 = vector.extract_strided_slice %47 {offsets = [12, 0], sizes = [12, 16], strides = [1, 1]} : vector<24x96xf32> to vector<12x16xf32>
    %88 = vector.extract_strided_slice %47 {offsets = [12, 32], sizes = [12, 16], strides = [1, 1]} : vector<24x96xf32> to vector<12x16xf32>
    %89 = vector.extract_strided_slice %47 {offsets = [12, 64], sizes = [12, 16], strides = [1, 1]} : vector<24x96xf32> to vector<12x16xf32>
    %cst_61 = arith.constant dense<0.000000e+00> : vector<12x12xf32>
    %90 = tpu.matmul %87, %88, %cst_61 {dimension_numbers = #tpu.dot_dimension_numbers<[1], [1], [0], [0], [0, 0, 1, 0], [], []>} : vector<12x16xf32>, vector<12x16xf32>, vector<12x12xf32> -> vector<12x12xf32>
    %cst_62 = arith.constant 2.500000e-01 : f32
    %91 = vector.broadcast %cst_62 : f32 to vector<12x12xf32>
    %92 = arith.mulf %90, %91 : vector<12x12xf32>
    %93 = vector.broadcast %20 : vector<1x12xf32> to vector<12x12xf32>
    %94 = arith.addf %92, %93 : vector<12x12xf32>
    %cst_63 = arith.constant dense<0xFF800000> : vector<12xf32>
    %95 = vector.multi_reduction <maximumf>, %94, %cst_63 [1] : vector<12x12xf32> to vector<12xf32>
    %96 = vector.shape_cast %95 : vector<12xf32> to vector<12x1xf32>
    %97 = vector.broadcast %96 : vector<12x1xf32> to vector<12x12xf32>
    %98 = arith.subf %94, %97 : vector<12x12xf32>
    %99 = math.exp %98 : vector<12x12xf32>
    %cst_64 = arith.constant dense<0.000000e+00> : vector<12xf32>
    %100 = vector.multi_reduction <add>, %99, %cst_64 [1] : vector<12x12xf32> to vector<12xf32>
    %101 = vector.shape_cast %100 : vector<12xf32> to vector<12x1xf32>
    %cst_65 = arith.constant dense<0.000000e+00> : vector<12x16xf32>
    %102 = tpu.matmul %99, %89, %cst_65 {dimension_numbers = #tpu.dot_dimension_numbers<[1], [0], [0], [1], [0, 0, 1, 1], [], []>} : vector<12x12xf32>, vector<12x16xf32>, vector<12x16xf32> -> vector<12x16xf32>
    %103 = tpu.reciprocal %101 {approx = true} : vector<12x1xf32> -> vector<12x1xf32>
    %104 = vector.broadcast %103 : vector<12x1xf32> to vector<12x16xf32>
    %105 = arith.mulf %102, %104 : vector<12x16xf32>
    %106 = vector.extract_strided_slice %47 {offsets = [12, 16], sizes = [12, 16], strides = [1, 1]} : vector<24x96xf32> to vector<12x16xf32>
    %107 = vector.extract_strided_slice %47 {offsets = [12, 48], sizes = [12, 16], strides = [1, 1]} : vector<24x96xf32> to vector<12x16xf32>
    %108 = vector.extract_strided_slice %47 {offsets = [12, 80], sizes = [12, 16], strides = [1, 1]} : vector<24x96xf32> to vector<12x16xf32>
    %cst_66 = arith.constant dense<0.000000e+00> : vector<12x12xf32>
    %109 = tpu.matmul %106, %107, %cst_66 {dimension_numbers = #tpu.dot_dimension_numbers<[1], [1], [0], [0], [0, 0, 1, 0], [], []>} : vector<12x16xf32>, vector<12x16xf32>, vector<12x12xf32> -> vector<12x12xf32>
    %cst_67 = arith.constant 2.500000e-01 : f32
    %110 = vector.broadcast %cst_67 : f32 to vector<12x12xf32>
    %111 = arith.mulf %109, %110 : vector<12x12xf32>
    %112 = vector.broadcast %20 : vector<1x12xf32> to vector<12x12xf32>
    %113 = arith.addf %111, %112 : vector<12x12xf32>
    %cst_68 = arith.constant dense<0xFF800000> : vector<12xf32>
    %114 = vector.multi_reduction <maximumf>, %113, %cst_68 [1] : vector<12x12xf32> to vector<12xf32>
    %115 = vector.shape_cast %114 : vector<12xf32> to vector<12x1xf32>
    %116 = vector.broadcast %115 : vector<12x1xf32> to vector<12x12xf32>
    %117 = arith.subf %113, %116 : vector<12x12xf32>
    %118 = math.exp %117 : vector<12x12xf32>
    %cst_69 = arith.constant dense<0.000000e+00> : vector<12xf32>
    %119 = vector.multi_reduction <add>, %118, %cst_69 [1] : vector<12x12xf32> to vector<12xf32>
    %120 = vector.shape_cast %119 : vector<12xf32> to vector<12x1xf32>
    %cst_70 = arith.constant dense<0.000000e+00> : vector<12x16xf32>
    %121 = tpu.matmul %118, %108, %cst_70 {dimension_numbers = #tpu.dot_dimension_numbers<[1], [0], [0], [1], [0, 0, 1, 1], [], []>} : vector<12x12xf32>, vector<12x16xf32>, vector<12x16xf32> -> vector<12x16xf32>
    %122 = tpu.reciprocal %120 {approx = true} : vector<12x1xf32> -> vector<12x1xf32>
    %123 = vector.broadcast %122 : vector<12x1xf32> to vector<12x16xf32>
    %124 = arith.mulf %121, %123 : vector<12x16xf32>
    %125 = tpu.concatenate %105, %124 in 1 : vector<12x16xf32>, vector<12x16xf32> -> vector<12x32xf32>
    %126 = tpu.concatenate %86, %125 in 0 : vector<12x32xf32>, vector<12x32xf32> -> vector<24x32xf32>
    %cst_71 = arith.constant dense<0.000000e+00> : vector<24x32xf32>
    %127 = tpu.matmul %126, %26, %cst_71 {dimension_numbers = #tpu.dot_dimension_numbers<[1], [0], [0], [1], [0, 0, 1, 1], [], []>} : vector<24x32xf32>, vector<32x32xf32>, vector<24x32xf32> -> vector<24x32xf32>
    %128 = vector.broadcast %28 : vector<1x32xf32> to vector<24x32xf32>
    %129 = arith.addf %127, %128 : vector<24x32xf32>
    %130 = arith.addf %17, %129 : vector<24x32xf32>
    %cst_72 = arith.constant dense<0.000000e+00> : vector<24xf32>
    %131 = vector.multi_reduction <add>, %130, %cst_72 [1] : vector<24x32xf32> to vector<24xf32>
    %132 = vector.shape_cast %131 : vector<24xf32> to vector<24x1xf32>
    %cst_73 = arith.constant 3.200000e+01 : f32
    %133 = vector.broadcast %cst_73 : f32 to vector<24x1xf32>
    %134 = arith.divf %132, %133 : vector<24x1xf32>
    %135 = vector.broadcast %134 : vector<24x1xf32> to vector<24x32xf32>
    %136 = arith.subf %130, %135 : vector<24x32xf32>
    %137 = arith.mulf %136, %136 : vector<24x32xf32>
    %cst_74 = arith.constant dense<0.000000e+00> : vector<24xf32>
    %138 = vector.multi_reduction <add>, %137, %cst_74 [1] : vector<24x32xf32> to vector<24xf32>
    %139 = vector.shape_cast %138 : vector<24xf32> to vector<24x1xf32>
    %cst_75 = arith.constant 3.200000e+01 : f32
    %140 = vector.broadcast %cst_75 : f32 to vector<24x1xf32>
    %141 = arith.divf %139, %140 : vector<24x1xf32>
    %cst_76 = arith.constant 9.99999974E-6 : f32
    %142 = vector.broadcast %cst_76 : f32 to vector<24x1xf32>
    %143 = arith.addf %141, %142 : vector<24x1xf32>
    %144 = math.rsqrt %143 : vector<24x1xf32>
    %145 = vector.broadcast %144 : vector<24x1xf32> to vector<24x32xf32>
    %146 = arith.mulf %136, %145 : vector<24x32xf32>
    %147 = vector.broadcast %38 : vector<1x32xf32> to vector<24x32xf32>
    %148 = arith.mulf %146, %147 : vector<24x32xf32>
    %149 = vector.broadcast %40 : vector<1x32xf32> to vector<24x32xf32>
    %150 = arith.addf %148, %149 : vector<24x32xf32>
    %cst_77 = arith.constant dense<0.000000e+00> : vector<24x64xf32>
    %151 = tpu.matmul %150, %30, %cst_77 {dimension_numbers = #tpu.dot_dimension_numbers<[1], [0], [0], [1], [0, 0, 1, 1], [], []>} : vector<24x32xf32>, vector<32x64xf32>, vector<24x64xf32> -> vector<24x64xf32>
    %152 = vector.broadcast %32 : vector<1x64xf32> to vector<24x64xf32>
    %153 = arith.addf %151, %152 : vector<24x64xf32>
    %cst_78 = arith.constant 5.000000e-01 : f32
    %154 = vector.broadcast %cst_78 : f32 to vector<24x64xf32>
    %155 = arith.mulf %154, %153 : vector<24x64xf32>
    %cst_79 = arith.constant 4.471500e-02 : f32
    %156 = vector.broadcast %cst_79 : f32 to vector<24x64xf32>
    %157 = arith.mulf %156, %153 : vector<24x64xf32>
    %158 = arith.mulf %157, %153 : vector<24x64xf32>
    %159 = arith.mulf %158, %153 : vector<24x64xf32>
    %160 = arith.addf %153, %159 : vector<24x64xf32>
    %cst_80 = arith.constant 0.797884583 : f32
    %161 = vector.broadcast %cst_80 : f32 to vector<24x64xf32>
    %162 = arith.mulf %161, %160 : vector<24x64xf32>
    %163 = math.tanh %162 : vector<24x64xf32>
    %cst_81 = arith.constant 1.000000e+00 : f32
    %164 = vector.broadcast %cst_81 : f32 to vector<24x64xf32>
    %165 = arith.addf %164, %163 : vector<24x64xf32>
    %166 = arith.mulf %155, %165 : vector<24x64xf32>
    %cst_82 = arith.constant dense<0.000000e+00> : vector<24x32xf32>
    %167 = tpu.matmul %166, %34, %cst_82 {dimension_numbers = #tpu.dot_dimension_numbers<[1], [0], [0], [1], [0, 0, 1, 1], [], []>} : vector<24x64xf32>, vector<64x32xf32>, vector<24x32xf32> -> vector<24x32xf32>
    %168 = vector.broadcast %36 : vector<1x32xf32> to vector<24x32xf32>
    %169 = arith.addf %167, %168 : vector<24x32xf32>
    %170 = arith.addf %150, %169 : vector<24x32xf32>
    %cst_83 = arith.constant dense<0.000000e+00> : vector<24xf32>
    %171 = vector.multi_reduction <add>, %170, %cst_83 [1] : vector<24x32xf32> to vector<24xf32>
    %172 = vector.shape_cast %171 : vector<24xf32> to vector<24x1xf32>
    %cst_84 = arith.constant 3.200000e+01 : f32
    %173 = vector.broadcast %cst_84 : f32 to vector<24x1xf32>
    %174 = arith.divf %172, %173 : vector<24x1xf32>
    %175 = vector.broadcast %174 : vector<24x1xf32> to vector<24x32xf32>
    %176 = arith.subf %170, %175 : vector<24x32xf32>
    %177 = arith.mulf %176, %176 : vector<24x32xf32>
    %cst_85 = arith.constant dense<0.000000e+00> : vector<24xf32>
    %178 = vector.multi_reduction <add>, %177, %cst_85 [1] : vector<24x32xf32> to vector<24xf32>
    %179 = vector.shape_cast %178 : vector<24xf32> to vector<24x1xf32>
    %cst_86 = arith.constant 3.200000e+01 : f32
    %180 = vector.broadcast %cst_86 : f32 to vector<24x1xf32>
    %181 = arith.divf %179, %180 : vector<24x1xf32>
    %cst_87 = arith.constant 9.99999974E-6 : f32
    %182 = vector.broadcast %cst_87 : f32 to vector<24x1xf32>
    %183 = arith.addf %181, %182 : vector<24x1xf32>
    %184 = math.rsqrt %183 : vector<24x1xf32>
    %185 = vector.broadcast %184 : vector<24x1xf32> to vector<24x32xf32>
    %186 = arith.mulf %176, %185 : vector<24x32xf32>
    %187 = vector.broadcast %42 : vector<1x32xf32> to vector<24x32xf32>
    %188 = arith.mulf %186, %187 : vector<24x32xf32>
    %189 = vector.broadcast %44 : vector<1x32xf32> to vector<24x32xf32>
    %190 = arith.addf %188, %189 : vector<24x32xf32>
    %c1 = arith.constant 1 : index
    %c0_88 = arith.constant 0 : index
    %c0_89 = arith.constant 0 : index
    %191 = vector.load %arg14[%c1, %c0_88, %c0_89] : memref<2x32x96xf32, #tpu.memory_space<vmem>>, vector<1x32x96xf32>
    %192 = vector.shape_cast %191 : vector<1x32x96xf32> to vector<32x96xf32>
    %c1_90 = arith.constant 1 : index
    %c0_91 = arith.constant 0 : index
    %c0_92 = arith.constant 0 : index
    %193 = vector.load %arg15[%c1_90, %c0_91, %c0_92] : memref<2x1x96xf32, #tpu.memory_space<vmem>>, vector<1x1x96xf32>
    %194 = vector.shape_cast %193 : vector<1x1x96xf32> to vector<1x96xf32>
    %c1_93 = arith.constant 1 : index
    %c0_94 = arith.constant 0 : index
    %c0_95 = arith.constant 0 : index
    %195 = vector.load %arg16[%c1_93, %c0_94, %c0_95] : memref<2x32x32xf32, #tpu.memory_space<vmem>>, vector<1x32x32xf32>
    %196 = vector.shape_cast %195 : vector<1x32x32xf32> to vector<32x32xf32>
    %c1_96 = arith.constant 1 : index
    %c0_97 = arith.constant 0 : index
    %c0_98 = arith.constant 0 : index
    %197 = vector.load %arg17[%c1_96, %c0_97, %c0_98] : memref<2x1x32xf32, #tpu.memory_space<vmem>>, vector<1x1x32xf32>
    %198 = vector.shape_cast %197 : vector<1x1x32xf32> to vector<1x32xf32>
    %c1_99 = arith.constant 1 : index
    %c0_100 = arith.constant 0 : index
    %c0_101 = arith.constant 0 : index
    %199 = vector.load %arg18[%c1_99, %c0_100, %c0_101] : memref<2x32x64xf32, #tpu.memory_space<vmem>>, vector<1x32x64xf32>
    %200 = vector.shape_cast %199 : vector<1x32x64xf32> to vector<32x64xf32>
    %c1_102 = arith.constant 1 : index
    %c0_103 = arith.constant 0 : index
    %c0_104 = arith.constant 0 : index
    %201 = vector.load %arg19[%c1_102, %c0_103, %c0_104] : memref<2x1x64xf32, #tpu.memory_space<vmem>>, vector<1x1x64xf32>
    %202 = vector.shape_cast %201 : vector<1x1x64xf32> to vector<1x64xf32>
    %c1_105 = arith.constant 1 : index
    %c0_106 = arith.constant 0 : index
    %c0_107 = arith.constant 0 : index
    %203 = vector.load %arg20[%c1_105, %c0_106, %c0_107] : memref<2x64x32xf32, #tpu.memory_space<vmem>>, vector<1x64x32xf32>
    %204 = vector.shape_cast %203 : vector<1x64x32xf32> to vector<64x32xf32>
    %c1_108 = arith.constant 1 : index
    %c0_109 = arith.constant 0 : index
    %c0_110 = arith.constant 0 : index
    %205 = vector.load %arg21[%c1_108, %c0_109, %c0_110] : memref<2x1x32xf32, #tpu.memory_space<vmem>>, vector<1x1x32xf32>
    %206 = vector.shape_cast %205 : vector<1x1x32xf32> to vector<1x32xf32>
    %c1_111 = arith.constant 1 : index
    %c0_112 = arith.constant 0 : index
    %c0_113 = arith.constant 0 : index
    %207 = vector.load %arg22[%c1_111, %c0_112, %c0_113] : memref<2x1x32xf32, #tpu.memory_space<vmem>>, vector<1x1x32xf32>
    %208 = vector.shape_cast %207 : vector<1x1x32xf32> to vector<1x32xf32>
    %c1_114 = arith.constant 1 : index
    %c0_115 = arith.constant 0 : index
    %c0_116 = arith.constant 0 : index
    %209 = vector.load %arg23[%c1_114, %c0_115, %c0_116] : memref<2x1x32xf32, #tpu.memory_space<vmem>>, vector<1x1x32xf32>
    %210 = vector.shape_cast %209 : vector<1x1x32xf32> to vector<1x32xf32>
    %c1_117 = arith.constant 1 : index
    %c0_118 = arith.constant 0 : index
    %c0_119 = arith.constant 0 : index
    %211 = vector.load %arg24[%c1_117, %c0_118, %c0_119] : memref<2x1x32xf32, #tpu.memory_space<vmem>>, vector<1x1x32xf32>
    %212 = vector.shape_cast %211 : vector<1x1x32xf32> to vector<1x32xf32>
    %c1_120 = arith.constant 1 : index
    %c0_121 = arith.constant 0 : index
    %c0_122 = arith.constant 0 : index
    %213 = vector.load %arg25[%c1_120, %c0_121, %c0_122] : memref<2x1x32xf32, #tpu.memory_space<vmem>>, vector<1x1x32xf32>
    %214 = vector.shape_cast %213 : vector<1x1x32xf32> to vector<1x32xf32>
    %cst_123 = arith.constant dense<0.000000e+00> : vector<24x96xf32>
    %215 = tpu.matmul %190, %192, %cst_123 {dimension_numbers = #tpu.dot_dimension_numbers<[1], [0], [0], [1], [0, 0, 1, 1], [], []>} : vector<24x32xf32>, vector<32x96xf32>, vector<24x96xf32> -> vector<24x96xf32>
    %216 = vector.broadcast %194 : vector<1x96xf32> to vector<24x96xf32>
    %217 = arith.addf %215, %216 : vector<24x96xf32>
    %218 = vector.extract_strided_slice %217 {offsets = [0, 0], sizes = [12, 16], strides = [1, 1]} : vector<24x96xf32> to vector<12x16xf32>
    %219 = vector.extract_strided_slice %217 {offsets = [0, 32], sizes = [12, 16], strides = [1, 1]} : vector<24x96xf32> to vector<12x16xf32>
    %220 = vector.extract_strided_slice %217 {offsets = [0, 64], sizes = [12, 16], strides = [1, 1]} : vector<24x96xf32> to vector<12x16xf32>
    %cst_124 = arith.constant dense<0.000000e+00> : vector<12x12xf32>
    %221 = tpu.matmul %218, %219, %cst_124 {dimension_numbers = #tpu.dot_dimension_numbers<[1], [1], [0], [0], [0, 0, 1, 0], [], []>} : vector<12x16xf32>, vector<12x16xf32>, vector<12x12xf32> -> vector<12x12xf32>
    %cst_125 = arith.constant 2.500000e-01 : f32
    %222 = vector.broadcast %cst_125 : f32 to vector<12x12xf32>
    %223 = arith.mulf %221, %222 : vector<12x12xf32>
    %224 = vector.broadcast %19 : vector<1x12xf32> to vector<12x12xf32>
    %225 = arith.addf %223, %224 : vector<12x12xf32>
    %cst_126 = arith.constant dense<0xFF800000> : vector<12xf32>
    %226 = vector.multi_reduction <maximumf>, %225, %cst_126 [1] : vector<12x12xf32> to vector<12xf32>
    %227 = vector.shape_cast %226 : vector<12xf32> to vector<12x1xf32>
    %228 = vector.broadcast %227 : vector<12x1xf32> to vector<12x12xf32>
    %229 = arith.subf %225, %228 : vector<12x12xf32>
    %230 = math.exp %229 : vector<12x12xf32>
    %cst_127 = arith.constant dense<0.000000e+00> : vector<12xf32>
    %231 = vector.multi_reduction <add>, %230, %cst_127 [1] : vector<12x12xf32> to vector<12xf32>
    %232 = vector.shape_cast %231 : vector<12xf32> to vector<12x1xf32>
    %cst_128 = arith.constant dense<0.000000e+00> : vector<12x16xf32>
    %233 = tpu.matmul %230, %220, %cst_128 {dimension_numbers = #tpu.dot_dimension_numbers<[1], [0], [0], [1], [0, 0, 1, 1], [], []>} : vector<12x12xf32>, vector<12x16xf32>, vector<12x16xf32> -> vector<12x16xf32>
    %234 = tpu.reciprocal %232 {approx = true} : vector<12x1xf32> -> vector<12x1xf32>
    %235 = vector.broadcast %234 : vector<12x1xf32> to vector<12x16xf32>
    %236 = arith.mulf %233, %235 : vector<12x16xf32>
    %237 = vector.extract_strided_slice %217 {offsets = [0, 16], sizes = [12, 16], strides = [1, 1]} : vector<24x96xf32> to vector<12x16xf32>
    %238 = vector.extract_strided_slice %217 {offsets = [0, 48], sizes = [12, 16], strides = [1, 1]} : vector<24x96xf32> to vector<12x16xf32>
    %239 = vector.extract_strided_slice %217 {offsets = [0, 80], sizes = [12, 16], strides = [1, 1]} : vector<24x96xf32> to vector<12x16xf32>
    %cst_129 = arith.constant dense<0.000000e+00> : vector<12x12xf32>
    %240 = tpu.matmul %237, %238, %cst_129 {dimension_numbers = #tpu.dot_dimension_numbers<[1], [1], [0], [0], [0, 0, 1, 0], [], []>} : vector<12x16xf32>, vector<12x16xf32>, vector<12x12xf32> -> vector<12x12xf32>
    %cst_130 = arith.constant 2.500000e-01 : f32
    %241 = vector.broadcast %cst_130 : f32 to vector<12x12xf32>
    %242 = arith.mulf %240, %241 : vector<12x12xf32>
    %243 = vector.broadcast %19 : vector<1x12xf32> to vector<12x12xf32>
    %244 = arith.addf %242, %243 : vector<12x12xf32>
    %cst_131 = arith.constant dense<0xFF800000> : vector<12xf32>
    %245 = vector.multi_reduction <maximumf>, %244, %cst_131 [1] : vector<12x12xf32> to vector<12xf32>
    %246 = vector.shape_cast %245 : vector<12xf32> to vector<12x1xf32>
    %247 = vector.broadcast %246 : vector<12x1xf32> to vector<12x12xf32>
    %248 = arith.subf %244, %247 : vector<12x12xf32>
    %249 = math.exp %248 : vector<12x12xf32>
    %cst_132 = arith.constant dense<0.000000e+00> : vector<12xf32>
    %250 = vector.multi_reduction <add>, %249, %cst_132 [1] : vector<12x12xf32> to vector<12xf32>
    %251 = vector.shape_cast %250 : vector<12xf32> to vector<12x1xf32>
    %cst_133 = arith.constant dense<0.000000e+00> : vector<12x16xf32>
    %252 = tpu.matmul %249, %239, %cst_133 {dimension_numbers = #tpu.dot_dimension_numbers<[1], [0], [0], [1], [0, 0, 1, 1], [], []>} : vector<12x12xf32>, vector<12x16xf32>, vector<12x16xf32> -> vector<12x16xf32>
    %253 = tpu.reciprocal %251 {approx = true} : vector<12x1xf32> -> vector<12x1xf32>
    %254 = vector.broadcast %253 : vector<12x1xf32> to vector<12x16xf32>
    %255 = arith.mulf %252, %254 : vector<12x16xf32>
    %256 = tpu.concatenate %236, %255 in 1 : vector<12x16xf32>, vector<12x16xf32> -> vector<12x32xf32>
    %257 = vector.extract_strided_slice %217 {offsets = [12, 0], sizes = [12, 16], strides = [1, 1]} : vector<24x96xf32> to vector<12x16xf32>
    %258 = vector.extract_strided_slice %217 {offsets = [12, 32], sizes = [12, 16], strides = [1, 1]} : vector<24x96xf32> to vector<12x16xf32>
    %259 = vector.extract_strided_slice %217 {offsets = [12, 64], sizes = [12, 16], strides = [1, 1]} : vector<24x96xf32> to vector<12x16xf32>
    %cst_134 = arith.constant dense<0.000000e+00> : vector<12x12xf32>
    %260 = tpu.matmul %257, %258, %cst_134 {dimension_numbers = #tpu.dot_dimension_numbers<[1], [1], [0], [0], [0, 0, 1, 0], [], []>} : vector<12x16xf32>, vector<12x16xf32>, vector<12x12xf32> -> vector<12x12xf32>
    %cst_135 = arith.constant 2.500000e-01 : f32
    %261 = vector.broadcast %cst_135 : f32 to vector<12x12xf32>
    %262 = arith.mulf %260, %261 : vector<12x12xf32>
    %263 = vector.broadcast %20 : vector<1x12xf32> to vector<12x12xf32>
    %264 = arith.addf %262, %263 : vector<12x12xf32>
    %cst_136 = arith.constant dense<0xFF800000> : vector<12xf32>
    %265 = vector.multi_reduction <maximumf>, %264, %cst_136 [1] : vector<12x12xf32> to vector<12xf32>
    %266 = vector.shape_cast %265 : vector<12xf32> to vector<12x1xf32>
    %267 = vector.broadcast %266 : vector<12x1xf32> to vector<12x12xf32>
    %268 = arith.subf %264, %267 : vector<12x12xf32>
    %269 = math.exp %268 : vector<12x12xf32>
    %cst_137 = arith.constant dense<0.000000e+00> : vector<12xf32>
    %270 = vector.multi_reduction <add>, %269, %cst_137 [1] : vector<12x12xf32> to vector<12xf32>
    %271 = vector.shape_cast %270 : vector<12xf32> to vector<12x1xf32>
    %cst_138 = arith.constant dense<0.000000e+00> : vector<12x16xf32>
    %272 = tpu.matmul %269, %259, %cst_138 {dimension_numbers = #tpu.dot_dimension_numbers<[1], [0], [0], [1], [0, 0, 1, 1], [], []>} : vector<12x12xf32>, vector<12x16xf32>, vector<12x16xf32> -> vector<12x16xf32>
    %273 = tpu.reciprocal %271 {approx = true} : vector<12x1xf32> -> vector<12x1xf32>
    %274 = vector.broadcast %273 : vector<12x1xf32> to vector<12x16xf32>
    %275 = arith.mulf %272, %274 : vector<12x16xf32>
    %276 = vector.extract_strided_slice %217 {offsets = [12, 16], sizes = [12, 16], strides = [1, 1]} : vector<24x96xf32> to vector<12x16xf32>
    %277 = vector.extract_strided_slice %217 {offsets = [12, 48], sizes = [12, 16], strides = [1, 1]} : vector<24x96xf32> to vector<12x16xf32>
    %278 = vector.extract_strided_slice %217 {offsets = [12, 80], sizes = [12, 16], strides = [1, 1]} : vector<24x96xf32> to vector<12x16xf32>
    %cst_139 = arith.constant dense<0.000000e+00> : vector<12x12xf32>
    %279 = tpu.matmul %276, %277, %cst_139 {dimension_numbers = #tpu.dot_dimension_numbers<[1], [1], [0], [0], [0, 0, 1, 0], [], []>} : vector<12x16xf32>, vector<12x16xf32>, vector<12x12xf32> -> vector<12x12xf32>
    %cst_140 = arith.constant 2.500000e-01 : f32
    %280 = vector.broadcast %cst_140 : f32 to vector<12x12xf32>
    %281 = arith.mulf %279, %280 : vector<12x12xf32>
    %282 = vector.broadcast %20 : vector<1x12xf32> to vector<12x12xf32>
    %283 = arith.addf %281, %282 : vector<12x12xf32>
    %cst_141 = arith.constant dense<0xFF800000> : vector<12xf32>
    %284 = vector.multi_reduction <maximumf>, %283, %cst_141 [1] : vector<12x12xf32> to vector<12xf32>
    %285 = vector.shape_cast %284 : vector<12xf32> to vector<12x1xf32>
    %286 = vector.broadcast %285 : vector<12x1xf32> to vector<12x12xf32>
    %287 = arith.subf %283, %286 : vector<12x12xf32>
    %288 = math.exp %287 : vector<12x12xf32>
    %cst_142 = arith.constant dense<0.000000e+00> : vector<12xf32>
    %289 = vector.multi_reduction <add>, %288, %cst_142 [1] : vector<12x12xf32> to vector<12xf32>
    %290 = vector.shape_cast %289 : vector<12xf32> to vector<12x1xf32>
    %cst_143 = arith.constant dense<0.000000e+00> : vector<12x16xf32>
    %291 = tpu.matmul %288, %278, %cst_143 {dimension_numbers = #tpu.dot_dimension_numbers<[1], [0], [0], [1], [0, 0, 1, 1], [], []>} : vector<12x12xf32>, vector<12x16xf32>, vector<12x16xf32> -> vector<12x16xf32>
    %292 = tpu.reciprocal %290 {approx = true} : vector<12x1xf32> -> vector<12x1xf32>
    %293 = vector.broadcast %292 : vector<12x1xf32> to vector<12x16xf32>
    %294 = arith.mulf %291, %293 : vector<12x16xf32>
    %295 = tpu.concatenate %275, %294 in 1 : vector<12x16xf32>, vector<12x16xf32> -> vector<12x32xf32>
    %296 = tpu.concatenate %256, %295 in 0 : vector<12x32xf32>, vector<12x32xf32> -> vector<24x32xf32>
    %cst_144 = arith.constant dense<0.000000e+00> : vector<24x32xf32>
    %297 = tpu.matmul %296, %196, %cst_144 {dimension_numbers = #tpu.dot_dimension_numbers<[1], [0], [0], [1], [0, 0, 1, 1], [], []>} : vector<24x32xf32>, vector<32x32xf32>, vector<24x32xf32> -> vector<24x32xf32>
    %298 = vector.broadcast %198 : vector<1x32xf32> to vector<24x32xf32>
    %299 = arith.addf %297, %298 : vector<24x32xf32>
    %300 = arith.addf %190, %299 : vector<24x32xf32>
    %cst_145 = arith.constant dense<0.000000e+00> : vector<24xf32>
    %301 = vector.multi_reduction <add>, %300, %cst_145 [1] : vector<24x32xf32> to vector<24xf32>
    %302 = vector.shape_cast %301 : vector<24xf32> to vector<24x1xf32>
    %cst_146 = arith.constant 3.200000e+01 : f32
    %303 = vector.broadcast %cst_146 : f32 to vector<24x1xf32>
    %304 = arith.divf %302, %303 : vector<24x1xf32>
    %305 = vector.broadcast %304 : vector<24x1xf32> to vector<24x32xf32>
    %306 = arith.subf %300, %305 : vector<24x32xf32>
    %307 = arith.mulf %306, %306 : vector<24x32xf32>
    %cst_147 = arith.constant dense<0.000000e+00> : vector<24xf32>
    %308 = vector.multi_reduction <add>, %307, %cst_147 [1] : vector<24x32xf32> to vector<24xf32>
    %309 = vector.shape_cast %308 : vector<24xf32> to vector<24x1xf32>
    %cst_148 = arith.constant 3.200000e+01 : f32
    %310 = vector.broadcast %cst_148 : f32 to vector<24x1xf32>
    %311 = arith.divf %309, %310 : vector<24x1xf32>
    %cst_149 = arith.constant 9.99999974E-6 : f32
    %312 = vector.broadcast %cst_149 : f32 to vector<24x1xf32>
    %313 = arith.addf %311, %312 : vector<24x1xf32>
    %314 = math.rsqrt %313 : vector<24x1xf32>
    %315 = vector.broadcast %314 : vector<24x1xf32> to vector<24x32xf32>
    %316 = arith.mulf %306, %315 : vector<24x32xf32>
    %317 = vector.broadcast %208 : vector<1x32xf32> to vector<24x32xf32>
    %318 = arith.mulf %316, %317 : vector<24x32xf32>
    %319 = vector.broadcast %210 : vector<1x32xf32> to vector<24x32xf32>
    %320 = arith.addf %318, %319 : vector<24x32xf32>
    %cst_150 = arith.constant dense<0.000000e+00> : vector<24x64xf32>
    %321 = tpu.matmul %320, %200, %cst_150 {dimension_numbers = #tpu.dot_dimension_numbers<[1], [0], [0], [1], [0, 0, 1, 1], [], []>} : vector<24x32xf32>, vector<32x64xf32>, vector<24x64xf32> -> vector<24x64xf32>
    %322 = vector.broadcast %202 : vector<1x64xf32> to vector<24x64xf32>
    %323 = arith.addf %321, %322 : vector<24x64xf32>
    %cst_151 = arith.constant 5.000000e-01 : f32
    %324 = vector.broadcast %cst_151 : f32 to vector<24x64xf32>
    %325 = arith.mulf %324, %323 : vector<24x64xf32>
    %cst_152 = arith.constant 4.471500e-02 : f32
    %326 = vector.broadcast %cst_152 : f32 to vector<24x64xf32>
    %327 = arith.mulf %326, %323 : vector<24x64xf32>
    %328 = arith.mulf %327, %323 : vector<24x64xf32>
    %329 = arith.mulf %328, %323 : vector<24x64xf32>
    %330 = arith.addf %323, %329 : vector<24x64xf32>
    %cst_153 = arith.constant 0.797884583 : f32
    %331 = vector.broadcast %cst_153 : f32 to vector<24x64xf32>
    %332 = arith.mulf %331, %330 : vector<24x64xf32>
    %333 = math.tanh %332 : vector<24x64xf32>
    %cst_154 = arith.constant 1.000000e+00 : f32
    %334 = vector.broadcast %cst_154 : f32 to vector<24x64xf32>
    %335 = arith.addf %334, %333 : vector<24x64xf32>
    %336 = arith.mulf %325, %335 : vector<24x64xf32>
    %cst_155 = arith.constant dense<0.000000e+00> : vector<24x32xf32>
    %337 = tpu.matmul %336, %204, %cst_155 {dimension_numbers = #tpu.dot_dimension_numbers<[1], [0], [0], [1], [0, 0, 1, 1], [], []>} : vector<24x64xf32>, vector<64x32xf32>, vector<24x32xf32> -> vector<24x32xf32>
    %338 = vector.broadcast %206 : vector<1x32xf32> to vector<24x32xf32>
    %339 = arith.addf %337, %338 : vector<24x32xf32>
    %340 = arith.addf %320, %339 : vector<24x32xf32>
    %cst_156 = arith.constant dense<0.000000e+00> : vector<24xf32>
    %341 = vector.multi_reduction <add>, %340, %cst_156 [1] : vector<24x32xf32> to vector<24xf32>
    %342 = vector.shape_cast %341 : vector<24xf32> to vector<24x1xf32>
    %cst_157 = arith.constant 3.200000e+01 : f32
    %343 = vector.broadcast %cst_157 : f32 to vector<24x1xf32>
    %344 = arith.divf %342, %343 : vector<24x1xf32>
    %345 = vector.broadcast %344 : vector<24x1xf32> to vector<24x32xf32>
    %346 = arith.subf %340, %345 : vector<24x32xf32>
    %347 = arith.mulf %346, %346 : vector<24x32xf32>
    %cst_158 = arith.constant dense<0.000000e+00> : vector<24xf32>
    %348 = vector.multi_reduction <add>, %347, %cst_158 [1] : vector<24x32xf32> to vector<24xf32>
    %349 = vector.shape_cast %348 : vector<24xf32> to vector<24x1xf32>
    %cst_159 = arith.constant 3.200000e+01 : f32
    %350 = vector.broadcast %cst_159 : f32 to vector<24x1xf32>
    %351 = arith.divf %349, %350 : vector<24x1xf32>
    %cst_160 = arith.constant 9.99999974E-6 : f32
    %352 = vector.broadcast %cst_160 : f32 to vector<24x1xf32>
    %353 = arith.addf %351, %352 : vector<24x1xf32>
    %354 = math.rsqrt %353 : vector<24x1xf32>
    %355 = vector.broadcast %354 : vector<24x1xf32> to vector<24x32xf32>
    %356 = arith.mulf %346, %355 : vector<24x32xf32>
    %357 = vector.broadcast %212 : vector<1x32xf32> to vector<24x32xf32>
    %358 = arith.mulf %356, %357 : vector<24x32xf32>
    %359 = vector.broadcast %214 : vector<1x32xf32> to vector<24x32xf32>
    %360 = arith.addf %358, %359 : vector<24x32xf32>
    %361 = vector.extract_strided_slice %360 {offsets = [0, 0], sizes = [1, 32], strides = [1, 1]} : vector<24x32xf32> to vector<1x32xf32>
    %362 = vector.extract_strided_slice %360 {offsets = [12, 0], sizes = [1, 32], strides = [1, 1]} : vector<24x32xf32> to vector<1x32xf32>
    %363 = tpu.concatenate %361, %362 in 0 : vector<1x32xf32>, vector<1x32xf32> -> vector<2x32xf32>
    %364 = vector.extract_strided_slice %360 {offsets = [1, 0], sizes = [1, 32], strides = [1, 1]} : vector<24x32xf32> to vector<1x32xf32>
    %365 = vector.extract_strided_slice %360 {offsets = [13, 0], sizes = [1, 32], strides = [1, 1]} : vector<24x32xf32> to vector<1x32xf32>
    %366 = tpu.concatenate %364, %365 in 0 : vector<1x32xf32>, vector<1x32xf32> -> vector<2x32xf32>
    %c0_161 = arith.constant 0 : index
    %c0_162 = arith.constant 0 : index
    %367 = vector.load %arg41[%c0_161, %c0_162] : memref<2x32xf32, #tpu.memory_space<vmem>>, vector<2x32xf32>
    tpu.vector_store %arg41[%c0_161, %c0_162], %363 {strides = array<i32>} : memref<2x32xf32, #tpu.memory_space<vmem>>, vector<2x32xf32>,
    %c0_163 = arith.constant 0 : index
    %c0_164 = arith.constant 0 : index
    %368 = vector.load %arg42[%c0_163, %c0_164] : memref<2x32xf32, #tpu.memory_space<vmem>>, vector<2x32xf32>
    tpu.vector_store %arg42[%c0_163, %c0_164], %366 {strides = array<i32>} : memref<2x32xf32, #tpu.memory_space<vmem>>, vector<2x32xf32>,
    %c0_165 = arith.constant 0 : index
    %c0_166 = arith.constant 0 : index
    %369 = vector.load %arg9[%c0_165, %c0_166] : memref<5x32xf32, #tpu.memory_space<vmem>>, vector<5x32xf32>
    %cst_167 = arith.constant dense<0.000000e+00> : vector<2x32xf32>
    %370 = tpu.matmul %0, %369, %cst_167 {dimension_numbers = #tpu.dot_dimension_numbers<[1], [0], [0], [1], [0, 0, 1, 1], [], []>} : vector<2x5xf32>, vector<5x32xf32>, vector<2x32xf32> -> vector<2x32xf32>
    %371 = arith.addf %363, %370 : vector<2x32xf32>
    %372 = vector.extract_strided_slice %1 {offsets = [0, 0], sizes = [4, 6], strides = [1, 1]} : vector<20x6xf32> to vector<4x6xf32>
    %373 = vector.extract_strided_slice %1 {offsets = [10, 0], sizes = [4, 6], strides = [1, 1]} : vector<20x6xf32> to vector<4x6xf32>
    %374 = tpu.concatenate %372, %373 in 0 : vector<4x6xf32>, vector<4x6xf32> -> vector<8x6xf32>
    %c0_168 = arith.constant 0 : index
    %c0_169 = arith.constant 0 : index
    %375 = vector.load %arg10[%c0_168, %c0_169] : memref<6x32xf32, #tpu.memory_space<vmem>>, vector<6x32xf32>
    %c0_170 = arith.constant 0 : index
    %c0_171 = arith.constant 0 : index
    %376 = vector.load %arg11[%c0_170, %c0_171] : memref<1x32xf32, #tpu.memory_space<vmem>>, vector<1x32xf32>
    %cst_172 = arith.constant dense<0.000000e+00> : vector<8x32xf32>
    %377 = tpu.matmul %374, %375, %cst_172 {dimension_numbers = #tpu.dot_dimension_numbers<[1], [0], [0], [1], [0, 0, 1, 1], [], []>} : vector<8x6xf32>, vector<6x32xf32>, vector<8x32xf32> -> vector<8x32xf32>
    %378 = vector.broadcast %376 : vector<1x32xf32> to vector<8x32xf32>
    %379 = arith.addf %377, %378 : vector<8x32xf32>
    %380 = vector.extract_strided_slice %379 {offsets = [0, 0], sizes = [4, 32], strides = [1, 1]} : vector<8x32xf32> to vector<4x32xf32>
    %381 = vector.extract_strided_slice %379 {offsets = [3, 0], sizes = [1, 32], strides = [1, 1]} : vector<8x32xf32> to vector<1x32xf32>
    %382 = vector.shape_cast %381 : vector<1x32xf32> to vector<1x32xf32>
    %383 = vector.broadcast %382 : vector<1x32xf32> to vector<6x32xf32>
    %384 = vector.extract_strided_slice %379 {offsets = [4, 0], sizes = [4, 32], strides = [1, 1]} : vector<8x32xf32> to vector<4x32xf32>
    %385 = vector.extract_strided_slice %379 {offsets = [7, 0], sizes = [1, 32], strides = [1, 1]} : vector<8x32xf32> to vector<1x32xf32>
    %386 = vector.shape_cast %385 : vector<1x32xf32> to vector<1x32xf32>
    %387 = vector.broadcast %386 : vector<1x32xf32> to vector<6x32xf32>
    %388 = tpu.concatenate %380, %383, %384, %387 in 0 : vector<4x32xf32>, vector<6x32xf32>, vector<4x32xf32>, vector<6x32xf32> -> vector<20x32xf32>
    %c0_173 = arith.constant 0 : index
    %c0_174 = arith.constant 0 : index
    %389 = vector.load %arg5[%c0_173, %c0_174] : memref<20x32xf32, #tpu.memory_space<vmem>>, vector<20x32xf32>
    %390 = arith.addf %388, %389 : vector<20x32xf32>
    %c0_175 = arith.constant 0 : index
    %c0_176 = arith.constant 0 : index
    %391 = vector.load %arg3[%c0_175, %c0_176] : memref<11x11xf32, #tpu.memory_space<vmem>>, vector<11x11xf32>
    %c0_177 = arith.constant 0 : index
    %c0_178 = arith.constant 0 : index
    %c0_179 = arith.constant 0 : index
    %392 = vector.load %arg38[%c0_177, %c0_178, %c0_179] : memref<2x32x32xf32, #tpu.memory_space<vmem>>, vector<1x32x32xf32>
    %393 = vector.shape_cast %392 : vector<1x32x32xf32> to vector<32x32xf32>
    %c0_180 = arith.constant 0 : index
    %c0_181 = arith.constant 0 : index
    %c0_182 = arith.constant 0 : index
    %394 = vector.load %arg39[%c0_180, %c0_181, %c0_182] : memref<2x1x32xf32, #tpu.memory_space<vmem>>, vector<1x1x32xf32>
    %395 = vector.shape_cast %394 : vector<1x1x32xf32> to vector<1x32xf32>
    %cst_183 = arith.constant dense<0.000000e+00> : vector<2x32xf32>
    %396 = tpu.matmul %371, %393, %cst_183 {dimension_numbers = #tpu.dot_dimension_numbers<[1], [0], [0], [1], [0, 0, 1, 1], [], []>} : vector<2x32xf32>, vector<32x32xf32>, vector<2x32xf32> -> vector<2x32xf32>
    %397 = vector.broadcast %395 : vector<1x32xf32> to vector<2x32xf32>
    %398 = arith.addf %396, %397 : vector<2x32xf32>
    %399 = vector.extract_strided_slice %398 {offsets = [0, 0], sizes = [1, 32], strides = [1, 1]} : vector<2x32xf32> to vector<1x32xf32>
    %400 = vector.extract_strided_slice %390 {offsets = [0, 0], sizes = [10, 32], strides = [1, 1]} : vector<20x32xf32> to vector<10x32xf32>
    %401 = vector.extract_strided_slice %398 {offsets = [1, 0], sizes = [1, 32], strides = [1, 1]} : vector<2x32xf32> to vector<1x32xf32>
    %402 = vector.extract_strided_slice %390 {offsets = [10, 0], sizes = [10, 32], strides = [1, 1]} : vector<20x32xf32> to vector<10x32xf32>
    %403 = tpu.concatenate %399, %400, %401, %402 in 0 : vector<1x32xf32>, vector<10x32xf32>, vector<1x32xf32>, vector<10x32xf32> -> vector<22x32xf32>
    %c0_184 = arith.constant 0 : index
    %c0_185 = arith.constant 0 : index
    %c0_186 = arith.constant 0 : index
    %404 = vector.load %arg26[%c0_184, %c0_185, %c0_186] : memref<2x32x96xf32, #tpu.memory_space<vmem>>, vector<1x32x96xf32>
    %405 = vector.shape_cast %404 : vector<1x32x96xf32> to vector<32x96xf32>
    %c0_187 = arith.constant 0 : index
    %c0_188 = arith.constant 0 : index
    %c0_189 = arith.constant 0 : index
    %406 = vector.load %arg27[%c0_187, %c0_188, %c0_189] : memref<2x1x96xf32, #tpu.memory_space<vmem>>, vector<1x1x96xf32>
    %407 = vector.shape_cast %406 : vector<1x1x96xf32> to vector<1x96xf32>
    %c0_190 = arith.constant 0 : index
    %c0_191 = arith.constant 0 : index
    %c0_192 = arith.constant 0 : index
    %408 = vector.load %arg28[%c0_190, %c0_191, %c0_192] : memref<2x32x32xf32, #tpu.memory_space<vmem>>, vector<1x32x32xf32>
    %409 = vector.shape_cast %408 : vector<1x32x32xf32> to vector<32x32xf32>
    %c0_193 = arith.constant 0 : index
    %c0_194 = arith.constant 0 : index
    %c0_195 = arith.constant 0 : index
    %410 = vector.load %arg29[%c0_193, %c0_194, %c0_195] : memref<2x1x32xf32, #tpu.memory_space<vmem>>, vector<1x1x32xf32>
    %411 = vector.shape_cast %410 : vector<1x1x32xf32> to vector<1x32xf32>
    %c0_196 = arith.constant 0 : index
    %c0_197 = arith.constant 0 : index
    %c0_198 = arith.constant 0 : index
    %412 = vector.load %arg30[%c0_196, %c0_197, %c0_198] : memref<2x32x64xf32, #tpu.memory_space<vmem>>, vector<1x32x64xf32>
    %413 = vector.shape_cast %412 : vector<1x32x64xf32> to vector<32x64xf32>
    %c0_199 = arith.constant 0 : index
    %c0_200 = arith.constant 0 : index
    %c0_201 = arith.constant 0 : index
    %414 = vector.load %arg31[%c0_199, %c0_200, %c0_201] : memref<2x1x64xf32, #tpu.memory_space<vmem>>, vector<1x1x64xf32>
    %415 = vector.shape_cast %414 : vector<1x1x64xf32> to vector<1x64xf32>
    %c0_202 = arith.constant 0 : index
    %c0_203 = arith.constant 0 : index
    %c0_204 = arith.constant 0 : index
    %416 = vector.load %arg32[%c0_202, %c0_203, %c0_204] : memref<2x64x32xf32, #tpu.memory_space<vmem>>, vector<1x64x32xf32>
    %417 = vector.shape_cast %416 : vector<1x64x32xf32> to vector<64x32xf32>
    %c0_205 = arith.constant 0 : index
    %c0_206 = arith.constant 0 : index
    %c0_207 = arith.constant 0 : index
    %418 = vector.load %arg33[%c0_205, %c0_206, %c0_207] : memref<2x1x32xf32, #tpu.memory_space<vmem>>, vector<1x1x32xf32>
    %419 = vector.shape_cast %418 : vector<1x1x32xf32> to vector<1x32xf32>
    %c0_208 = arith.constant 0 : index
    %c0_209 = arith.constant 0 : index
    %c0_210 = arith.constant 0 : index
    %420 = vector.load %arg34[%c0_208, %c0_209, %c0_210] : memref<2x1x32xf32, #tpu.memory_space<vmem>>, vector<1x1x32xf32>
    %421 = vector.shape_cast %420 : vector<1x1x32xf32> to vector<1x32xf32>
    %c0_211 = arith.constant 0 : index
    %c0_212 = arith.constant 0 : index
    %c0_213 = arith.constant 0 : index
    %422 = vector.load %arg35[%c0_211, %c0_212, %c0_213] : memref<2x1x32xf32, #tpu.memory_space<vmem>>, vector<1x1x32xf32>
    %423 = vector.shape_cast %422 : vector<1x1x32xf32> to vector<1x32xf32>
    %c0_214 = arith.constant 0 : index
    %c0_215 = arith.constant 0 : index
    %c0_216 = arith.constant 0 : index
    %424 = vector.load %arg36[%c0_214, %c0_215, %c0_216] : memref<2x1x32xf32, #tpu.memory_space<vmem>>, vector<1x1x32xf32>
    %425 = vector.shape_cast %424 : vector<1x1x32xf32> to vector<1x32xf32>
    %c0_217 = arith.constant 0 : index
    %c0_218 = arith.constant 0 : index
    %c0_219 = arith.constant 0 : index
    %426 = vector.load %arg37[%c0_217, %c0_218, %c0_219] : memref<2x1x32xf32, #tpu.memory_space<vmem>>, vector<1x1x32xf32>
    %427 = vector.shape_cast %426 : vector<1x1x32xf32> to vector<1x32xf32>
    %cst_220 = arith.constant dense<0.000000e+00> : vector<22x96xf32>
    %428 = tpu.matmul %403, %405, %cst_220 {dimension_numbers = #tpu.dot_dimension_numbers<[1], [0], [0], [1], [0, 0, 1, 1], [], []>} : vector<22x32xf32>, vector<32x96xf32>, vector<22x96xf32> -> vector<22x96xf32>
    %429 = vector.broadcast %407 : vector<1x96xf32> to vector<22x96xf32>
    %430 = arith.addf %428, %429 : vector<22x96xf32>
    %431 = vector.extract_strided_slice %430 {offsets = [0, 0], sizes = [11, 16], strides = [1, 1]} : vector<22x96xf32> to vector<11x16xf32>
    %432 = vector.extract_strided_slice %430 {offsets = [0, 32], sizes = [11, 16], strides = [1, 1]} : vector<22x96xf32> to vector<11x16xf32>
    %433 = vector.extract_strided_slice %430 {offsets = [0, 64], sizes = [11, 16], strides = [1, 1]} : vector<22x96xf32> to vector<11x16xf32>
    %cst_221 = arith.constant dense<0.000000e+00> : vector<11x11xf32>
    %434 = tpu.matmul %431, %432, %cst_221 {dimension_numbers = #tpu.dot_dimension_numbers<[1], [1], [0], [0], [0, 0, 1, 0], [], []>} : vector<11x16xf32>, vector<11x16xf32>, vector<11x11xf32> -> vector<11x11xf32>
    %cst_222 = arith.constant 2.500000e-01 : f32
    %435 = vector.broadcast %cst_222 : f32 to vector<11x11xf32>
    %436 = arith.mulf %434, %435 : vector<11x11xf32>
    %437 = arith.addf %436, %391 : vector<11x11xf32>
    %cst_223 = arith.constant dense<0xFF800000> : vector<11xf32>
    %438 = vector.multi_reduction <maximumf>, %437, %cst_223 [1] : vector<11x11xf32> to vector<11xf32>
    %439 = vector.shape_cast %438 : vector<11xf32> to vector<11x1xf32>
    %440 = vector.broadcast %439 : vector<11x1xf32> to vector<11x11xf32>
    %441 = arith.subf %437, %440 : vector<11x11xf32>
    %442 = math.exp %441 : vector<11x11xf32>
    %cst_224 = arith.constant dense<0.000000e+00> : vector<11xf32>
    %443 = vector.multi_reduction <add>, %442, %cst_224 [1] : vector<11x11xf32> to vector<11xf32>
    %444 = vector.shape_cast %443 : vector<11xf32> to vector<11x1xf32>
    %cst_225 = arith.constant dense<0.000000e+00> : vector<11x16xf32>
    %445 = tpu.matmul %442, %433, %cst_225 {dimension_numbers = #tpu.dot_dimension_numbers<[1], [0], [0], [1], [0, 0, 1, 1], [], []>} : vector<11x11xf32>, vector<11x16xf32>, vector<11x16xf32> -> vector<11x16xf32>
    %446 = tpu.reciprocal %444 {approx = true} : vector<11x1xf32> -> vector<11x1xf32>
    %447 = vector.broadcast %446 : vector<11x1xf32> to vector<11x16xf32>
    %448 = arith.mulf %445, %447 : vector<11x16xf32>
    %449 = vector.extract_strided_slice %430 {offsets = [0, 16], sizes = [11, 16], strides = [1, 1]} : vector<22x96xf32> to vector<11x16xf32>
    %450 = vector.extract_strided_slice %430 {offsets = [0, 48], sizes = [11, 16], strides = [1, 1]} : vector<22x96xf32> to vector<11x16xf32>
    %451 = vector.extract_strided_slice %430 {offsets = [0, 80], sizes = [11, 16], strides = [1, 1]} : vector<22x96xf32> to vector<11x16xf32>
    %cst_226 = arith.constant dense<0.000000e+00> : vector<11x11xf32>
    %452 = tpu.matmul %449, %450, %cst_226 {dimension_numbers = #tpu.dot_dimension_numbers<[1], [1], [0], [0], [0, 0, 1, 0], [], []>} : vector<11x16xf32>, vector<11x16xf32>, vector<11x11xf32> -> vector<11x11xf32>
    %cst_227 = arith.constant 2.500000e-01 : f32
    %453 = vector.broadcast %cst_227 : f32 to vector<11x11xf32>
    %454 = arith.mulf %452, %453 : vector<11x11xf32>
    %455 = arith.addf %454, %391 : vector<11x11xf32>
    %cst_228 = arith.constant dense<0xFF800000> : vector<11xf32>
    %456 = vector.multi_reduction <maximumf>, %455, %cst_228 [1] : vector<11x11xf32> to vector<11xf32>
    %457 = vector.shape_cast %456 : vector<11xf32> to vector<11x1xf32>
    %458 = vector.broadcast %457 : vector<11x1xf32> to vector<11x11xf32>
    %459 = arith.subf %455, %458 : vector<11x11xf32>
    %460 = math.exp %459 : vector<11x11xf32>
    %cst_229 = arith.constant dense<0.000000e+00> : vector<11xf32>
    %461 = vector.multi_reduction <add>, %460, %cst_229 [1] : vector<11x11xf32> to vector<11xf32>
    %462 = vector.shape_cast %461 : vector<11xf32> to vector<11x1xf32>
    %cst_230 = arith.constant dense<0.000000e+00> : vector<11x16xf32>
    %463 = tpu.matmul %460, %451, %cst_230 {dimension_numbers = #tpu.dot_dimension_numbers<[1], [0], [0], [1], [0, 0, 1, 1], [], []>} : vector<11x11xf32>, vector<11x16xf32>, vector<11x16xf32> -> vector<11x16xf32>
    %464 = tpu.reciprocal %462 {approx = true} : vector<11x1xf32> -> vector<11x1xf32>
    %465 = vector.broadcast %464 : vector<11x1xf32> to vector<11x16xf32>
    %466 = arith.mulf %463, %465 : vector<11x16xf32>
    %467 = tpu.concatenate %448, %466 in 1 : vector<11x16xf32>, vector<11x16xf32> -> vector<11x32xf32>
    %468 = vector.extract_strided_slice %430 {offsets = [11, 0], sizes = [11, 16], strides = [1, 1]} : vector<22x96xf32> to vector<11x16xf32>
    %469 = vector.extract_strided_slice %430 {offsets = [11, 32], sizes = [11, 16], strides = [1, 1]} : vector<22x96xf32> to vector<11x16xf32>
    %470 = vector.extract_strided_slice %430 {offsets = [11, 64], sizes = [11, 16], strides = [1, 1]} : vector<22x96xf32> to vector<11x16xf32>
    %cst_231 = arith.constant dense<0.000000e+00> : vector<11x11xf32>
    %471 = tpu.matmul %468, %469, %cst_231 {dimension_numbers = #tpu.dot_dimension_numbers<[1], [1], [0], [0], [0, 0, 1, 0], [], []>} : vector<11x16xf32>, vector<11x16xf32>, vector<11x11xf32> -> vector<11x11xf32>
    %cst_232 = arith.constant 2.500000e-01 : f32
    %472 = vector.broadcast %cst_232 : f32 to vector<11x11xf32>
    %473 = arith.mulf %471, %472 : vector<11x11xf32>
    %474 = arith.addf %473, %391 : vector<11x11xf32>
    %cst_233 = arith.constant dense<0xFF800000> : vector<11xf32>
    %475 = vector.multi_reduction <maximumf>, %474, %cst_233 [1] : vector<11x11xf32> to vector<11xf32>
    %476 = vector.shape_cast %475 : vector<11xf32> to vector<11x1xf32>
    %477 = vector.broadcast %476 : vector<11x1xf32> to vector<11x11xf32>
    %478 = arith.subf %474, %477 : vector<11x11xf32>
    %479 = math.exp %478 : vector<11x11xf32>
    %cst_234 = arith.constant dense<0.000000e+00> : vector<11xf32>
    %480 = vector.multi_reduction <add>, %479, %cst_234 [1] : vector<11x11xf32> to vector<11xf32>
    %481 = vector.shape_cast %480 : vector<11xf32> to vector<11x1xf32>
    %cst_235 = arith.constant dense<0.000000e+00> : vector<11x16xf32>
    %482 = tpu.matmul %479, %470, %cst_235 {dimension_numbers = #tpu.dot_dimension_numbers<[1], [0], [0], [1], [0, 0, 1, 1], [], []>} : vector<11x11xf32>, vector<11x16xf32>, vector<11x16xf32> -> vector<11x16xf32>
    %483 = tpu.reciprocal %481 {approx = true} : vector<11x1xf32> -> vector<11x1xf32>
    %484 = vector.broadcast %483 : vector<11x1xf32> to vector<11x16xf32>
    %485 = arith.mulf %482, %484 : vector<11x16xf32>
    %486 = vector.extract_strided_slice %430 {offsets = [11, 16], sizes = [11, 16], strides = [1, 1]} : vector<22x96xf32> to vector<11x16xf32>
    %487 = vector.extract_strided_slice %430 {offsets = [11, 48], sizes = [11, 16], strides = [1, 1]} : vector<22x96xf32> to vector<11x16xf32>
    %488 = vector.extract_strided_slice %430 {offsets = [11, 80], sizes = [11, 16], strides = [1, 1]} : vector<22x96xf32> to vector<11x16xf32>
    %cst_236 = arith.constant dense<0.000000e+00> : vector<11x11xf32>
    %489 = tpu.matmul %486, %487, %cst_236 {dimension_numbers = #tpu.dot_dimension_numbers<[1], [1], [0], [0], [0, 0, 1, 0], [], []>} : vector<11x16xf32>, vector<11x16xf32>, vector<11x11xf32> -> vector<11x11xf32>
    %cst_237 = arith.constant 2.500000e-01 : f32
    %490 = vector.broadcast %cst_237 : f32 to vector<11x11xf32>
    %491 = arith.mulf %489, %490 : vector<11x11xf32>
    %492 = arith.addf %491, %391 : vector<11x11xf32>
    %cst_238 = arith.constant dense<0xFF800000> : vector<11xf32>
    %493 = vector.multi_reduction <maximumf>, %492, %cst_238 [1] : vector<11x11xf32> to vector<11xf32>
    %494 = vector.shape_cast %493 : vector<11xf32> to vector<11x1xf32>
    %495 = vector.broadcast %494 : vector<11x1xf32> to vector<11x11xf32>
    %496 = arith.subf %492, %495 : vector<11x11xf32>
    %497 = math.exp %496 : vector<11x11xf32>
    %cst_239 = arith.constant dense<0.000000e+00> : vector<11xf32>
    %498 = vector.multi_reduction <add>, %497, %cst_239 [1] : vector<11x11xf32> to vector<11xf32>
    %499 = vector.shape_cast %498 : vector<11xf32> to vector<11x1xf32>
    %cst_240 = arith.constant dense<0.000000e+00> : vector<11x16xf32>
    %500 = tpu.matmul %497, %488, %cst_240 {dimension_numbers = #tpu.dot_dimension_numbers<[1], [0], [0], [1], [0, 0, 1, 1], [], []>} : vector<11x11xf32>, vector<11x16xf32>, vector<11x16xf32> -> vector<11x16xf32>
    %501 = tpu.reciprocal %499 {approx = true} : vector<11x1xf32> -> vector<11x1xf32>
    %502 = vector.broadcast %501 : vector<11x1xf32> to vector<11x16xf32>
    %503 = arith.mulf %500, %502 : vector<11x16xf32>
    %504 = tpu.concatenate %485, %503 in 1 : vector<11x16xf32>, vector<11x16xf32> -> vector<11x32xf32>
    %505 = tpu.concatenate %467, %504 in 0 : vector<11x32xf32>, vector<11x32xf32> -> vector<22x32xf32>
    %cst_241 = arith.constant dense<0.000000e+00> : vector<22x32xf32>
    %506 = tpu.matmul %505, %409, %cst_241 {dimension_numbers = #tpu.dot_dimension_numbers<[1], [0], [0], [1], [0, 0, 1, 1], [], []>} : vector<22x32xf32>, vector<32x32xf32>, vector<22x32xf32> -> vector<22x32xf32>
    %507 = vector.broadcast %411 : vector<1x32xf32> to vector<22x32xf32>
    %508 = arith.addf %506, %507 : vector<22x32xf32>
    %509 = arith.addf %403, %508 : vector<22x32xf32>
    %cst_242 = arith.constant dense<0.000000e+00> : vector<22xf32>
    %510 = vector.multi_reduction <add>, %509, %cst_242 [1] : vector<22x32xf32> to vector<22xf32>
    %511 = vector.shape_cast %510 : vector<22xf32> to vector<22x1xf32>
    %cst_243 = arith.constant 3.200000e+01 : f32
    %512 = vector.broadcast %cst_243 : f32 to vector<22x1xf32>
    %513 = arith.divf %511, %512 : vector<22x1xf32>
    %514 = vector.broadcast %513 : vector<22x1xf32> to vector<22x32xf32>
    %515 = arith.subf %509, %514 : vector<22x32xf32>
    %516 = arith.mulf %515, %515 : vector<22x32xf32>
    %cst_244 = arith.constant dense<0.000000e+00> : vector<22xf32>
    %517 = vector.multi_reduction <add>, %516, %cst_244 [1] : vector<22x32xf32> to vector<22xf32>
    %518 = vector.shape_cast %517 : vector<22xf32> to vector<22x1xf32>
    %cst_245 = arith.constant 3.200000e+01 : f32
    %519 = vector.broadcast %cst_245 : f32 to vector<22x1xf32>
    %520 = arith.divf %518, %519 : vector<22x1xf32>
    %cst_246 = arith.constant 9.99999974E-6 : f32
    %521 = vector.broadcast %cst_246 : f32 to vector<22x1xf32>
    %522 = arith.addf %520, %521 : vector<22x1xf32>
    %523 = math.rsqrt %522 : vector<22x1xf32>
    %524 = vector.broadcast %523 : vector<22x1xf32> to vector<22x32xf32>
    %525 = arith.mulf %515, %524 : vector<22x32xf32>
    %526 = vector.broadcast %421 : vector<1x32xf32> to vector<22x32xf32>
    %527 = arith.mulf %525, %526 : vector<22x32xf32>
    %528 = vector.broadcast %423 : vector<1x32xf32> to vector<22x32xf32>
    %529 = arith.addf %527, %528 : vector<22x32xf32>
    %cst_247 = arith.constant dense<0.000000e+00> : vector<22x64xf32>
    %530 = tpu.matmul %529, %413, %cst_247 {dimension_numbers = #tpu.dot_dimension_numbers<[1], [0], [0], [1], [0, 0, 1, 1], [], []>} : vector<22x32xf32>, vector<32x64xf32>, vector<22x64xf32> -> vector<22x64xf32>
    %531 = vector.broadcast %415 : vector<1x64xf32> to vector<22x64xf32>
    %532 = arith.addf %530, %531 : vector<22x64xf32>
    %cst_248 = arith.constant 5.000000e-01 : f32
    %533 = vector.broadcast %cst_248 : f32 to vector<22x64xf32>
    %534 = arith.mulf %533, %532 : vector<22x64xf32>
    %cst_249 = arith.constant 4.471500e-02 : f32
    %535 = vector.broadcast %cst_249 : f32 to vector<22x64xf32>
    %536 = arith.mulf %535, %532 : vector<22x64xf32>
    %537 = arith.mulf %536, %532 : vector<22x64xf32>
    %538 = arith.mulf %537, %532 : vector<22x64xf32>
    %539 = arith.addf %532, %538 : vector<22x64xf32>
    %cst_250 = arith.constant 0.797884583 : f32
    %540 = vector.broadcast %cst_250 : f32 to vector<22x64xf32>
    %541 = arith.mulf %540, %539 : vector<22x64xf32>
    %542 = math.tanh %541 : vector<22x64xf32>
    %cst_251 = arith.constant 1.000000e+00 : f32
    %543 = vector.broadcast %cst_251 : f32 to vector<22x64xf32>
    %544 = arith.addf %543, %542 : vector<22x64xf32>
    %545 = arith.mulf %534, %544 : vector<22x64xf32>
    %cst_252 = arith.constant dense<0.000000e+00> : vector<22x32xf32>
    %546 = tpu.matmul %545, %417, %cst_252 {dimension_numbers = #tpu.dot_dimension_numbers<[1], [0], [0], [1], [0, 0, 1, 1], [], []>} : vector<22x64xf32>, vector<64x32xf32>, vector<22x32xf32> -> vector<22x32xf32>
    %547 = vector.broadcast %419 : vector<1x32xf32> to vector<22x32xf32>
    %548 = arith.addf %546, %547 : vector<22x32xf32>
    %549 = arith.addf %529, %548 : vector<22x32xf32>
    %cst_253 = arith.constant dense<0.000000e+00> : vector<22xf32>
    %550 = vector.multi_reduction <add>, %549, %cst_253 [1] : vector<22x32xf32> to vector<22xf32>
    %551 = vector.shape_cast %550 : vector<22xf32> to vector<22x1xf32>
    %cst_254 = arith.constant 3.200000e+01 : f32
    %552 = vector.broadcast %cst_254 : f32 to vector<22x1xf32>
    %553 = arith.divf %551, %552 : vector<22x1xf32>
    %554 = vector.broadcast %553 : vector<22x1xf32> to vector<22x32xf32>
    %555 = arith.subf %549, %554 : vector<22x32xf32>
    %556 = arith.mulf %555, %555 : vector<22x32xf32>
    %cst_255 = arith.constant dense<0.000000e+00> : vector<22xf32>
    %557 = vector.multi_reduction <add>, %556, %cst_255 [1] : vector<22x32xf32> to vector<22xf32>
    %558 = vector.shape_cast %557 : vector<22xf32> to vector<22x1xf32>
    %cst_256 = arith.constant 3.200000e+01 : f32
    %559 = vector.broadcast %cst_256 : f32 to vector<22x1xf32>
    %560 = arith.divf %558, %559 : vector<22x1xf32>
    %cst_257 = arith.constant 9.99999974E-6 : f32
    %561 = vector.broadcast %cst_257 : f32 to vector<22x1xf32>
    %562 = arith.addf %560, %561 : vector<22x1xf32>
    %563 = math.rsqrt %562 : vector<22x1xf32>
    %564 = vector.broadcast %563 : vector<22x1xf32> to vector<22x32xf32>
    %565 = arith.mulf %555, %564 : vector<22x32xf32>
    %566 = vector.broadcast %425 : vector<1x32xf32> to vector<22x32xf32>
    %567 = arith.mulf %565, %566 : vector<22x32xf32>
    %568 = vector.broadcast %427 : vector<1x32xf32> to vector<22x32xf32>
    %569 = arith.addf %567, %568 : vector<22x32xf32>
    %570 = vector.extract_strided_slice %569 {offsets = [1, 0], sizes = [10, 32], strides = [1, 1]} : vector<22x32xf32> to vector<10x32xf32>
    %571 = vector.extract_strided_slice %569 {offsets = [12, 0], sizes = [10, 32], strides = [1, 1]} : vector<22x32xf32> to vector<10x32xf32>
    %572 = tpu.concatenate %570, %571 in 0 : vector<10x32xf32>, vector<10x32xf32> -> vector<20x32xf32>
    %c1_258 = arith.constant 1 : index
    %c0_259 = arith.constant 0 : index
    %c0_260 = arith.constant 0 : index
    %573 = vector.load %arg38[%c1_258, %c0_259, %c0_260] : memref<2x32x32xf32, #tpu.memory_space<vmem>>, vector<1x32x32xf32>
    %574 = vector.shape_cast %573 : vector<1x32x32xf32> to vector<32x32xf32>
    %c1_261 = arith.constant 1 : index
    %c0_262 = arith.constant 0 : index
    %c0_263 = arith.constant 0 : index
    %575 = vector.load %arg39[%c1_261, %c0_262, %c0_263] : memref<2x1x32xf32, #tpu.memory_space<vmem>>, vector<1x1x32xf32>
    %576 = vector.shape_cast %575 : vector<1x1x32xf32> to vector<1x32xf32>
    %cst_264 = arith.constant dense<0.000000e+00> : vector<2x32xf32>
    %577 = tpu.matmul %371, %574, %cst_264 {dimension_numbers = #tpu.dot_dimension_numbers<[1], [0], [0], [1], [0, 0, 1, 1], [], []>} : vector<2x32xf32>, vector<32x32xf32>, vector<2x32xf32> -> vector<2x32xf32>
    %578 = vector.broadcast %576 : vector<1x32xf32> to vector<2x32xf32>
    %579 = arith.addf %577, %578 : vector<2x32xf32>
    %580 = vector.extract_strided_slice %579 {offsets = [0, 0], sizes = [1, 32], strides = [1, 1]} : vector<2x32xf32> to vector<1x32xf32>
    %581 = vector.extract_strided_slice %572 {offsets = [0, 0], sizes = [10, 32], strides = [1, 1]} : vector<20x32xf32> to vector<10x32xf32>
    %582 = vector.extract_strided_slice %579 {offsets = [1, 0], sizes = [1, 32], strides = [1, 1]} : vector<2x32xf32> to vector<1x32xf32>
    %583 = vector.extract_strided_slice %572 {offsets = [10, 0], sizes = [10, 32], strides = [1, 1]} : vector<20x32xf32> to vector<10x32xf32>
    %584 = tpu.concatenate %580, %581, %582, %583 in 0 : vector<1x32xf32>, vector<10x32xf32>, vector<1x32xf32>, vector<10x32xf32> -> vector<22x32xf32>
    %c1_265 = arith.constant 1 : index
    %c0_266 = arith.constant 0 : index
    %c0_267 = arith.constant 0 : index
    %585 = vector.load %arg26[%c1_265, %c0_266, %c0_267] : memref<2x32x96xf32, #tpu.memory_space<vmem>>, vector<1x32x96xf32>
    %586 = vector.shape_cast %585 : vector<1x32x96xf32> to vector<32x96xf32>
    %c1_268 = arith.constant 1 : index
    %c0_269 = arith.constant 0 : index
    %c0_270 = arith.constant 0 : index
    %587 = vector.load %arg27[%c1_268, %c0_269, %c0_270] : memref<2x1x96xf32, #tpu.memory_space<vmem>>, vector<1x1x96xf32>
    %588 = vector.shape_cast %587 : vector<1x1x96xf32> to vector<1x96xf32>
    %c1_271 = arith.constant 1 : index
    %c0_272 = arith.constant 0 : index
    %c0_273 = arith.constant 0 : index
    %589 = vector.load %arg28[%c1_271, %c0_272, %c0_273] : memref<2x32x32xf32, #tpu.memory_space<vmem>>, vector<1x32x32xf32>
    %590 = vector.shape_cast %589 : vector<1x32x32xf32> to vector<32x32xf32>
    %c1_274 = arith.constant 1 : index
    %c0_275 = arith.constant 0 : index
    %c0_276 = arith.constant 0 : index
    %591 = vector.load %arg29[%c1_274, %c0_275, %c0_276] : memref<2x1x32xf32, #tpu.memory_space<vmem>>, vector<1x1x32xf32>
    %592 = vector.shape_cast %591 : vector<1x1x32xf32> to vector<1x32xf32>
    %c1_277 = arith.constant 1 : index
    %c0_278 = arith.constant 0 : index
    %c0_279 = arith.constant 0 : index
    %593 = vector.load %arg30[%c1_277, %c0_278, %c0_279] : memref<2x32x64xf32, #tpu.memory_space<vmem>>, vector<1x32x64xf32>
    %594 = vector.shape_cast %593 : vector<1x32x64xf32> to vector<32x64xf32>
    %c1_280 = arith.constant 1 : index
    %c0_281 = arith.constant 0 : index
    %c0_282 = arith.constant 0 : index
    %595 = vector.load %arg31[%c1_280, %c0_281, %c0_282] : memref<2x1x64xf32, #tpu.memory_space<vmem>>, vector<1x1x64xf32>
    %596 = vector.shape_cast %595 : vector<1x1x64xf32> to vector<1x64xf32>
    %c1_283 = arith.constant 1 : index
    %c0_284 = arith.constant 0 : index
    %c0_285 = arith.constant 0 : index
    %597 = vector.load %arg32[%c1_283, %c0_284, %c0_285] : memref<2x64x32xf32, #tpu.memory_space<vmem>>, vector<1x64x32xf32>
    %598 = vector.shape_cast %597 : vector<1x64x32xf32> to vector<64x32xf32>
    %c1_286 = arith.constant 1 : index
    %c0_287 = arith.constant 0 : index
    %c0_288 = arith.constant 0 : index
    %599 = vector.load %arg33[%c1_286, %c0_287, %c0_288] : memref<2x1x32xf32, #tpu.memory_space<vmem>>, vector<1x1x32xf32>
    %600 = vector.shape_cast %599 : vector<1x1x32xf32> to vector<1x32xf32>
    %c1_289 = arith.constant 1 : index
    %c0_290 = arith.constant 0 : index
    %c0_291 = arith.constant 0 : index
    %601 = vector.load %arg34[%c1_289, %c0_290, %c0_291] : memref<2x1x32xf32, #tpu.memory_space<vmem>>, vector<1x1x32xf32>
    %602 = vector.shape_cast %601 : vector<1x1x32xf32> to vector<1x32xf32>
    %c1_292 = arith.constant 1 : index
    %c0_293 = arith.constant 0 : index
    %c0_294 = arith.constant 0 : index
    %603 = vector.load %arg35[%c1_292, %c0_293, %c0_294] : memref<2x1x32xf32, #tpu.memory_space<vmem>>, vector<1x1x32xf32>
    %604 = vector.shape_cast %603 : vector<1x1x32xf32> to vector<1x32xf32>
    %c1_295 = arith.constant 1 : index
    %c0_296 = arith.constant 0 : index
    %c0_297 = arith.constant 0 : index
    %605 = vector.load %arg36[%c1_295, %c0_296, %c0_297] : memref<2x1x32xf32, #tpu.memory_space<vmem>>, vector<1x1x32xf32>
    %606 = vector.shape_cast %605 : vector<1x1x32xf32> to vector<1x32xf32>
    %c1_298 = arith.constant 1 : index
    %c0_299 = arith.constant 0 : index
    %c0_300 = arith.constant 0 : index
    %607 = vector.load %arg37[%c1_298, %c0_299, %c0_300] : memref<2x1x32xf32, #tpu.memory_space<vmem>>, vector<1x1x32xf32>
    %608 = vector.shape_cast %607 : vector<1x1x32xf32> to vector<1x32xf32>
    %cst_301 = arith.constant dense<0.000000e+00> : vector<22x96xf32>
    %609 = tpu.matmul %584, %586, %cst_301 {dimension_numbers = #tpu.dot_dimension_numbers<[1], [0], [0], [1], [0, 0, 1, 1], [], []>} : vector<22x32xf32>, vector<32x96xf32>, vector<22x96xf32> -> vector<22x96xf32>
    %610 = vector.broadcast %588 : vector<1x96xf32> to vector<22x96xf32>
    %611 = arith.addf %609, %610 : vector<22x96xf32>
    %612 = vector.extract_strided_slice %611 {offsets = [0, 0], sizes = [11, 16], strides = [1, 1]} : vector<22x96xf32> to vector<11x16xf32>
    %613 = vector.extract_strided_slice %611 {offsets = [0, 32], sizes = [11, 16], strides = [1, 1]} : vector<22x96xf32> to vector<11x16xf32>
    %614 = vector.extract_strided_slice %611 {offsets = [0, 64], sizes = [11, 16], strides = [1, 1]} : vector<22x96xf32> to vector<11x16xf32>
    %cst_302 = arith.constant dense<0.000000e+00> : vector<11x11xf32>
    %615 = tpu.matmul %612, %613, %cst_302 {dimension_numbers = #tpu.dot_dimension_numbers<[1], [1], [0], [0], [0, 0, 1, 0], [], []>} : vector<11x16xf32>, vector<11x16xf32>, vector<11x11xf32> -> vector<11x11xf32>
    %cst_303 = arith.constant 2.500000e-01 : f32
    %616 = vector.broadcast %cst_303 : f32 to vector<11x11xf32>
    %617 = arith.mulf %615, %616 : vector<11x11xf32>
    %618 = arith.addf %617, %391 : vector<11x11xf32>
    %cst_304 = arith.constant dense<0xFF800000> : vector<11xf32>
    %619 = vector.multi_reduction <maximumf>, %618, %cst_304 [1] : vector<11x11xf32> to vector<11xf32>
    %620 = vector.shape_cast %619 : vector<11xf32> to vector<11x1xf32>
    %621 = vector.broadcast %620 : vector<11x1xf32> to vector<11x11xf32>
    %622 = arith.subf %618, %621 : vector<11x11xf32>
    %623 = math.exp %622 : vector<11x11xf32>
    %cst_305 = arith.constant dense<0.000000e+00> : vector<11xf32>
    %624 = vector.multi_reduction <add>, %623, %cst_305 [1] : vector<11x11xf32> to vector<11xf32>
    %625 = vector.shape_cast %624 : vector<11xf32> to vector<11x1xf32>
    %cst_306 = arith.constant dense<0.000000e+00> : vector<11x16xf32>
    %626 = tpu.matmul %623, %614, %cst_306 {dimension_numbers = #tpu.dot_dimension_numbers<[1], [0], [0], [1], [0, 0, 1, 1], [], []>} : vector<11x11xf32>, vector<11x16xf32>, vector<11x16xf32> -> vector<11x16xf32>
    %627 = tpu.reciprocal %625 {approx = true} : vector<11x1xf32> -> vector<11x1xf32>
    %628 = vector.broadcast %627 : vector<11x1xf32> to vector<11x16xf32>
    %629 = arith.mulf %626, %628 : vector<11x16xf32>
    %630 = vector.extract_strided_slice %611 {offsets = [0, 16], sizes = [11, 16], strides = [1, 1]} : vector<22x96xf32> to vector<11x16xf32>
    %631 = vector.extract_strided_slice %611 {offsets = [0, 48], sizes = [11, 16], strides = [1, 1]} : vector<22x96xf32> to vector<11x16xf32>
    %632 = vector.extract_strided_slice %611 {offsets = [0, 80], sizes = [11, 16], strides = [1, 1]} : vector<22x96xf32> to vector<11x16xf32>
    %cst_307 = arith.constant dense<0.000000e+00> : vector<11x11xf32>
    %633 = tpu.matmul %630, %631, %cst_307 {dimension_numbers = #tpu.dot_dimension_numbers<[1], [1], [0], [0], [0, 0, 1, 0], [], []>} : vector<11x16xf32>, vector<11x16xf32>, vector<11x11xf32> -> vector<11x11xf32>
    %cst_308 = arith.constant 2.500000e-01 : f32
    %634 = vector.broadcast %cst_308 : f32 to vector<11x11xf32>
    %635 = arith.mulf %633, %634 : vector<11x11xf32>
    %636 = arith.addf %635, %391 : vector<11x11xf32>
    %cst_309 = arith.constant dense<0xFF800000> : vector<11xf32>
    %637 = vector.multi_reduction <maximumf>, %636, %cst_309 [1] : vector<11x11xf32> to vector<11xf32>
    %638 = vector.shape_cast %637 : vector<11xf32> to vector<11x1xf32>
    %639 = vector.broadcast %638 : vector<11x1xf32> to vector<11x11xf32>
    %640 = arith.subf %636, %639 : vector<11x11xf32>
    %641 = math.exp %640 : vector<11x11xf32>
    %cst_310 = arith.constant dense<0.000000e+00> : vector<11xf32>
    %642 = vector.multi_reduction <add>, %641, %cst_310 [1] : vector<11x11xf32> to vector<11xf32>
    %643 = vector.shape_cast %642 : vector<11xf32> to vector<11x1xf32>
    %cst_311 = arith.constant dense<0.000000e+00> : vector<11x16xf32>
    %644 = tpu.matmul %641, %632, %cst_311 {dimension_numbers = #tpu.dot_dimension_numbers<[1], [0], [0], [1], [0, 0, 1, 1], [], []>} : vector<11x11xf32>, vector<11x16xf32>, vector<11x16xf32> -> vector<11x16xf32>
    %645 = tpu.reciprocal %643 {approx = true} : vector<11x1xf32> -> vector<11x1xf32>
    %646 = vector.broadcast %645 : vector<11x1xf32> to vector<11x16xf32>
    %647 = arith.mulf %644, %646 : vector<11x16xf32>
    %648 = tpu.concatenate %629, %647 in 1 : vector<11x16xf32>, vector<11x16xf32> -> vector<11x32xf32>
    %649 = vector.extract_strided_slice %611 {offsets = [11, 0], sizes = [11, 16], strides = [1, 1]} : vector<22x96xf32> to vector<11x16xf32>
    %650 = vector.extract_strided_slice %611 {offsets = [11, 32], sizes = [11, 16], strides = [1, 1]} : vector<22x96xf32> to vector<11x16xf32>
    %651 = vector.extract_strided_slice %611 {offsets = [11, 64], sizes = [11, 16], strides = [1, 1]} : vector<22x96xf32> to vector<11x16xf32>
    %cst_312 = arith.constant dense<0.000000e+00> : vector<11x11xf32>
    %652 = tpu.matmul %649, %650, %cst_312 {dimension_numbers = #tpu.dot_dimension_numbers<[1], [1], [0], [0], [0, 0, 1, 0], [], []>} : vector<11x16xf32>, vector<11x16xf32>, vector<11x11xf32> -> vector<11x11xf32>
    %cst_313 = arith.constant 2.500000e-01 : f32
    %653 = vector.broadcast %cst_313 : f32 to vector<11x11xf32>
    %654 = arith.mulf %652, %653 : vector<11x11xf32>
    %655 = arith.addf %654, %391 : vector<11x11xf32>
    %cst_314 = arith.constant dense<0xFF800000> : vector<11xf32>
    %656 = vector.multi_reduction <maximumf>, %655, %cst_314 [1] : vector<11x11xf32> to vector<11xf32>
    %657 = vector.shape_cast %656 : vector<11xf32> to vector<11x1xf32>
    %658 = vector.broadcast %657 : vector<11x1xf32> to vector<11x11xf32>
    %659 = arith.subf %655, %658 : vector<11x11xf32>
    %660 = math.exp %659 : vector<11x11xf32>
    %cst_315 = arith.constant dense<0.000000e+00> : vector<11xf32>
    %661 = vector.multi_reduction <add>, %660, %cst_315 [1] : vector<11x11xf32> to vector<11xf32>
    %662 = vector.shape_cast %661 : vector<11xf32> to vector<11x1xf32>
    %cst_316 = arith.constant dense<0.000000e+00> : vector<11x16xf32>
    %663 = tpu.matmul %660, %651, %cst_316 {dimension_numbers = #tpu.dot_dimension_numbers<[1], [0], [0], [1], [0, 0, 1, 1], [], []>} : vector<11x11xf32>, vector<11x16xf32>, vector<11x16xf32> -> vector<11x16xf32>
    %664 = tpu.reciprocal %662 {approx = true} : vector<11x1xf32> -> vector<11x1xf32>
    %665 = vector.broadcast %664 : vector<11x1xf32> to vector<11x16xf32>
    %666 = arith.mulf %663, %665 : vector<11x16xf32>
    %667 = vector.extract_strided_slice %611 {offsets = [11, 16], sizes = [11, 16], strides = [1, 1]} : vector<22x96xf32> to vector<11x16xf32>
    %668 = vector.extract_strided_slice %611 {offsets = [11, 48], sizes = [11, 16], strides = [1, 1]} : vector<22x96xf32> to vector<11x16xf32>
    %669 = vector.extract_strided_slice %611 {offsets = [11, 80], sizes = [11, 16], strides = [1, 1]} : vector<22x96xf32> to vector<11x16xf32>
    %cst_317 = arith.constant dense<0.000000e+00> : vector<11x11xf32>
    %670 = tpu.matmul %667, %668, %cst_317 {dimension_numbers = #tpu.dot_dimension_numbers<[1], [1], [0], [0], [0, 0, 1, 0], [], []>} : vector<11x16xf32>, vector<11x16xf32>, vector<11x11xf32> -> vector<11x11xf32>
    %cst_318 = arith.constant 2.500000e-01 : f32
    %671 = vector.broadcast %cst_318 : f32 to vector<11x11xf32>
    %672 = arith.mulf %670, %671 : vector<11x11xf32>
    %673 = arith.addf %672, %391 : vector<11x11xf32>
    %cst_319 = arith.constant dense<0xFF800000> : vector<11xf32>
    %674 = vector.multi_reduction <maximumf>, %673, %cst_319 [1] : vector<11x11xf32> to vector<11xf32>
    %675 = vector.shape_cast %674 : vector<11xf32> to vector<11x1xf32>
    %676 = vector.broadcast %675 : vector<11x1xf32> to vector<11x11xf32>
    %677 = arith.subf %673, %676 : vector<11x11xf32>
    %678 = math.exp %677 : vector<11x11xf32>
    %cst_320 = arith.constant dense<0.000000e+00> : vector<11xf32>
    %679 = vector.multi_reduction <add>, %678, %cst_320 [1] : vector<11x11xf32> to vector<11xf32>
    %680 = vector.shape_cast %679 : vector<11xf32> to vector<11x1xf32>
    %cst_321 = arith.constant dense<0.000000e+00> : vector<11x16xf32>
    %681 = tpu.matmul %678, %669, %cst_321 {dimension_numbers = #tpu.dot_dimension_numbers<[1], [0], [0], [1], [0, 0, 1, 1], [], []>} : vector<11x11xf32>, vector<11x16xf32>, vector<11x16xf32> -> vector<11x16xf32>
    %682 = tpu.reciprocal %680 {approx = true} : vector<11x1xf32> -> vector<11x1xf32>
    %683 = vector.broadcast %682 : vector<11x1xf32> to vector<11x16xf32>
    %684 = arith.mulf %681, %683 : vector<11x16xf32>
    %685 = tpu.concatenate %666, %684 in 1 : vector<11x16xf32>, vector<11x16xf32> -> vector<11x32xf32>
    %686 = tpu.concatenate %648, %685 in 0 : vector<11x32xf32>, vector<11x32xf32> -> vector<22x32xf32>
    %cst_322 = arith.constant dense<0.000000e+00> : vector<22x32xf32>
    %687 = tpu.matmul %686, %590, %cst_322 {dimension_numbers = #tpu.dot_dimension_numbers<[1], [0], [0], [1], [0, 0, 1, 1], [], []>} : vector<22x32xf32>, vector<32x32xf32>, vector<22x32xf32> -> vector<22x32xf32>
    %688 = vector.broadcast %592 : vector<1x32xf32> to vector<22x32xf32>
    %689 = arith.addf %687, %688 : vector<22x32xf32>
    %690 = arith.addf %584, %689 : vector<22x32xf32>
    %cst_323 = arith.constant dense<0.000000e+00> : vector<22xf32>
    %691 = vector.multi_reduction <add>, %690, %cst_323 [1] : vector<22x32xf32> to vector<22xf32>
    %692 = vector.shape_cast %691 : vector<22xf32> to vector<22x1xf32>
    %cst_324 = arith.constant 3.200000e+01 : f32
    %693 = vector.broadcast %cst_324 : f32 to vector<22x1xf32>
    %694 = arith.divf %692, %693 : vector<22x1xf32>
    %695 = vector.broadcast %694 : vector<22x1xf32> to vector<22x32xf32>
    %696 = arith.subf %690, %695 : vector<22x32xf32>
    %697 = arith.mulf %696, %696 : vector<22x32xf32>
    %cst_325 = arith.constant dense<0.000000e+00> : vector<22xf32>
    %698 = vector.multi_reduction <add>, %697, %cst_325 [1] : vector<22x32xf32> to vector<22xf32>
    %699 = vector.shape_cast %698 : vector<22xf32> to vector<22x1xf32>
    %cst_326 = arith.constant 3.200000e+01 : f32
    %700 = vector.broadcast %cst_326 : f32 to vector<22x1xf32>
    %701 = arith.divf %699, %700 : vector<22x1xf32>
    %cst_327 = arith.constant 9.99999974E-6 : f32
    %702 = vector.broadcast %cst_327 : f32 to vector<22x1xf32>
    %703 = arith.addf %701, %702 : vector<22x1xf32>
    %704 = math.rsqrt %703 : vector<22x1xf32>
    %705 = vector.broadcast %704 : vector<22x1xf32> to vector<22x32xf32>
    %706 = arith.mulf %696, %705 : vector<22x32xf32>
    %707 = vector.broadcast %602 : vector<1x32xf32> to vector<22x32xf32>
    %708 = arith.mulf %706, %707 : vector<22x32xf32>
    %709 = vector.broadcast %604 : vector<1x32xf32> to vector<22x32xf32>
    %710 = arith.addf %708, %709 : vector<22x32xf32>
    %cst_328 = arith.constant dense<0.000000e+00> : vector<22x64xf32>
    %711 = tpu.matmul %710, %594, %cst_328 {dimension_numbers = #tpu.dot_dimension_numbers<[1], [0], [0], [1], [0, 0, 1, 1], [], []>} : vector<22x32xf32>, vector<32x64xf32>, vector<22x64xf32> -> vector<22x64xf32>
    %712 = vector.broadcast %596 : vector<1x64xf32> to vector<22x64xf32>
    %713 = arith.addf %711, %712 : vector<22x64xf32>
    %cst_329 = arith.constant 5.000000e-01 : f32
    %714 = vector.broadcast %cst_329 : f32 to vector<22x64xf32>
    %715 = arith.mulf %714, %713 : vector<22x64xf32>
    %cst_330 = arith.constant 4.471500e-02 : f32
    %716 = vector.broadcast %cst_330 : f32 to vector<22x64xf32>
    %717 = arith.mulf %716, %713 : vector<22x64xf32>
    %718 = arith.mulf %717, %713 : vector<22x64xf32>
    %719 = arith.mulf %718, %713 : vector<22x64xf32>
    %720 = arith.addf %713, %719 : vector<22x64xf32>
    %cst_331 = arith.constant 0.797884583 : f32
    %721 = vector.broadcast %cst_331 : f32 to vector<22x64xf32>
    %722 = arith.mulf %721, %720 : vector<22x64xf32>
    %723 = math.tanh %722 : vector<22x64xf32>
    %cst_332 = arith.constant 1.000000e+00 : f32
    %724 = vector.broadcast %cst_332 : f32 to vector<22x64xf32>
    %725 = arith.addf %724, %723 : vector<22x64xf32>
    %726 = arith.mulf %715, %725 : vector<22x64xf32>
    %cst_333 = arith.constant dense<0.000000e+00> : vector<22x32xf32>
    %727 = tpu.matmul %726, %598, %cst_333 {dimension_numbers = #tpu.dot_dimension_numbers<[1], [0], [0], [1], [0, 0, 1, 1], [], []>} : vector<22x64xf32>, vector<64x32xf32>, vector<22x32xf32> -> vector<22x32xf32>
    %728 = vector.broadcast %600 : vector<1x32xf32> to vector<22x32xf32>
    %729 = arith.addf %727, %728 : vector<22x32xf32>
    %730 = arith.addf %710, %729 : vector<22x32xf32>
    %cst_334 = arith.constant dense<0.000000e+00> : vector<22xf32>
    %731 = vector.multi_reduction <add>, %730, %cst_334 [1] : vector<22x32xf32> to vector<22xf32>
    %732 = vector.shape_cast %731 : vector<22xf32> to vector<22x1xf32>
    %cst_335 = arith.constant 3.200000e+01 : f32
    %733 = vector.broadcast %cst_335 : f32 to vector<22x1xf32>
    %734 = arith.divf %732, %733 : vector<22x1xf32>
    %735 = vector.broadcast %734 : vector<22x1xf32> to vector<22x32xf32>
    %736 = arith.subf %730, %735 : vector<22x32xf32>
    %737 = arith.mulf %736, %736 : vector<22x32xf32>
    %cst_336 = arith.constant dense<0.000000e+00> : vector<22xf32>
    %738 = vector.multi_reduction <add>, %737, %cst_336 [1] : vector<22x32xf32> to vector<22xf32>
    %739 = vector.shape_cast %738 : vector<22xf32> to vector<22x1xf32>
    %cst_337 = arith.constant 3.200000e+01 : f32
    %740 = vector.broadcast %cst_337 : f32 to vector<22x1xf32>
    %741 = arith.divf %739, %740 : vector<22x1xf32>
    %cst_338 = arith.constant 9.99999974E-6 : f32
    %742 = vector.broadcast %cst_338 : f32 to vector<22x1xf32>
    %743 = arith.addf %741, %742 : vector<22x1xf32>
    %744 = math.rsqrt %743 : vector<22x1xf32>
    %745 = vector.broadcast %744 : vector<22x1xf32> to vector<22x32xf32>
    %746 = arith.mulf %736, %745 : vector<22x32xf32>
    %747 = vector.broadcast %606 : vector<1x32xf32> to vector<22x32xf32>
    %748 = arith.mulf %746, %747 : vector<22x32xf32>
    %749 = vector.broadcast %608 : vector<1x32xf32> to vector<22x32xf32>
    %750 = arith.addf %748, %749 : vector<22x32xf32>
    %751 = vector.extract_strided_slice %750 {offsets = [1, 0], sizes = [10, 32], strides = [1, 1]} : vector<22x32xf32> to vector<10x32xf32>
    %752 = vector.extract_strided_slice %750 {offsets = [12, 0], sizes = [10, 32], strides = [1, 1]} : vector<22x32xf32> to vector<10x32xf32>
    %753 = tpu.concatenate %751, %752 in 0 : vector<10x32xf32>, vector<10x32xf32> -> vector<20x32xf32>
    %754 = vector.extract_strided_slice %753 {offsets = [4, 0], sizes = [6, 32], strides = [1, 1]} : vector<20x32xf32> to vector<6x32xf32>
    %755 = vector.extract_strided_slice %753 {offsets = [14, 0], sizes = [6, 32], strides = [1, 1]} : vector<20x32xf32> to vector<6x32xf32>
    %756 = tpu.concatenate %754, %755 in 0 : vector<6x32xf32>, vector<6x32xf32> -> vector<12x32xf32>
    %c0_339 = arith.constant 0 : index
    %c0_340 = arith.constant 0 : index
    %757 = vector.load %arg12[%c0_339, %c0_340] : memref<32x6xf32, #tpu.memory_space<vmem>>, vector<32x6xf32>
    %c0_341 = arith.constant 0 : index
    %c0_342 = arith.constant 0 : index
    %758 = vector.load %arg13[%c0_341, %c0_342] : memref<1x6xf32, #tpu.memory_space<vmem>>, vector<1x6xf32>
    %cst_343 = arith.constant dense<0.000000e+00> : vector<12x6xf32>
    %759 = tpu.matmul %756, %757, %cst_343 {dimension_numbers = #tpu.dot_dimension_numbers<[1], [0], [0], [1], [0, 0, 1, 1], [], []>} : vector<12x32xf32>, vector<32x6xf32>, vector<12x6xf32> -> vector<12x6xf32>
    %760 = vector.broadcast %758 : vector<1x6xf32> to vector<12x6xf32>
    %761 = arith.addf %759, %760 : vector<12x6xf32>
    %762 = vector.extract_strided_slice %1 {offsets = [3, 0], sizes = [1, 6], strides = [1, 1]} : vector<20x6xf32> to vector<1x6xf32>
    %763 = vector.extract_strided_slice %761 {offsets = [0, 0], sizes = [6, 6], strides = [1, 1]} : vector<12x6xf32> to vector<6x6xf32>
    %764 = vector.broadcast %762 : vector<1x6xf32> to vector<6x6xf32>
    %765 = arith.addf %763, %764 : vector<6x6xf32>
    %c0_344 = arith.constant 0 : index
    %c0_345 = arith.constant 0 : index
    %c0_346 = arith.constant 0 : index
    %766 = vector.load %arg40[%c0_344, %c0_345, %c0_346] : memref<2x6x6xf32, #tpu.memory_space<vmem>>, vector<1x6x6xf32>
    %767 = vector.shape_cast %766 : vector<1x6x6xf32> to vector<6x6xf32>
    %768 = vector.shape_cast %765 : vector<6x6xf32> to vector<1x6x6xf32>
    tpu.vector_store %arg40[%c0_344, %c0_345, %c0_346], %768 {strides = array<i32>} : memref<2x6x6xf32, #tpu.memory_space<vmem>>, vector<1x6x6xf32>,
    %769 = vector.extract_strided_slice %1 {offsets = [13, 0], sizes = [1, 6], strides = [1, 1]} : vector<20x6xf32> to vector<1x6xf32>
    %770 = vector.extract_strided_slice %761 {offsets = [6, 0], sizes = [6, 6], strides = [1, 1]} : vector<12x6xf32> to vector<6x6xf32>
    %771 = vector.broadcast %769 : vector<1x6xf32> to vector<6x6xf32>
    %772 = arith.addf %770, %771 : vector<6x6xf32>
    %c1_347 = arith.constant 1 : index
    %c0_348 = arith.constant 0 : index
    %c0_349 = arith.constant 0 : index
    %773 = vector.load %arg40[%c1_347, %c0_348, %c0_349] : memref<2x6x6xf32, #tpu.memory_space<vmem>>, vector<1x6x6xf32>
    %774 = vector.shape_cast %773 : vector<1x6x6xf32> to vector<6x6xf32>
    %775 = vector.shape_cast %772 : vector<6x6xf32> to vector<1x6x6xf32>
    tpu.vector_store %arg40[%c1_347, %c0_348, %c0_349], %775 {strides = array<i32>} : memref<2x6x6xf32, #tpu.memory_space<vmem>>, vector<1x6x6xf32>,
    return
  }
}

</mosaic_0001>

<llo_original>
// kernel: tile.14
$region0: #{tile.14}
  %s0 = inlined_call_operand.vmem [shape: f32[2,12,32], index: 0, kind: input, shape index: {}]
  %s1 = inlined_call_operand.vmem [shape: f32[24,32], index: 1, kind: output, shape index: {}]
  %v2 = vld [vmem:[%s0] sm:$0xff]
  %vm3 = vcmask 261120
  %4 = vst.msk [vmem:[%s1] sm:$0xff] %vm3, %v2
  %s5 = scalar_lea.vmem %s0, 8
  %v6 = vld [vmem:[%s5] sm:$0xf]
  %vm7 = vcmask 261120
  %s8 = scalar_lea.vmem %s1, 8
  %9 = vst.msk [vmem:[%s8] sm:$0xf] %vm7, %v6
  %s10 = scalar_lea.vmem %s0, 16
  %v11 = vld [vmem:[%s10] sm:$0xff]
  %vm12 = vcmask 261120
  %s13 = scalar_lea.vmem %s1, 12
  %14 = vst.msk [vmem:[%s13] sm:$0xff] %vm12, %v11
  %s15 = scalar_lea.vmem %s0, 24
  %v16 = vld [vmem:[%s15] sm:$0xf]
  %vm17 = vcmask 261120
  %s18 = scalar_lea.vmem %s1, 20
  %19 = vst.msk [vmem:[%s18] sm:$0xf] %vm17, %v16

// kernel: tile.19
$region0: #{tile.19}
  %s0 = inlined_call_operand.vmem [shape: f32[2,10,32], index: 0, kind: input, shape index: {}]
  %s1 = inlined_call_operand.vmem [shape: f32[20,32], index: 1, kind: output, shape index: {}]
  %v2 = vld [vmem:[%s0] sm:$0xff]
  %vm3 = vcmask 261120
  %4 = vst.msk [vmem:[%s1] sm:$0xff] %vm3, %v2
  %s5 = scalar_lea.vmem %s0, 8
  %v6 = vld [vmem:[%s5] sm:$0x3]
  %vm7 = vcmask 261120
  %s8 = scalar_lea.vmem %s1, 8
  %9 = vst.msk [vmem:[%s8] sm:$0x3] %vm7, %v6
  %s10 = scalar_lea.vmem %s0, 16
  %v11 = vld [vmem:[%s10] sm:$0xff]
  %vm12 = vcmask 261120
  %s13 = scalar_lea.vmem %s1, 10
  %14 = vst.msk [vmem:[%s13] sm:$0xff] %vm12, %v11
  %s15 = scalar_lea.vmem %s0, 24
  %v16 = vld [vmem:[%s15] sm:$0x3]
  %vm17 = vcmask 261120
  %s18 = scalar_lea.vmem %s1, 18
  %19 = vst.msk [vmem:[%s18] sm:$0x3] %vm17, %v16

// kernel: vae_forward.1
$region0: #{vae_forward.1}
  #allocation0 [shape = 'u32[]', space=smem, size = 0x4, offset = 0x4, fixed_abs, tag = 'smem constant byte address 0x4 - core index']
  #allocation1 [shape = 'u32[72,128]{1,0:T(1,128)}', space=vmem, size = 0x9000, scoped, tag = 'internal scratch']
  %s0 = inlined_call_operand.smem [shape: u32[43], index: -1, kind: input, shape index: {}]
  %s1 = sld [smem:[%s0]]
  %s2 = scalar_lea.smem %s0, 1
  %s3 = sld [smem:[%s2]]
  %s4 = scalar_lea.smem %s0, 2
  %s5 = sld [smem:[%s4]]
  %s6 = scalar_lea.smem %s0, 3
  %s7 = sld [smem:[%s6]]
  %s8 = scalar_lea.smem %s0, 4
  %s9 = sld [smem:[%s8]]
  %s10 = scalar_lea.smem %s0, 5
  %s11 = sld [smem:[%s10]]
  %s12 = scalar_lea.smem %s0, 6
  %s13 = sld [smem:[%s12]]
  %s14 = scalar_lea.smem %s0, 7
  %s15 = sld [smem:[%s14]]
  %s16 = scalar_lea.smem %s0, 8
  %s17 = sld [smem:[%s16]]
  %s18 = scalar_lea.smem %s0, 9
  %s19 = sld [smem:[%s18]]
  %s20 = scalar_lea.smem %s0, 10
  %s21 = sld [smem:[%s20]]
  %s22 = scalar_lea.smem %s0, 11
  %s23 = sld [smem:[%s22]]
  %s24 = scalar_lea.smem %s0, 12
  %s25 = sld [smem:[%s24]]
  %s26 = scalar_lea.smem %s0, 13
  %s27 = sld [smem:[%s26]]
  %s28 = scalar_lea.smem %s0, 14
  %s29 = sld [smem:[%s28]]
  %s30 = scalar_lea.smem %s0, 15
  %s31 = sld [smem:[%s30]]
  %s32 = scalar_lea.smem %s0, 16
  %s33 = sld [smem:[%s32]]
  %s34 = scalar_lea.smem %s0, 17
  %s35 = sld [smem:[%s34]]
  %s36 = scalar_lea.smem %s0, 18
  %s37 = sld [smem:[%s36]]
  %s38 = scalar_lea.smem %s0, 19
  %s39 = sld [smem:[%s38]]
  %s40 = scalar_lea.smem %s0, 20
  %s41 = sld [smem:[%s40]]
  %s42 = scalar_lea.smem %s0, 21
  %s43 = sld [smem:[%s42]]
  %s44 = scalar_lea.smem %s0, 22
  %s45 = sld [smem:[%s44]]
  %s46 = scalar_lea.smem %s0, 23
  %s47 = sld [smem:[%s46]]
  %s48 = scalar_lea.smem %s0, 24
  %s49 = sld [smem:[%s48]]
  %s50 = scalar_lea.smem %s0, 25
  %s51 = sld [smem:[%s50]]
  %s52 = scalar_lea.smem %s0, 26
  %s53 = sld [smem:[%s52]]
  %s54 = scalar_lea.smem %s0, 27
  %s55 = sld [smem:[%s54]]
  %s56 = scalar_lea.smem %s0, 28
  %s57 = sld [smem:[%s56]]
  %s58 = scalar_lea.smem %s0, 29
  %s59 = sld [smem:[%s58]]
  %s60 = scalar_lea.smem %s0, 30
  %s61 = sld [smem:[%s60]]
  %s62 = scalar_lea.smem %s0, 31
  %s63 = sld [smem:[%s62]]
  %s64 = scalar_lea.smem %s0, 32
  %s65 = sld [smem:[%s64]]
  %s66 = scalar_lea.smem %s0, 33
  %s67 = sld [smem:[%s66]]
  %s68 = scalar_lea.smem %s0, 34
  %s69 = sld [smem:[%s68]]
  %s70 = scalar_lea.smem %s0, 35
  %s71 = sld [smem:[%s70]]
  %s72 = scalar_lea.smem %s0, 36
  %s73 = sld [smem:[%s72]]
  %s74 = scalar_lea.smem %s0, 37
  %s75 = sld [smem:[%s74]]
  %s76 = scalar_lea.smem %s0, 38
  %s77 = sld [smem:[%s76]]
  %s78 = scalar_lea.smem %s0, 39
  %s79 = sld [smem:[%s78]]
  %s80 = scalar_lea.smem %s0, 40
  %s81 = sld [smem:[%s80]]
  %s82 = scalar_lea.smem %s0, 41
  %s83 = sld [smem:[%s82]]
  %s84 = scalar_lea.smem %s0, 42
  %s85 = sld [smem:[%s84]]
  %86 = xla_tuple %s81, %s83, %s85
  %s87 = sld [smem:[#allocation0]]
  $region186: #{vae_forward.1} parent=0
    _
  %s89 = ssub.s32 1, %s87
  %s90 = scalar_select 0, %s89, %s87
  $region1: #{vae_forward.1} parent=0
    #allocation2 [shape = 'u8[1024]{0}', space=vmem, size = 0x400, scoped, tag = 'output window, operand 1, single buffered']
    #allocation3 [shape = 's32[1]{0}', space=sflag, size = 0x4, scoped, tag = 'scoped memory for vae_forward.1']
    #allocation4 [shape = 'u8[1024]{0}', space=vmem, size = 0x400, scoped, tag = 'output window, operand 2, single buffered']
    #allocation5 [shape = 's32[1]{0}', space=sflag, size = 0x4, scoped, tag = 'scoped memory for vae_forward.1']
    %91 = vsyncpa [#allocation3], 0
    %92 = vsyncpa [#allocation5], 0
    // Predicated region
    $region2: #{vae_forward.1} parent=1 // pred_check
      _
    $region3: #{vae_forward.1} parent=1 // pred_check_branch
      %94 = sbr.rel (0) target = $region5
    $region4: #{vae_forward.1} parent=1 // pred_region
      _
    $region5: #{vae_forward.1} parent=1 // pred_fallthru
      _
    // Predicated region
    $region6: #{vae_forward.1} parent=1 // pred_check
      _
    $region7: #{vae_forward.1} parent=1 // pred_check_branch
      %96 = sbr.rel (0) target = $region9
    $region8: #{vae_forward.1} parent=1 // pred_region
      _
    $region9: #{vae_forward.1} parent=1 // pred_fallthru
      _
    // Predicated region
    $region10: #{vae_forward.1} parent=1 // pred_check
      _
    $region11: #{vae_forward.1} parent=1 // pred_check_branch
      %98 = sbr.rel (0) target = $region13
    $region12: #{vae_forward.1} parent=1 // pred_region
      _
    $region13: #{vae_forward.1} parent=1 // pred_fallthru
      _
    // Predicated region
    $region14: #{vae_forward.1} parent=1 // pred_check
      _
    $region15: #{vae_forward.1} parent=1 // pred_check_branch
      %100 = sbr.rel (0) target = $region17
    $region16: #{vae_forward.1} parent=1 // pred_region
      _
    $region17: #{vae_forward.1} parent=1 // pred_fallthru
      _
    // Predicated region
    $region18: #{vae_forward.1} parent=1 // pred_check
      _
    $region19: #{vae_forward.1} parent=1 // pred_check_branch
      %102 = sbr.rel (0) target = $region21
    $region20: #{vae_forward.1} parent=1 // pred_region
      _
    $region21: #{vae_forward.1} parent=1 // pred_fallthru
      _
    // Predicated region
    $region22: #{vae_forward.1} parent=1 // pred_check
      _
    $region23: #{vae_forward.1} parent=1 // pred_check_branch
      %104 = sbr.rel (0) target = $region25
    $region24: #{vae_forward.1} parent=1 // pred_region
      _
    $region25: #{vae_forward.1} parent=1 // pred_fallthru
      _
    // Predicated region
    $region26: #{vae_forward.1} parent=1 // pred_check
      _
    $region27: #{vae_forward.1} parent=1 // pred_check_branch
      %106 = sbr.rel (0) target = $region29
    $region28: #{vae_forward.1} parent=1 // pred_region
      _
    $region29: #{vae_forward.1} parent=1 // pred_fallthru
      _
    // Predicated region
    $region30: #{vae_forward.1} parent=1 // pred_check
      _
    $region31: #{vae_forward.1} parent=1 // pred_check_branch
      %108 = sbr.rel (0) target = $region33
    $region32: #{vae_forward.1} parent=1 // pred_region
      _
    $region33: #{vae_forward.1} parent=1 // pred_fallthru
      _
    // Predicated region
    $region34: #{vae_forward.1} parent=1 // pred_check
      _
    $region35: #{vae_forward.1} parent=1 // pred_check_branch
      %110 = sbr.rel (0) target = $region37
    $region36: #{vae_forward.1} parent=1 // pred_region
      _
    $region37: #{vae_forward.1} parent=1 // pred_fallthru
      _
    // Predicated region
    $region38: #{vae_forward.1} parent=1 // pred_check
      _
    $region39: #{vae_forward.1} parent=1 // pred_check_branch
      %112 = sbr.rel (0) target = $region41
    $region40: #{vae_forward.1} parent=1 // pred_region
      _
    $region41: #{vae_forward.1} parent=1 // pred_fallthru
      _
    // Predicated region
    $region42: #{vae_forward.1} parent=1 // pred_check
      _
    $region43: #{vae_forward.1} parent=1 // pred_check_branch
      %114 = sbr.rel (0) target = $region45
    $region44: #{vae_forward.1} parent=1 // pred_region
      _
    $region45: #{vae_forward.1} parent=1 // pred_fallthru
      _
    // Predicated region
    $region46: #{vae_forward.1} parent=1 // pred_check
      _
    $region47: #{vae_forward.1} parent=1 // pred_check_branch
      %116 = sbr.rel (0) target = $region49
    $region48: #{vae_forward.1} parent=1 // pred_region
      _
    $region49: #{vae_forward.1} parent=1 // pred_fallthru
      _
    // Predicated region
    $region50: #{vae_forward.1} parent=1 // pred_check
      _
    $region51: #{vae_forward.1} parent=1 // pred_check_branch
      %118 = sbr.rel (0) target = $region53
    $region52: #{vae_forward.1} parent=1 // pred_region
      _
    $region53: #{vae_forward.1} parent=1 // pred_fallthru
      _
    // Predicated region
    $region54: #{vae_forward.1} parent=1 // pred_check
      _
    $region55: #{vae_forward.1} parent=1 // pred_check_branch
      %120 = sbr.rel (0) target = $region57
    $region56: #{vae_forward.1} parent=1 // pred_region
      _
    $region57: #{vae_forward.1} parent=1 // pred_fallthru
      _
    // Predicated region
    $region58: #{vae_forward.1} parent=1 // pred_check
      _
    $region59: #{vae_forward.1} parent=1 // pred_check_branch
      %122 = sbr.rel (0) target = $region61
    $region60: #{vae_forward.1} parent=1 // pred_region
      _
    $region61: #{vae_forward.1} parent=1 // pred_fallthru
      _
    // Predicated region
    $region62: #{vae_forward.1} parent=1 // pred_check
      _
    $region63: #{vae_forward.1} parent=1 // pred_check_branch
      %124 = sbr.rel (0) target = $region65
    $region64: #{vae_forward.1} parent=1 // pred_region
      _
    $region65: #{vae_forward.1} parent=1 // pred_fallthru
      _
    // Predicated region
    $region66: #{vae_forward.1} parent=1 // pred_check
      _
    $region67: #{vae_forward.1} parent=1 // pred_check_branch
      %126 = sbr.rel (0) target = $region69
    $region68: #{vae_forward.1} parent=1 // pred_region
      _
    $region69: #{vae_forward.1} parent=1 // pred_fallthru
      _
    // Predicated region
    $region70: #{vae_forward.1} parent=1 // pred_check
      _
    $region71: #{vae_forward.1} parent=1 // pred_check_branch
      %128 = sbr.rel (0) target = $region73
    $region72: #{vae_forward.1} parent=1 // pred_region
      _
    $region73: #{vae_forward.1} parent=1 // pred_fallthru
      _
    // Predicated region
    $region74: #{vae_forward.1} parent=1 // pred_check
      _
    $region75: #{vae_forward.1} parent=1 // pred_check_branch
      %130 = sbr.rel (0) target = $region77
    $region76: #{vae_forward.1} parent=1 // pred_region
      _
    $region77: #{vae_forward.1} parent=1 // pred_fallthru
      _
    // Predicated region
    $region78: #{vae_forward.1} parent=1 // pred_check
      _
    $region79: #{vae_forward.1} parent=1 // pred_check_branch
      %132 = sbr.rel (0) target = $region81
    $region80: #{vae_forward.1} parent=1 // pred_region
      _
    $region81: #{vae_forward.1} parent=1 // pred_fallthru
      _
    // Predicated region
    $region82: #{vae_forward.1} parent=1 // pred_check
      _
    $region83: #{vae_forward.1} parent=1 // pred_check_branch
      %134 = sbr.rel (0) target = $region85
    $region84: #{vae_forward.1} parent=1 // pred_region
      _
    $region85: #{vae_forward.1} parent=1 // pred_fallthru
      _
    // Predicated region
    $region86: #{vae_forward.1} parent=1 // pred_check
      _
    $region87: #{vae_forward.1} parent=1 // pred_check_branch
      %136 = sbr.rel (0) target = $region89
    $region88: #{vae_forward.1} parent=1 // pred_region
      _
    $region89: #{vae_forward.1} parent=1 // pred_fallthru
      _
    // Predicated region
    $region90: #{vae_forward.1} parent=1 // pred_check
      _
    $region91: #{vae_forward.1} parent=1 // pred_check_branch
      %138 = sbr.rel (0) target = $region93
    $region92: #{vae_forward.1} parent=1 // pred_region
      _
    $region93: #{vae_forward.1} parent=1 // pred_fallthru
      _
    // Predicated region
    $region94: #{vae_forward.1} parent=1 // pred_check
      _
    $region95: #{vae_forward.1} parent=1 // pred_check_branch
      %140 = sbr.rel (0) target = $region97
    $region96: #{vae_forward.1} parent=1 // pred_region
      _
    $region97: #{vae_forward.1} parent=1 // pred_fallthru
      _
    // Predicated region
    $region98: #{vae_forward.1} parent=1 // pred_check
      _
    $region99: #{vae_forward.1} parent=1 // pred_check_branch
      %142 = sbr.rel (0) target = $region101
    $region100: #{vae_forward.1} parent=1 // pred_region
      _
    $region101: #{vae_forward.1} parent=1 // pred_fallthru
      _
    // Predicated region
    $region102: #{vae_forward.1} parent=1 // pred_check
      _
    $region103: #{vae_forward.1} parent=1 // pred_check_branch
      %144 = sbr.rel (0) target = $region105
    $region104: #{vae_forward.1} parent=1 // pred_region
      _
    $region105: #{vae_forward.1} parent=1 // pred_fallthru
      _
    // Predicated region
    $region106: #{vae_forward.1} parent=1 // pred_check
      _
    $region107: #{vae_forward.1} parent=1 // pred_check_branch
      %146 = sbr.rel (0) target = $region109
    $region108: #{vae_forward.1} parent=1 // pred_region
      _
    $region109: #{vae_forward.1} parent=1 // pred_fallthru
      _
    // Predicated region
    $region110: #{vae_forward.1} parent=1 // pred_check
      _
    $region111: #{vae_forward.1} parent=1 // pred_check_branch
      %148 = sbr.rel (0) target = $region113
    $region112: #{vae_forward.1} parent=1 // pred_region
      _
    $region113: #{vae_forward.1} parent=1 // pred_fallthru
      _
    // Predicated region
    $region114: #{vae_forward.1} parent=1 // pred_check
      _
    $region115: #{vae_forward.1} parent=1 // pred_check_branch
      %150 = sbr.rel (0) target = $region117
    $region116: #{vae_forward.1} parent=1 // pred_region
      _
    $region117: #{vae_forward.1} parent=1 // pred_fallthru
      _
    // Predicated region
    $region118: #{vae_forward.1} parent=1 // pred_check
      _
    $region119: #{vae_forward.1} parent=1 // pred_check_branch
      %152 = sbr.rel (0) target = $region121
    $region120: #{vae_forward.1} parent=1 // pred_region
      _
    $region121: #{vae_forward.1} parent=1 // pred_fallthru
      _
    // Predicated region
    $region122: #{vae_forward.1} parent=1 // pred_check
      _
    $region123: #{vae_forward.1} parent=1 // pred_check_branch
      %154 = sbr.rel (0) target = $region125
    $region124: #{vae_forward.1} parent=1 // pred_region
      _
    $region125: #{vae_forward.1} parent=1 // pred_fallthru
      _
    // Predicated region
    $region126: #{vae_forward.1} parent=1 // pred_check
      _
    $region127: #{vae_forward.1} parent=1 // pred_check_branch
      %156 = sbr.rel (0) target = $region129
    $region128: #{vae_forward.1} parent=1 // pred_region
      _
    $region129: #{vae_forward.1} parent=1 // pred_fallthru
      _
    // Predicated region
    $region130: #{vae_forward.1} parent=1 // pred_check
      _
    $region131: #{vae_forward.1} parent=1 // pred_check_branch
      %158 = sbr.rel (0) target = $region133
    $region132: #{vae_forward.1} parent=1 // pred_region
      _
    $region133: #{vae_forward.1} parent=1 // pred_fallthru
      _
    // Predicated region
    $region134: #{vae_forward.1} parent=1 // pred_check
      _
    $region135: #{vae_forward.1} parent=1 // pred_check_branch
      %160 = sbr.rel (0) target = $region137
    $region136: #{vae_forward.1} parent=1 // pred_region
      _
    $region137: #{vae_forward.1} parent=1 // pred_fallthru
      _
    // Predicated region
    $region138: #{vae_forward.1} parent=1 // pred_check
      _
    $region139: #{vae_forward.1} parent=1 // pred_check_branch
      %162 = sbr.rel (0) target = $region141
    $region140: #{vae_forward.1} parent=1 // pred_region
      _
    $region141: #{vae_forward.1} parent=1 // pred_fallthru
      _
    // Predicated region
    $region142: #{vae_forward.1} parent=1 // pred_check
      _
    $region143: #{vae_forward.1} parent=1 // pred_check_branch
      %164 = sbr.rel (0) target = $region145
    $region144: #{vae_forward.1} parent=1 // pred_region
      _
    $region145: #{vae_forward.1} parent=1 // pred_fallthru
      _
    // Predicated region
    $region146: #{vae_forward.1} parent=1 // pred_check
      _
    $region147: #{vae_forward.1} parent=1 // pred_check_branch
      %166 = sbr.rel (0) target = $region149
    $region148: #{vae_forward.1} parent=1 // pred_region
      _
    $region149: #{vae_forward.1} parent=1 // pred_fallthru
      _
    // Predicated region
    $region150: #{vae_forward.1} parent=1 // pred_check
      _
    $region151: #{vae_forward.1} parent=1 // pred_check_branch
      %168 = sbr.rel (0) target = $region153
    $region152: #{vae_forward.1} parent=1 // pred_region
      _
    $region153: #{vae_forward.1} parent=1 // pred_fallthru
      _
    // Predicated region
    $region154: #{vae_forward.1} parent=1 // pred_check
      _
    $region155: #{vae_forward.1} parent=1 // pred_check_branch
      %170 = sbr.rel (0) target = $region157
    $region156: #{vae_forward.1} parent=1 // pred_region
      _
    $region157: #{vae_forward.1} parent=1 // pred_fallthru
      _
    // Predicated region
    $region158: #{vae_forward.1} parent=1 // pred_check
      _
    $region159: #{vae_forward.1} parent=1 // pred_check_branch
      %172 = sbr.rel (0) target = $region161
    $region160: #{vae_forward.1} parent=1 // pred_region
      _
    $region161: #{vae_forward.1} parent=1 // pred_fallthru
      _
    %v173 = vld [vmem:[%s3] sm:$0x3]
    %v174 = vld [vmem:[%s1] sm:$0xff]
    %v175 = vld [vmem:[%s1 + $0x8] sm:$0xff]
    %v176 = vld [vmem:[%s1 + $0x10] sm:$0xf]
    %v177 = vld [vmem:[%s13] sm:$0x1f]
    %vm178 = vcmask 39936
    %v180 = vsel %vm178, %v173, 0
    %vm182 = vcmask 1044480
    %v184 = vsel %vm182, %v177, 0
    %186 = vmatpush.msra.mxu0 0.0
    %187 = vmatpush.msra.mxu0 0.0
    %188 = vmatpush.msra.mxu0 0.0
    %189 = vmatpush.msra.mxu0 0.0
    %190 = vmatpush.msra.mxu0 0.0
    %191 = vmatpush.msra.mxu0 0.0
    %192 = vmatpush.msra.mxu0 0.0
    %193 = vmatpush.msra.mxu0 0.0
    %194 = vmatpush.msra.mxu0 0.0
    %195 = vmatpush.msra.mxu0 0.0
    %196 = vmatpush.msra.mxu0 0.0
    %197 = vmatpush.msra.mxu0 0.0
    %198 = vmatpush.msra.mxu0 0.0
    %199 = vmatpush.msra.mxu0 0.0
    %200 = vmatpush.msra.mxu0 0.0
    %201 = vmatpush.msra.mxu0 %v184
    %202 = vmatmul.f32.gmra.mxu0 %v180
    %v203 = vpop.f32.mrf.mxu0
    %v204 = vadd.f32 0.0, %v203
    %205 = vdwg.mxu0
    %v206 = vld [vmem:[%s15] sm:$0x3f]
    %v207 = vld [vmem:[%s17] sm:$0x1]
    %v209 = vperm.slane %v207, 0
    %vm211 = vcmask 48128
    %v213 = vsel %vm211, %v174, 0
    %v216 = vsel %vm211, %v175, 0
    %v219 = vsel %vm211, %v176, 0
    %vm221 = vcmask 1045504
    %v223 = vsel %vm221, %v206, 0
    %225 = vmatpush.msra.mxu0 0.0
    %226 = vmatpush.msra.mxu0 0.0
    %227 = vmatpush.msra.mxu0 0.0
    %228 = vmatpush.msra.mxu0 0.0
    %229 = vmatpush.msra.mxu0 0.0
    %230 = vmatpush.msra.mxu0 0.0
    %231 = vmatpush.msra.mxu0 0.0
    %232 = vmatpush.msra.mxu0 0.0
    %233 = vmatpush.msra.mxu0 0.0
    %234 = vmatpush.msra.mxu0 0.0
    %235 = vmatpush.msra.mxu0 0.0
    %236 = vmatpush.msra.mxu0 0.0
    %237 = vmatpush.msra.mxu0 0.0
    %238 = vmatpush.msra.mxu0 0.0
    %239 = vmatpush.msra.mxu0 0.0
    %240 = vmatpush.msra.mxu0 %v223
    %241 = vmatmul.f32.gmra.mxu0 %v213
    %v242 = vpop.f32.mrf.mxu0
    %v243 = vadd.f32 %v209, %v242
    %244 = vmatmul.f32.gmra.mxu0 %v216
    %v245 = vpop.f32.mrf.mxu0
    %v246 = vadd.f32 %v209, %v245
    %247 = vmatmul.f32.gmra.mxu0 %v219
    %v248 = vpop.f32.mrf.mxu0
    %v249 = vadd.f32 %v209, %v248
    %250 = vdwg.mxu0
    %v252 = vrot.slane %v204, 7
    %253 = vrot.lane.b32.xlu0 %v252, 96
    %v254 = vpop.permute.xlu0 %253
    %vm258 = vcmask 1041408
    %v259 = vrot.slane %v243, 6
    %v260 = vrot.slane %v246, 6
    %v261 = vsel %vm258, %v259, %v260
    %v264 = vrot.slane %v204, 5
    %v266 = vrot.slane %v204, 4
    %267 = vrot.lane.b32.xlu0 %v266, 96
    %v268 = vpop.permute.xlu0 %267
    %vm271 = vcmask 1043456
    %v272 = vrot.slane %v246, 4
    %v273 = vrot.slane %v249, 4
    %v274 = vsel %vm271, %v272, %v273
    %vm277 = vcmask 1040384
    %v278 = vsel %vm277, %v204, %v254
    %v279 = vsel %vm258, %v278, %v259
    %v280 = vsel %vm271, %v261, %v264
    %v281 = vsel %vm182, %v280, %v268
    %v282 = vsel %vm221, %v281, %v272
    %v283 = vld [vmem:[%s9] sm:$0xff]
    %v284 = vld [vmem:[%s9 + $0x8] sm:$0xff]
    %v285 = vld [vmem:[%s9 + $0x10] sm:$0xff]
    %v286 = vadd.f32 %v279, %v283
    %v287 = vadd.f32 %v282, %v284
    %v288 = vadd.f32 %v274, %v285
    %v289 = vld [vmem:[%s5] sm:$0x3]
    %v290 = vld [vmem:[%s29] sm:$0xff]
    %v291 = vld [vmem:[%s29 + $0x8] sm:$0xff]
    %v292 = vld [vmem:[%s29 + $0x10] sm:$0xff]
    %v293 = vld [vmem:[%s29 + $0x18] sm:$0xff]
    %v294 = vld [vmem:[%s31] sm:$0x1]
    %v295 = vld [vmem:[%s33] sm:$0xff]
    %v296 = vld [vmem:[%s33 + $0x8] sm:$0xff]
    %v297 = vld [vmem:[%s33 + $0x10] sm:$0xff]
    %v298 = vld [vmem:[%s33 + $0x18] sm:$0xff]
    %v299 = vld [vmem:[%s35] sm:$0x1]
    %v300 = vld [vmem:[%s37] sm:$0xff]
    %v301 = vld [vmem:[%s37 + $0x8] sm:$0xff]
    %v302 = vld [vmem:[%s37 + $0x10] sm:$0xff]
    %v303 = vld [vmem:[%s37 + $0x18] sm:$0xff]
    %v304 = vld [vmem:[%s39] sm:$0x1]
    %v305 = vld [vmem:[%s41] sm:$0xff]
    %v306 = vld [vmem:[%s41 + $0x8] sm:$0xff]
    %v307 = vld [vmem:[%s41 + $0x10] sm:$0xff]
    %v308 = vld [vmem:[%s41 + $0x18] sm:$0xff]
    %v309 = vld [vmem:[%s41 + $0x20] sm:$0xff]
    %v310 = vld [vmem:[%s41 + $0x28] sm:$0xff]
    %v311 = vld [vmem:[%s41 + $0x30] sm:$0xff]
    %v312 = vld [vmem:[%s41 + $0x38] sm:$0xff]
    %v313 = vld [vmem:[%s43] sm:$0x1]
    %v314 = vld [vmem:[%s45] sm:$0x1]
    %v315 = vld [vmem:[%s47] sm:$0x1]
    %v316 = vld [vmem:[%s49] sm:$0x1]
    %v317 = vld [vmem:[%s51] sm:$0x1]
    %v319 = vperm.slane %v294, 0
    %vm321 = vcmask 261120
    %v323 = vsel %vm321, %v286, 0
    %v326 = vsel %vm321, %v287, 0
    %v329 = vsel %vm321, %v288, 0
    %331 = vmatpush.msra.mxu0 0.0
    %332 = vmatpush.msra.mxu0 0.0
    %333 = vmatpush.msra.mxu0 0.0
    %334 = vmatpush.msra.mxu0 0.0
    %335 = vmatpush.msra.mxu0 0.0
    %336 = vmatpush.msra.mxu0 0.0
    %337 = vmatpush.msra.mxu0 0.0
    %338 = vmatpush.msra.mxu0 0.0
    %339 = vmatpush.msra.mxu0 0.0
    %340 = vmatpush.msra.mxu0 0.0
    %341 = vmatpush.msra.mxu0 0.0
    %342 = vmatpush.msra.mxu0 0.0
    %343 = vmatpush.msra.mxu0 %v293
    %344 = vmatpush.msra.mxu0 %v292
    %345 = vmatpush.msra.mxu0 %v291
    %346 = vmatpush.msra.mxu0 %v290
    %347 = vmatmul.f32.gmra.mxu0 %v323
    %v348 = vpop.f32.mrf.mxu0
    %v349 = vadd.f32 %v319, %v348
    %350 = vmatmul.f32.gmra.mxu0 %v326
    %v351 = vpop.f32.mrf.mxu0
    %v352 = vadd.f32 %v319, %v351
    %353 = vmatmul.f32.gmra.mxu0 %v329
    %v354 = vpop.f32.mrf.mxu0
    %v355 = vadd.f32 %v319, %v354
    %356 = vdwg.mxu0
    %359 = vrot.lane.b32.xlu0 %v349, 96
    %v360 = vpop.permute.xlu0 %359
    %361 = vrot.lane.b32.xlu0 %v352, 96
    %v362 = vpop.permute.xlu0 %361
    %vm363 = vcmask 130048
    %v364 = vsel %vm363, %v349, 0
    %v366 = vsel %vm363, %v352, 0
    %v368 = vsel %vm363, %v360, 0
    %v370 = vsel %vm363, %v362, 0
    %372 = vmatpush.xpose.msra.mxu0 0.0
    %373 = vmatpush.xpose.msra.mxu0 0.0
    %374 = vmatpush.xpose.msra.mxu0 0.0
    %375 = vmatpush.xpose.msra.mxu0 0.0
    %376 = vmatpush.xpose.msra.mxu0 0.0
    %377 = vmatpush.xpose.msra.mxu0 0.0
    %378 = vmatpush.xpose.msra.mxu0 0.0
    %379 = vmatpush.xpose.msra.mxu0 0.0
    %380 = vmatpush.xpose.msra.mxu0 0.0
    %381 = vmatpush.xpose.msra.mxu0 0.0
    %382 = vmatpush.xpose.msra.mxu0 0.0
    %383 = vmatpush.xpose.msra.mxu0 0.0
    %384 = vmatpush.xpose.msra.mxu0 0.0
    %385 = vmatpush.xpose.msra.mxu0 0.0
    %386 = vmatpush.xpose.msra.mxu0 %v370
    %387 = vmatpush.xpose.msra.mxu0 %v368
    %388 = vmatmul.f32.gmra.mxu0 %v364
    %v389 = vpop.f32.mrf.mxu0
    %v390 = vadd.f32 0.0, %v389
    %391 = vmatmul.f32.gmra.mxu0 %v366
    %v392 = vpop.f32.mrf.mxu0
    %v393 = vadd.f32 0.0, %v392
    %394 = vdwg.mxu0
    %v395 = vmul.f32 %v390, 0.25
    %v396 = vmul.f32 %v393, 0.25
    %v397 = vperm.slane %v289, 0
    %v398 = vadd.f32 %v395, %v397
    %v399 = vadd.f32 %v396, %v397
    %vm400 = vcmask 97280
    %v401 = vsel %vm400, %v398, -inf
    %402 = vmax.xlane.f32.xlu0 %v401
    %v403 = vpop.xlane.xlu0 %402
    %vm404 = vcmask 93184
    %v405 = vsel %vm404, %v399, -inf
    %406 = vmax.xlane.f32.xlu0 %v405
    %v407 = vpop.xlane.xlu0 %406
    %v408 = vsub.f32 %v398, %v403
    %v409 = vsub.f32 %v399, %v407
    %v410 = vmul.f32 %v408, 1.442695
    %v411 = vpow.pop %v410
    %v412 = vmul.f32 %v409, 1.442695
    %v413 = vpow.pop %v412
    %v414 = vsel %vm400, %v411, 0.0
    %415 = vadd.xlane.f32.xlu0 %v414
    %v416 = vpop.xlane.xlu0 %415
    %v417 = vsel %vm404, %v413, 0.0
    %418 = vadd.xlane.f32.xlu0 %v417
    %v419 = vpop.xlane.xlu0 %418
    %420 = vrot.lane.b32.xlu0 %v349, 64
    %v421 = vpop.permute.xlu0 %420
    %422 = vrot.lane.b32.xlu0 %v352, 64
    %v423 = vpop.permute.xlu0 %422
    %v426 = vsel %vm400, %v411, 0
    %v429 = vsel %vm400, %v413, 0
    %v431 = vsel %vm271, %v423, 0
    %433 = vmatpush.msra.mxu0 0.0
    %434 = vmatpush.msra.mxu0 0.0
    %435 = vmatpush.msra.mxu0 0.0
    %436 = vmatpush.msra.mxu0 0.0
    %437 = vmatpush.msra.mxu0 0.0
    %438 = vmatpush.msra.mxu0 0.0
    %439 = vmatpush.msra.mxu0 0.0
    %440 = vmatpush.msra.mxu0 0.0
    %441 = vmatpush.msra.mxu0 0.0
    %442 = vmatpush.msra.mxu0 0.0
    %443 = vmatpush.msra.mxu0 0.0
    %444 = vmatpush.msra.mxu0 0.0
    %445 = vmatpush.msra.mxu0 0.0
    %446 = vmatpush.msra.mxu0 0.0
    %447 = vmatpush.msra.mxu0 %v431
    %448 = vmatpush.msra.mxu0 %v421
    %449 = vmatmul.f32.gmra.mxu0 %v426
    %v450 = vpop.f32.mrf.mxu0
    %v451 = vadd.f32 0.0, %v450
    %452 = vmatmul.f32.gmra.mxu0 %v429
    %v453 = vpop.f32.mrf.mxu0
    %v454 = vadd.f32 0.0, %v453
    %455 = vdwg.mxu0
    %v456 = vrcp.pop %v416
    %v457 = vrcp.pop %v419
    %v458 = vmul.f32 %v451, %v456
    %v459 = vmul.f32 %v454, %v457
    %460 = vrot.lane.b32.xlu0 %v349, 112
    %v461 = vpop.permute.xlu0 %460
    %462 = vrot.lane.b32.xlu0 %v352, 112
    %v463 = vpop.permute.xlu0 %462
    %464 = vrot.lane.b32.xlu0 %v349, 80
    %v465 = vpop.permute.xlu0 %464
    %466 = vrot.lane.b32.xlu0 %v352, 80
    %v467 = vpop.permute.xlu0 %466
    %v468 = vsel %vm363, %v461, 0
    %v470 = vsel %vm363, %v463, 0
    %v472 = vsel %vm363, %v465, 0
    %v474 = vsel %vm363, %v467, 0
    %476 = vmatpush.xpose.msra.mxu0 0.0
    %477 = vmatpush.xpose.msra.mxu0 0.0
    %478 = vmatpush.xpose.msra.mxu0 0.0
    %479 = vmatpush.xpose.msra.mxu0 0.0
    %480 = vmatpush.xpose.msra.mxu0 0.0
    %481 = vmatpush.xpose.msra.mxu0 0.0
    %482 = vmatpush.xpose.msra.mxu0 0.0
    %483 = vmatpush.xpose.msra.mxu0 0.0
    %484 = vmatpush.xpose.msra.mxu0 0.0
    %485 = vmatpush.xpose.msra.mxu0 0.0
    %486 = vmatpush.xpose.msra.mxu0 0.0
    %487 = vmatpush.xpose.msra.mxu0 0.0
    %488 = vmatpush.xpose.msra.mxu0 0.0
    %489 = vmatpush.xpose.msra.mxu0 0.0
    %490 = vmatpush.xpose.msra.mxu0 %v474
    %491 = vmatpush.xpose.msra.mxu0 %v472
    %492 = vmatmul.f32.gmra.mxu0 %v468
    %v493 = vpop.f32.mrf.mxu0
    %v494 = vadd.f32 0.0, %v493
    %495 = vmatmul.f32.gmra.mxu0 %v470
    %v496 = vpop.f32.mrf.mxu0
    %v497 = vadd.f32 0.0, %v496
    %498 = vdwg.mxu0
    %v499 = vmul.f32 %v494, 0.25
    %v500 = vmul.f32 %v497, 0.25
    %v501 = vadd.f32 %v499, %v397
    %v502 = vadd.f32 %v500, %v397
    %v503 = vsel %vm400, %v501, -inf
    %504 = vmax.xlane.f32.xlu0 %v503
    %v505 = vpop.xlane.xlu0 %504
    %v506 = vsel %vm404, %v502, -inf
    %507 = vmax.xlane.f32.xlu0 %v506
    %v508 = vpop.xlane.xlu0 %507
    %v509 = vsub.f32 %v501, %v505
    %v510 = vsub.f32 %v502, %v508
    %v511 = vmul.f32 %v509, 1.442695
    %v512 = vpow.pop %v511
    %v513 = vmul.f32 %v510, 1.442695
    %v514 = vpow.pop %v513
    %v515 = vsel %vm400, %v512, 0.0
    %516 = vadd.xlane.f32.xlu0 %v515
    %v517 = vpop.xlane.xlu0 %516
    %v518 = vsel %vm404, %v514, 0.0
    %519 = vadd.xlane.f32.xlu0 %v518
    %v520 = vpop.xlane.xlu0 %519
    %521 = vrot.lane.b32.xlu0 %v349, 48
    %v522 = vpop.permute.xlu0 %521
    %523 = vrot.lane.b32.xlu0 %v352, 48
    %v524 = vpop.permute.xlu0 %523
    %v527 = vsel %vm400, %v512, 0
    %v530 = vsel %vm400, %v514, 0
    %v532 = vsel %vm271, %v524, 0
    %534 = vmatpush.msra.mxu0 0.0
    %535 = vmatpush.msra.mxu0 0.0
    %536 = vmatpush.msra.mxu0 0.0
    %537 = vmatpush.msra.mxu0 0.0
    %538 = vmatpush.msra.mxu0 0.0
    %539 = vmatpush.msra.mxu0 0.0
    %540 = vmatpush.msra.mxu0 0.0
    %541 = vmatpush.msra.mxu0 0.0
    %542 = vmatpush.msra.mxu0 0.0
    %543 = vmatpush.msra.mxu0 0.0
    %544 = vmatpush.msra.mxu0 0.0
    %545 = vmatpush.msra.mxu0 0.0
    %546 = vmatpush.msra.mxu0 0.0
    %547 = vmatpush.msra.mxu0 0.0
    %548 = vmatpush.msra.mxu0 %v532
    %549 = vmatpush.msra.mxu0 %v522
    %550 = vmatmul.f32.gmra.mxu0 %v527
    %v551 = vpop.f32.mrf.mxu0
    %v552 = vadd.f32 0.0, %v551
    %553 = vmatmul.f32.gmra.mxu0 %v530
    %v554 = vpop.f32.mrf.mxu0
    %v555 = vadd.f32 0.0, %v554
    %556 = vdwg.mxu0
    %v557 = vrcp.pop %v517
    %v558 = vrcp.pop %v520
    %v559 = vmul.f32 %v552, %v557
    %v560 = vmul.f32 %v555, %v558
    %563 = vrot.lane.b32.xlu0 %v559, 16
    %v564 = vpop.permute.xlu0 %563
    %565 = vrot.lane.b32.xlu0 %v560, 16
    %v566 = vpop.permute.xlu0 %565
    %v569 = vsel %vm363, %v458, %v564
    %v570 = vsel %vm363, %v459, %v566
    %v572 = vrot.slane %v352, 4
    %v573 = vrot.slane %v355, 4
    %v574 = vsel %vm271, %v572, %v573
    %575 = vrot.lane.b32.xlu0 %v574, 96
    %v576 = vpop.permute.xlu0 %575
    %577 = vrot.lane.b32.xlu0 %v573, 96
    %v578 = vpop.permute.xlu0 %577
    %v579 = vsel %vm363, %v574, 0
    %v581 = vsel %vm363, %v573, 0
    %v583 = vsel %vm363, %v576, 0
    %v585 = vsel %vm363, %v578, 0
    %587 = vmatpush.xpose.msra.mxu0 0.0
    %588 = vmatpush.xpose.msra.mxu0 0.0
    %589 = vmatpush.xpose.msra.mxu0 0.0
    %590 = vmatpush.xpose.msra.mxu0 0.0
    %591 = vmatpush.xpose.msra.mxu0 0.0
    %592 = vmatpush.xpose.msra.mxu0 0.0
    %593 = vmatpush.xpose.msra.mxu0 0.0
    %594 = vmatpush.xpose.msra.mxu0 0.0
    %595 = vmatpush.xpose.msra.mxu0 0.0
    %596 = vmatpush.xpose.msra.mxu0 0.0
    %597 = vmatpush.xpose.msra.mxu0 0.0
    %598 = vmatpush.xpose.msra.mxu0 0.0
    %599 = vmatpush.xpose.msra.mxu0 0.0
    %600 = vmatpush.xpose.msra.mxu0 0.0
    %601 = vmatpush.xpose.msra.mxu0 %v585
    %602 = vmatpush.xpose.msra.mxu0 %v583
    %603 = vmatmul.f32.gmra.mxu0 %v579
    %v604 = vpop.f32.mrf.mxu0
    %v605 = vadd.f32 0.0, %v604
    %606 = vmatmul.f32.gmra.mxu0 %v581
    %v607 = vpop.f32.mrf.mxu0
    %v608 = vadd.f32 0.0, %v607
    %609 = vdwg.mxu0
    %v610 = vmul.f32 %v605, 0.25
    %v611 = vmul.f32 %v608, 0.25
    %v612 = vperm.slane %v289, 1
    %v613 = vadd.f32 %v610, %v612
    %v614 = vadd.f32 %v611, %v612
    %v615 = vsel %vm400, %v613, -inf
    %616 = vmax.xlane.f32.xlu0 %v615
    %v617 = vpop.xlane.xlu0 %616
    %v618 = vsel %vm404, %v614, -inf
    %619 = vmax.xlane.f32.xlu0 %v618
    %v620 = vpop.xlane.xlu0 %619
    %v621 = vsub.f32 %v613, %v617
    %v622 = vsub.f32 %v614, %v620
    %v623 = vmul.f32 %v621, 1.442695
    %v624 = vpow.pop %v623
    %v625 = vmul.f32 %v622, 1.442695
    %v626 = vpow.pop %v625
    %v627 = vsel %vm400, %v624, 0.0
    %628 = vadd.xlane.f32.xlu0 %v627
    %v629 = vpop.xlane.xlu0 %628
    %v630 = vsel %vm404, %v626, 0.0
    %631 = vadd.xlane.f32.xlu0 %v630
    %v632 = vpop.xlane.xlu0 %631
    %633 = vrot.lane.b32.xlu0 %v574, 64
    %v634 = vpop.permute.xlu0 %633
    %635 = vrot.lane.b32.xlu0 %v573, 64
    %v636 = vpop.permute.xlu0 %635
    %v639 = vsel %vm400, %v624, 0
    %v642 = vsel %vm400, %v626, 0
    %v644 = vsel %vm271, %v636, 0
    %646 = vmatpush.msra.mxu0 0.0
    %647 = vmatpush.msra.mxu0 0.0
    %648 = vmatpush.msra.mxu0 0.0
    %649 = vmatpush.msra.mxu0 0.0
    %650 = vmatpush.msra.mxu0 0.0
    %651 = vmatpush.msra.mxu0 0.0
    %652 = vmatpush.msra.mxu0 0.0
    %653 = vmatpush.msra.mxu0 0.0
    %654 = vmatpush.msra.mxu0 0.0
    %655 = vmatpush.msra.mxu0 0.0
    %656 = vmatpush.msra.mxu0 0.0
    %657 = vmatpush.msra.mxu0 0.0
    %658 = vmatpush.msra.mxu0 0.0
    %659 = vmatpush.msra.mxu0 0.0
    %660 = vmatpush.msra.mxu0 %v644
    %661 = vmatpush.msra.mxu0 %v634
    %662 = vmatmul.f32.gmra.mxu0 %v639
    %v663 = vpop.f32.mrf.mxu0
    %v664 = vadd.f32 0.0, %v663
    %665 = vmatmul.f32.gmra.mxu0 %v642
    %v666 = vpop.f32.mrf.mxu0
    %v667 = vadd.f32 0.0, %v666
    %668 = vdwg.mxu0
    %v669 = vrcp.pop %v629
    %v670 = vrcp.pop %v632
    %v671 = vmul.f32 %v664, %v669
    %v672 = vmul.f32 %v667, %v670
    %673 = vrot.lane.b32.xlu0 %v574, 112
    %v674 = vpop.permute.xlu0 %673
    %675 = vrot.lane.b32.xlu0 %v573, 112
    %v676 = vpop.permute.xlu0 %675
    %677 = vrot.lane.b32.xlu0 %v574, 80
    %v678 = vpop.permute.xlu0 %677
    %679 = vrot.lane.b32.xlu0 %v573, 80
    %v680 = vpop.permute.xlu0 %679
    %v681 = vsel %vm363, %v674, 0
    %v683 = vsel %vm363, %v676, 0
    %v685 = vsel %vm363, %v678, 0
    %v687 = vsel %vm363, %v680, 0
    %689 = vmatpush.xpose.msra.mxu0 0.0
    %690 = vmatpush.xpose.msra.mxu0 0.0
    %691 = vmatpush.xpose.msra.mxu0 0.0
    %692 = vmatpush.xpose.msra.mxu0 0.0
    %693 = vmatpush.xpose.msra.mxu0 0.0
    %694 = vmatpush.xpose.msra.mxu0 0.0
    %695 = vmatpush.xpose.msra.mxu0 0.0
    %696 = vmatpush.xpose.msra.mxu0 0.0
    %697 = vmatpush.xpose.msra.mxu0 0.0
    %698 = vmatpush.xpose.msra.mxu0 0.0
    %699 = vmatpush.xpose.msra.mxu0 0.0
    %700 = vmatpush.xpose.msra.mxu0 0.0
    %701 = vmatpush.xpose.msra.mxu0 0.0
    %702 = vmatpush.xpose.msra.mxu0 0.0
    %703 = vmatpush.xpose.msra.mxu0 %v687
    %704 = vmatpush.xpose.msra.mxu0 %v685
    %705 = vmatmul.f32.gmra.mxu0 %v681
    %v706 = vpop.f32.mrf.mxu0
    %v707 = vadd.f32 0.0, %v706
    %708 = vmatmul.f32.gmra.mxu0 %v683
    %v709 = vpop.f32.mrf.mxu0
    %v710 = vadd.f32 0.0, %v709
    %711 = vdwg.mxu0
    %v712 = vmul.f32 %v707, 0.25
    %v713 = vmul.f32 %v710, 0.25
    %v714 = vadd.f32 %v712, %v612
    %v715 = vadd.f32 %v713, %v612
    %v716 = vsel %vm400, %v714, -inf
    %717 = vmax.xlane.f32.xlu0 %v716
    %v718 = vpop.xlane.xlu0 %717
    %v719 = vsel %vm404, %v715, -inf
    %720 = vmax.xlane.f32.xlu0 %v719
    %v721 = vpop.xlane.xlu0 %720
    %v722 = vsub.f32 %v714, %v718
    %v723 = vsub.f32 %v715, %v721
    %v724 = vmul.f32 %v722, 1.442695
    %v725 = vpow.pop %v724
    %v726 = vmul.f32 %v723, 1.442695
    %v727 = vpow.pop %v726
    %v728 = vsel %vm400, %v725, 0.0
    %729 = vadd.xlane.f32.xlu0 %v728
    %v730 = vpop.xlane.xlu0 %729
    %v731 = vsel %vm404, %v727, 0.0
    %732 = vadd.xlane.f32.xlu0 %v731
    %v733 = vpop.xlane.xlu0 %732
    %734 = vrot.lane.b32.xlu0 %v574, 48
    %v735 = vpop.permute.xlu0 %734
    %736 = vrot.lane.b32.xlu0 %v573, 48
    %v737 = vpop.permute.xlu0 %736
    %v740 = vsel %vm400, %v725, 0
    %v743 = vsel %vm400, %v727, 0
    %v745 = vsel %vm271, %v737, 0
    %747 = vmatpush.msra.mxu0 0.0
    %748 = vmatpush.msra.mxu0 0.0
    %749 = vmatpush.msra.mxu0 0.0
    %750 = vmatpush.msra.mxu0 0.0
    %751 = vmatpush.msra.mxu0 0.0
    %752 = vmatpush.msra.mxu0 0.0
    %753 = vmatpush.msra.mxu0 0.0
    %754 = vmatpush.msra.mxu0 0.0
    %755 = vmatpush.msra.mxu0 0.0
    %756 = vmatpush.msra.mxu0 0.0
    %757 = vmatpush.msra.mxu0 0.0
    %758 = vmatpush.msra.mxu0 0.0
    %759 = vmatpush.msra.mxu0 0.0
    %760 = vmatpush.msra.mxu0 0.0
    %761 = vmatpush.msra.mxu0 %v745
    %762 = vmatpush.msra.mxu0 %v735
    %763 = vmatmul.f32.gmra.mxu0 %v740
    %v764 = vpop.f32.mrf.mxu0
    %v765 = vadd.f32 0.0, %v764
    %766 = vmatmul.f32.gmra.mxu0 %v743
    %v767 = vpop.f32.mrf.mxu0
    %v768 = vadd.f32 0.0, %v767
    %769 = vdwg.mxu0
    %v770 = vrcp.pop %v730
    %v771 = vrcp.pop %v733
    %v772 = vmul.f32 %v765, %v770
    %v773 = vmul.f32 %v768, %v771
    %776 = vrot.lane.b32.xlu0 %v772, 16
    %v777 = vpop.permute.xlu0 %776
    %778 = vrot.lane.b32.xlu0 %v773, 16
    %v779 = vpop.permute.xlu0 %778
    %v782 = vsel %vm363, %v671, %v777
    %v783 = vsel %vm363, %v672, %v779
    %v786 = vrot.slane %v782, 4
    %v787 = vrot.slane %v783, 4
    %v788 = vsel %vm271, %v786, %v787
    %v790 = vsel %vm271, %v570, %v786
    %v792 = vperm.slane %v299, 0
    %v795 = vsel %vm321, %v569, 0
    %v798 = vsel %vm321, %v790, 0
    %v800 = vsel %vm321, %v788, 0
    %802 = vmatpush.msra.mxu0 0.0
    %803 = vmatpush.msra.mxu0 0.0
    %804 = vmatpush.msra.mxu0 0.0
    %805 = vmatpush.msra.mxu0 0.0
    %806 = vmatpush.msra.mxu0 0.0
    %807 = vmatpush.msra.mxu0 0.0
    %808 = vmatpush.msra.mxu0 0.0
    %809 = vmatpush.msra.mxu0 0.0
    %810 = vmatpush.msra.mxu0 0.0
    %811 = vmatpush.msra.mxu0 0.0
    %812 = vmatpush.msra.mxu0 0.0
    %813 = vmatpush.msra.mxu0 0.0
    %814 = vmatpush.msra.mxu0 %v298
    %815 = vmatpush.msra.mxu0 %v297
    %816 = vmatpush.msra.mxu0 %v296
    %817 = vmatpush.msra.mxu0 %v295
    %818 = vmatmul.f32.gmra.mxu0 %v795
    %v819 = vpop.f32.mrf.mxu0
    %v820 = vadd.f32 %v792, %v819
    %821 = vmatmul.f32.gmra.mxu0 %v798
    %v822 = vpop.f32.mrf.mxu0
    %v823 = vadd.f32 %v792, %v822
    %824 = vmatmul.f32.gmra.mxu0 %v800
    %v825 = vpop.f32.mrf.mxu0
    %v826 = vadd.f32 %v792, %v825
    %827 = vdwg.mxu0
    %v828 = vadd.f32 %v286, %v820
    %v829 = vadd.f32 %v287, %v823
    %v830 = vadd.f32 %v288, %v826
    %v831 = vsel %vm321, %v828, 0.0
    %832 = vadd.xlane.f32.xlu0 %v831
    %v833 = vpop.xlane.xlu0 %832
    %v834 = vsel %vm321, %v829, 0.0
    %835 = vadd.xlane.f32.xlu0 %v834
    %v836 = vpop.xlane.xlu0 %835
    %v837 = vsel %vm321, %v830, 0.0
    %838 = vadd.xlane.f32.xlu0 %v837
    %v839 = vpop.xlane.xlu0 %838
    %v840 = vrcp.pop 32.0
    %v841 = vmul.f32 32.0, %v840
    %v842 = vsub.f32 1.0, %v841
    %v843 = vmul.f32 %v840, %v842
    %v844 = vadd.f32 %v840, %v843
    %vm845 = vweird.f32 %v840
    %v846 = vsel %vm845, %v840, %v844
    %v847 = vmul.f32 %v833, %v846
    %v848 = vmul.f32 %v836, %v846
    %v849 = vmul.f32 %v839, %v846
    %v850 = vsub.f32 %v828, %v847
    %v851 = vsub.f32 %v829, %v848
    %v852 = vsub.f32 %v830, %v849
    %v853 = vmul.f32 %v850, %v850
    %v854 = vmul.f32 %v851, %v851
    %v855 = vmul.f32 %v852, %v852
    %v856 = vsel %vm321, %v853, 0.0
    %857 = vadd.xlane.f32.xlu0 %v856
    %v858 = vpop.xlane.xlu0 %857
    %v859 = vsel %vm321, %v854, 0.0
    %860 = vadd.xlane.f32.xlu0 %v859
    %v861 = vpop.xlane.xlu0 %860
    %v862 = vsel %vm321, %v855, 0.0
    %863 = vadd.xlane.f32.xlu0 %v862
    %v864 = vpop.xlane.xlu0 %863
    %v865 = vmul.f32 %v858, %v846
    %v866 = vmul.f32 %v861, %v846
    %v867 = vmul.f32 %v864, %v846
    %v868 = vadd.f32 %v865, 1e-05
    %v869 = vadd.f32 %v866, 1e-05
    %v870 = vadd.f32 %v867, 1e-05
    %v871 = vrsqrt.pop %v868
    %v872 = vmul.f32 %v871, %v868
    %v873 = vmul.f32 %v872, %v871
    %v874 = vmul.f32 0.5, %v873
    %v875 = vsub.f32 1.5, %v874
    %v876 = vmul.f32 %v871, %v875
    %vm877 = vweird.f32 %v868
    %vm878 = vweird.f32 %v871
    %vm879 = vmor %vm877, %vm878
    %v880 = vsel %vm879, %v871, %v876
    %v881 = vrsqrt.pop %v869
    %v882 = vmul.f32 %v881, %v869
    %v883 = vmul.f32 %v882, %v881
    %v884 = vmul.f32 0.5, %v883
    %v885 = vsub.f32 1.5, %v884
    %v886 = vmul.f32 %v881, %v885
    %vm887 = vweird.f32 %v869
    %vm888 = vweird.f32 %v881
    %vm889 = vmor %vm887, %vm888
    %v890 = vsel %vm889, %v881, %v886
    %v891 = vrsqrt.pop %v870
    %v892 = vmul.f32 %v891, %v870
    %v893 = vmul.f32 %v892, %v891
    %v894 = vmul.f32 0.5, %v893
    %v895 = vsub.f32 1.5, %v894
    %v896 = vmul.f32 %v891, %v895
    %vm897 = vweird.f32 %v870
    %vm898 = vweird.f32 %v891
    %vm899 = vmor %vm897, %vm898
    %v900 = vsel %vm899, %v891, %v896
    %v901 = vmul.f32 %v850, %v880
    %v902 = vmul.f32 %v851, %v890
    %v903 = vmul.f32 %v852, %v900
    %v905 = vperm.slane %v314, 0
    %v907 = vmul.f32 %v901, %v905
    %v908 = vmul.f32 %v902, %v905
    %v909 = vmul.f32 %v903, %v905
    %v911 = vperm.slane %v315, 0
    %v913 = vadd.f32 %v907, %v911
    %v914 = vadd.f32 %v908, %v911
    %v915 = vadd.f32 %v909, %v911
    %v917 = vperm.slane %v304, 0
    %v920 = vsel %vm321, %v913, 0
    %v923 = vsel %vm321, %v914, 0
    %v926 = vsel %vm321, %v915, 0
    %928 = vmatpush.msra.mxu0 0.0
    %929 = vmatpush.msra.mxu0 0.0
    %930 = vmatpush.msra.mxu0 0.0
    %931 = vmatpush.msra.mxu0 0.0
    %932 = vmatpush.msra.mxu0 0.0
    %933 = vmatpush.msra.mxu0 0.0
    %934 = vmatpush.msra.mxu0 0.0
    %935 = vmatpush.msra.mxu0 0.0
    %936 = vmatpush.msra.mxu0 0.0
    %937 = vmatpush.msra.mxu0 0.0
    %938 = vmatpush.msra.mxu0 0.0
    %939 = vmatpush.msra.mxu0 0.0
    %940 = vmatpush.msra.mxu0 %v303
    %941 = vmatpush.msra.mxu0 %v302
    %942 = vmatpush.msra.mxu0 %v301
    %943 = vmatpush.msra.mxu0 %v300
    %944 = vmatmul.f32.gmra.mxu0 %v920
    %v945 = vpop.f32.mrf.mxu0
    %v946 = vadd.f32 %v917, %v945
    %947 = vmatmul.f32.gmra.mxu0 %v923
    %v948 = vpop.f32.mrf.mxu0
    %v949 = vadd.f32 %v917, %v948
    %950 = vmatmul.f32.gmra.mxu0 %v926
    %v951 = vpop.f32.mrf.mxu0
    %v952 = vadd.f32 %v917, %v951
    %953 = vdwg.mxu0
    %v954 = vmul.f32 %v946, 0.5
    %v955 = vmul.f32 %v949, 0.5
    %v956 = vmul.f32 %v952, 0.5
    %v957 = vmul.f32 %v946, 0.044715
    %v958 = vmul.f32 %v949, 0.044715
    %v959 = vmul.f32 %v952, 0.044715
    %v960 = vmul.f32 %v957, %v946
    %v961 = vmul.f32 %v958, %v949
    %v962 = vmul.f32 %v959, %v952
    %v963 = vmul.f32 %v960, %v946
    %v964 = vmul.f32 %v961, %v949
    %v965 = vmul.f32 %v962, %v952
    %v966 = vadd.f32 %v946, %v963
    %v967 = vadd.f32 %v949, %v964
    %v968 = vadd.f32 %v952, %v965
    %v969 = vmul.f32 %v966, 0.7978846
    %v970 = vmul.f32 %v967, 0.7978846
    %v971 = vmul.f32 %v968, 0.7978846
    %v972 = vtanh.pop %v969
    %v973 = vtanh.pop %v970
    %v974 = vtanh.pop %v971
    %v975 = vadd.f32 %v972, 1.0
    %v976 = vadd.f32 %v973, 1.0
    %v977 = vadd.f32 %v974, 1.0
    %v978 = vmul.f32 %v954, %v975
    %v979 = vmul.f32 %v955, %v976
    %v980 = vmul.f32 %v956, %v977
    %v982 = vperm.slane %v313, 0
    %vm984 = vcmask 523264
    %v986 = vsel %vm984, %v978, 0
    %v989 = vsel %vm984, %v979, 0
    %v992 = vsel %vm984, %v980, 0
    %994 = vmatpush.msra.mxu0 0.0
    %995 = vmatpush.msra.mxu0 0.0
    %996 = vmatpush.msra.mxu0 0.0
    %997 = vmatpush.msra.mxu0 0.0
    %998 = vmatpush.msra.mxu0 0.0
    %999 = vmatpush.msra.mxu0 0.0
    %1000 = vmatpush.msra.mxu0 0.0
    %1001 = vmatpush.msra.mxu0 0.0
    %1002 = vmatpush.msra.mxu0 %v312
    %1003 = vmatpush.msra.mxu0 %v311
    %1004 = vmatpush.msra.mxu0 %v310
    %1005 = vmatpush.msra.mxu0 %v309
    %1006 = vmatpush.msra.mxu0 %v308
    %1007 = vmatpush.msra.mxu0 %v307
    %1008 = vmatpush.msra.mxu0 %v306
    %1009 = vmatpush.msra.mxu0 %v305
    %1010 = vmatmul.f32.gmra.mxu0 %v986
    %v1011 = vpop.f32.mrf.mxu0
    %v1012 = vadd.f32 %v982, %v1011
    %1013 = vmatmul.f32.gmra.mxu0 %v989
    %v1014 = vpop.f32.mrf.mxu0
    %v1015 = vadd.f32 %v982, %v1014
    %1016 = vmatmul.f32.gmra.mxu0 %v992
    %v1017 = vpop.f32.mrf.mxu0
    %v1018 = vadd.f32 %v982, %v1017
    %1019 = vdwg.mxu0
    %v1020 = vadd.f32 %v913, %v1012
    %v1021 = vadd.f32 %v914, %v1015
    %v1022 = vadd.f32 %v915, %v1018
    %v1023 = vsel %vm321, %v1020, 0.0
    %1024 = vadd.xlane.f32.xlu0 %v1023
    %v1025 = vpop.xlane.xlu0 %1024
    %v1026 = vsel %vm321, %v1021, 0.0
    %1027 = vadd.xlane.f32.xlu0 %v1026
    %v1028 = vpop.xlane.xlu0 %1027
    %v1029 = vsel %vm321, %v1022, 0.0
    %1030 = vadd.xlane.f32.xlu0 %v1029
    %v1031 = vpop.xlane.xlu0 %1030
    %v1032 = vmul.f32 %v1025, %v846
    %v1033 = vmul.f32 %v1028, %v846
    %v1034 = vmul.f32 %v1031, %v846
    %v1035 = vsub.f32 %v1020, %v1032
    %v1036 = vsub.f32 %v1021, %v1033
    %v1037 = vsub.f32 %v1022, %v1034
    %v1038 = vmul.f32 %v1035, %v1035
    %v1039 = vmul.f32 %v1036, %v1036
    %v1040 = vmul.f32 %v1037, %v1037
    %v1041 = vsel %vm321, %v1038, 0.0
    %1042 = vadd.xlane.f32.xlu0 %v1041
    %v1043 = vpop.xlane.xlu0 %1042
    %v1044 = vsel %vm321, %v1039, 0.0
    %1045 = vadd.xlane.f32.xlu0 %v1044
    %v1046 = vpop.xlane.xlu0 %1045
    %v1047 = vsel %vm321, %v1040, 0.0
    %1048 = vadd.xlane.f32.xlu0 %v1047
    %v1049 = vpop.xlane.xlu0 %1048
    %v1050 = vmul.f32 %v1043, %v846
    %v1051 = vmul.f32 %v1046, %v846
    %v1052 = vmul.f32 %v1049, %v846
    %v1053 = vadd.f32 %v1050, 1e-05
    %v1054 = vadd.f32 %v1051, 1e-05
    %v1055 = vadd.f32 %v1052, 1e-05
    %v1056 = vrsqrt.pop %v1053
    %v1057 = vmul.f32 %v1056, %v1053
    %v1058 = vmul.f32 %v1057, %v1056
    %v1059 = vmul.f32 0.5, %v1058
    %v1060 = vsub.f32 1.5, %v1059
    %v1061 = vmul.f32 %v1056, %v1060
    %vm1062 = vweird.f32 %v1053
    %vm1063 = vweird.f32 %v1056
    %vm1064 = vmor %vm1062, %vm1063
    %v1065 = vsel %vm1064, %v1056, %v1061
    %v1066 = vrsqrt.pop %v1054
    %v1067 = vmul.f32 %v1066, %v1054
    %v1068 = vmul.f32 %v1067, %v1066
    %v1069 = vmul.f32 0.5, %v1068
    %v1070 = vsub.f32 1.5, %v1069
    %v1071 = vmul.f32 %v1066, %v1070
    %vm1072 = vweird.f32 %v1054
    %vm1073 = vweird.f32 %v1066
    %vm1074 = vmor %vm1072, %vm1073
    %v1075 = vsel %vm1074, %v1066, %v1071
    %v1076 = vrsqrt.pop %v1055
    %v1077 = vmul.f32 %v1076, %v1055
    %v1078 = vmul.f32 %v1077, %v1076
    %v1079 = vmul.f32 0.5, %v1078
    %v1080 = vsub.f32 1.5, %v1079
    %v1081 = vmul.f32 %v1076, %v1080
    %vm1082 = vweird.f32 %v1055
    %vm1083 = vweird.f32 %v1076
    %vm1084 = vmor %vm1082, %vm1083
    %v1085 = vsel %vm1084, %v1076, %v1081
    %v1086 = vmul.f32 %v1035, %v1065
    %v1087 = vmul.f32 %v1036, %v1075
    %v1088 = vmul.f32 %v1037, %v1085
    %v1090 = vperm.slane %v316, 0
    %v1092 = vmul.f32 %v1086, %v1090
    %v1093 = vmul.f32 %v1087, %v1090
    %v1094 = vmul.f32 %v1088, %v1090
    %v1096 = vperm.slane %v317, 0
    %v1098 = vadd.f32 %v1092, %v1096
    %v1099 = vadd.f32 %v1093, %v1096
    %v1100 = vadd.f32 %v1094, %v1096
    %s1101 = scalar_lea.vmem %s29, 32
    %v1102 = vld [vmem:[%s1101] sm:$0xff]
    %v1103 = vld [vmem:[%s1101 + $0x8] sm:$0xff]
    %v1104 = vld [vmem:[%s1101 + $0x10] sm:$0xff]
    %v1105 = vld [vmem:[%s1101 + $0x18] sm:$0xff]
    %s1106 = scalar_lea.vmem %s31, 1
    %v1107 = vld [vmem:[%s1106] sm:$0x1]
    %s1108 = scalar_lea.vmem %s33, 32
    %v1109 = vld [vmem:[%s1108] sm:$0xff]
    %v1110 = vld [vmem:[%s1108 + $0x8] sm:$0xff]
    %v1111 = vld [vmem:[%s1108 + $0x10] sm:$0xff]
    %v1112 = vld [vmem:[%s1108 + $0x18] sm:$0xff]
    %s1113 = scalar_lea.vmem %s35, 1
    %v1114 = vld [vmem:[%s1113] sm:$0x1]
    %s1115 = scalar_lea.vmem %s37, 32
    %v1116 = vld [vmem:[%s1115] sm:$0xff]
    %v1117 = vld [vmem:[%s1115 + $0x8] sm:$0xff]
    %v1118 = vld [vmem:[%s1115 + $0x10] sm:$0xff]
    %v1119 = vld [vmem:[%s1115 + $0x18] sm:$0xff]
    %s1120 = scalar_lea.vmem %s39, 1
    %v1121 = vld [vmem:[%s1120] sm:$0x1]
    %s1122 = scalar_lea.vmem %s41, 64
    %v1123 = vld [vmem:[%s1122] sm:$0xff]
    %v1124 = vld [vmem:[%s1122 + $0x8] sm:$0xff]
    %v1125 = vld [vmem:[%s1122 + $0x10] sm:$0xff]
    %v1126 = vld [vmem:[%s1122 + $0x18] sm:$0xff]
    %v1127 = vld [vmem:[%s1122 + $0x20] sm:$0xff]
    %v1128 = vld [vmem:[%s1122 + $0x28] sm:$0xff]
    %v1129 = vld [vmem:[%s1122 + $0x30] sm:$0xff]
    %v1130 = vld [vmem:[%s1122 + $0x38] sm:$0xff]
    %s1131 = scalar_lea.vmem %s43, 1
    %v1132 = vld [vmem:[%s1131] sm:$0x1]
    %s1133 = scalar_lea.vmem %s45, 1
    %v1134 = vld [vmem:[%s1133] sm:$0x1]
    %s1135 = scalar_lea.vmem %s47, 1
    %v1136 = vld [vmem:[%s1135] sm:$0x1]
    %s1137 = scalar_lea.vmem %s49, 1
    %v1138 = vld [vmem:[%s1137] sm:$0x1]
    %s1139 = scalar_lea.vmem %s51, 1
    %v1140 = vld [vmem:[%s1139] sm:$0x1]
    %v1142 = vperm.slane %v1107, 0
    %v1145 = vsel %vm321, %v1098, 0
    %v1148 = vsel %vm321, %v1099, 0
    %v1151 = vsel %vm321, %v1100, 0
    %1153 = vmatpush.msra.mxu0 0.0
    %1154 = vmatpush.msra.mxu0 0.0
    %1155 = vmatpush.msra.mxu0 0.0
    %1156 = vmatpush.msra.mxu0 0.0
    %1157 = vmatpush.msra.mxu0 0.0
    %1158 = vmatpush.msra.mxu0 0.0
    %1159 = vmatpush.msra.mxu0 0.0
    %1160 = vmatpush.msra.mxu0 0.0
    %1161 = vmatpush.msra.mxu0 0.0
    %1162 = vmatpush.msra.mxu0 0.0
    %1163 = vmatpush.msra.mxu0 0.0
    %1164 = vmatpush.msra.mxu0 0.0
    %1165 = vmatpush.msra.mxu0 %v1105
    %1166 = vmatpush.msra.mxu0 %v1104
    %1167 = vmatpush.msra.mxu0 %v1103
    %1168 = vmatpush.msra.mxu0 %v1102
    %1169 = vmatmul.f32.gmra.mxu0 %v1145
    %v1170 = vpop.f32.mrf.mxu0
    %v1171 = vadd.f32 %v1142, %v1170
    %1172 = vmatmul.f32.gmra.mxu0 %v1148
    %v1173 = vpop.f32.mrf.mxu0
    %v1174 = vadd.f32 %v1142, %v1173
    %1175 = vmatmul.f32.gmra.mxu0 %v1151
    %v1176 = vpop.f32.mrf.mxu0
    %v1177 = vadd.f32 %v1142, %v1176
    %1178 = vdwg.mxu0
    %1181 = vrot.lane.b32.xlu0 %v1171, 96
    %v1182 = vpop.permute.xlu0 %1181
    %1183 = vrot.lane.b32.xlu0 %v1174, 96
    %v1184 = vpop.permute.xlu0 %1183
    %v1185 = vsel %vm363, %v1171, 0
    %v1187 = vsel %vm363, %v1174, 0
    %v1189 = vsel %vm363, %v1182, 0
    %v1191 = vsel %vm363, %v1184, 0
    %1193 = vmatpush.xpose.msra.mxu0 0.0
    %1194 = vmatpush.xpose.msra.mxu0 0.0
    %1195 = vmatpush.xpose.msra.mxu0 0.0
    %1196 = vmatpush.xpose.msra.mxu0 0.0
    %1197 = vmatpush.xpose.msra.mxu0 0.0
    %1198 = vmatpush.xpose.msra.mxu0 0.0
    %1199 = vmatpush.xpose.msra.mxu0 0.0
    %1200 = vmatpush.xpose.msra.mxu0 0.0
    %1201 = vmatpush.xpose.msra.mxu0 0.0
    %1202 = vmatpush.xpose.msra.mxu0 0.0
    %1203 = vmatpush.xpose.msra.mxu0 0.0
    %1204 = vmatpush.xpose.msra.mxu0 0.0
    %1205 = vmatpush.xpose.msra.mxu0 0.0
    %1206 = vmatpush.xpose.msra.mxu0 0.0
    %1207 = vmatpush.xpose.msra.mxu0 %v1191
    %1208 = vmatpush.xpose.msra.mxu0 %v1189
    %1209 = vmatmul.f32.gmra.mxu0 %v1185
    %v1210 = vpop.f32.mrf.mxu0
    %v1211 = vadd.f32 0.0, %v1210
    %1212 = vmatmul.f32.gmra.mxu0 %v1187
    %v1213 = vpop.f32.mrf.mxu0
    %v1214 = vadd.f32 0.0, %v1213
    %1215 = vdwg.mxu0
    %v1216 = vmul.f32 %v1211, 0.25
    %v1217 = vmul.f32 %v1214, 0.25
    %v1218 = vadd.f32 %v1216, %v397
    %v1219 = vadd.f32 %v1217, %v397
    %v1220 = vsel %vm400, %v1218, -inf
    %1221 = vmax.xlane.f32.xlu0 %v1220
    %v1222 = vpop.xlane.xlu0 %1221
    %v1223 = vsel %vm404, %v1219, -inf
    %1224 = vmax.xlane.f32.xlu0 %v1223
    %v1225 = vpop.xlane.xlu0 %1224
    %v1226 = vsub.f32 %v1218, %v1222
    %v1227 = vsub.f32 %v1219, %v1225
    %v1228 = vmul.f32 %v1226, 1.442695
    %v1229 = vpow.pop %v1228
    %v1230 = vmul.f32 %v1227, 1.442695
    %v1231 = vpow.pop %v1230
    %v1232 = vsel %vm400, %v1229, 0.0
    %1233 = vadd.xlane.f32.xlu0 %v1232
    %v1234 = vpop.xlane.xlu0 %1233
    %v1235 = vsel %vm404, %v1231, 0.0
    %1236 = vadd.xlane.f32.xlu0 %v1235
    %v1237 = vpop.xlane.xlu0 %1236
    %1238 = vrot.lane.b32.xlu0 %v1171, 64
    %v1239 = vpop.permute.xlu0 %1238
    %1240 = vrot.lane.b32.xlu0 %v1174, 64
    %v1241 = vpop.permute.xlu0 %1240
    %v1244 = vsel %vm400, %v1229, 0
    %v1247 = vsel %vm400, %v1231, 0
    %v1249 = vsel %vm271, %v1241, 0
    %1251 = vmatpush.msra.mxu0 0.0
    %1252 = vmatpush.msra.mxu0 0.0
    %1253 = vmatpush.msra.mxu0 0.0
    %1254 = vmatpush.msra.mxu0 0.0
    %1255 = vmatpush.msra.mxu0 0.0
    %1256 = vmatpush.msra.mxu0 0.0
    %1257 = vmatpush.msra.mxu0 0.0
    %1258 = vmatpush.msra.mxu0 0.0
    %1259 = vmatpush.msra.mxu0 0.0
    %1260 = vmatpush.msra.mxu0 0.0
    %1261 = vmatpush.msra.mxu0 0.0
    %1262 = vmatpush.msra.mxu0 0.0
    %1263 = vmatpush.msra.mxu0 0.0
    %1264 = vmatpush.msra.mxu0 0.0
    %1265 = vmatpush.msra.mxu0 %v1249
    %1266 = vmatpush.msra.mxu0 %v1239
    %1267 = vmatmul.f32.gmra.mxu0 %v1244
    %v1268 = vpop.f32.mrf.mxu0
    %v1269 = vadd.f32 0.0, %v1268
    %1270 = vmatmul.f32.gmra.mxu0 %v1247
    %v1271 = vpop.f32.mrf.mxu0
    %v1272 = vadd.f32 0.0, %v1271
    %1273 = vdwg.mxu0
    %v1274 = vrcp.pop %v1234
    %v1275 = vrcp.pop %v1237
    %v1276 = vmul.f32 %v1269, %v1274
    %v1277 = vmul.f32 %v1272, %v1275
    %1278 = vrot.lane.b32.xlu0 %v1171, 112
    %v1279 = vpop.permute.xlu0 %1278
    %1280 = vrot.lane.b32.xlu0 %v1174, 112
    %v1281 = vpop.permute.xlu0 %1280
    %1282 = vrot.lane.b32.xlu0 %v1171, 80
    %v1283 = vpop.permute.xlu0 %1282
    %1284 = vrot.lane.b32.xlu0 %v1174, 80
    %v1285 = vpop.permute.xlu0 %1284
    %v1286 = vsel %vm363, %v1279, 0
    %v1288 = vsel %vm363, %v1281, 0
    %v1290 = vsel %vm363, %v1283, 0
    %v1292 = vsel %vm363, %v1285, 0
    %1294 = vmatpush.xpose.msra.mxu0 0.0
    %1295 = vmatpush.xpose.msra.mxu0 0.0
    %1296 = vmatpush.xpose.msra.mxu0 0.0
    %1297 = vmatpush.xpose.msra.mxu0 0.0
    %1298 = vmatpush.xpose.msra.mxu0 0.0
    %1299 = vmatpush.xpose.msra.mxu0 0.0
    %1300 = vmatpush.xpose.msra.mxu0 0.0
    %1301 = vmatpush.xpose.msra.mxu0 0.0
    %1302 = vmatpush.xpose.msra.mxu0 0.0
    %1303 = vmatpush.xpose.msra.mxu0 0.0
    %1304 = vmatpush.xpose.msra.mxu0 0.0
    %1305 = vmatpush.xpose.msra.mxu0 0.0
    %1306 = vmatpush.xpose.msra.mxu0 0.0
    %1307 = vmatpush.xpose.msra.mxu0 0.0
    %1308 = vmatpush.xpose.msra.mxu0 %v1292
    %1309 = vmatpush.xpose.msra.mxu0 %v1290
    %1310 = vmatmul.f32.gmra.mxu0 %v1286
    %v1311 = vpop.f32.mrf.mxu0
    %v1312 = vadd.f32 0.0, %v1311
    %1313 = vmatmul.f32.gmra.mxu0 %v1288
    %v1314 = vpop.f32.mrf.mxu0
    %v1315 = vadd.f32 0.0, %v1314
    %1316 = vdwg.mxu0
    %v1317 = vmul.f32 %v1312, 0.25
    %v1318 = vmul.f32 %v1315, 0.25
    %v1319 = vadd.f32 %v1317, %v397
    %v1320 = vadd.f32 %v1318, %v397
    %v1321 = vsel %vm400, %v1319, -inf
    %1322 = vmax.xlane.f32.xlu0 %v1321
    %v1323 = vpop.xlane.xlu0 %1322
    %v1324 = vsel %vm404, %v1320, -inf
    %1325 = vmax.xlane.f32.xlu0 %v1324
    %v1326 = vpop.xlane.xlu0 %1325
    %v1327 = vsub.f32 %v1319, %v1323
    %v1328 = vsub.f32 %v1320, %v1326
    %v1329 = vmul.f32 %v1327, 1.442695
    %v1330 = vpow.pop %v1329
    %v1331 = vmul.f32 %v1328, 1.442695
    %v1332 = vpow.pop %v1331
    %v1333 = vsel %vm400, %v1330, 0.0
    %1334 = vadd.xlane.f32.xlu0 %v1333
    %v1335 = vpop.xlane.xlu0 %1334
    %v1336 = vsel %vm404, %v1332, 0.0
    %1337 = vadd.xlane.f32.xlu0 %v1336
    %v1338 = vpop.xlane.xlu0 %1337
    %1339 = vrot.lane.b32.xlu0 %v1171, 48
    %v1340 = vpop.permute.xlu0 %1339
    %1341 = vrot.lane.b32.xlu0 %v1174, 48
    %v1342 = vpop.permute.xlu0 %1341
    %v1345 = vsel %vm400, %v1330, 0
    %v1348 = vsel %vm400, %v1332, 0
    %v1350 = vsel %vm271, %v1342, 0
    %1352 = vmatpush.msra.mxu0 0.0
    %1353 = vmatpush.msra.mxu0 0.0
    %1354 = vmatpush.msra.mxu0 0.0
    %1355 = vmatpush.msra.mxu0 0.0
    %1356 = vmatpush.msra.mxu0 0.0
    %1357 = vmatpush.msra.mxu0 0.0
    %1358 = vmatpush.msra.mxu0 0.0
    %1359 = vmatpush.msra.mxu0 0.0
    %1360 = vmatpush.msra.mxu0 0.0
    %1361 = vmatpush.msra.mxu0 0.0
    %1362 = vmatpush.msra.mxu0 0.0
    %1363 = vmatpush.msra.mxu0 0.0
    %1364 = vmatpush.msra.mxu0 0.0
    %1365 = vmatpush.msra.mxu0 0.0
    %1366 = vmatpush.msra.mxu0 %v1350
    %1367 = vmatpush.msra.mxu0 %v1340
    %1368 = vmatmul.f32.gmra.mxu0 %v1345
    %v1369 = vpop.f32.mrf.mxu0
    %v1370 = vadd.f32 0.0, %v1369
    %1371 = vmatmul.f32.gmra.mxu0 %v1348
    %v1372 = vpop.f32.mrf.mxu0
    %v1373 = vadd.f32 0.0, %v1372
    %1374 = vdwg.mxu0
    %v1375 = vrcp.pop %v1335
    %v1376 = vrcp.pop %v1338
    %v1377 = vmul.f32 %v1370, %v1375
    %v1378 = vmul.f32 %v1373, %v1376
    %1381 = vrot.lane.b32.xlu0 %v1377, 16
    %v1382 = vpop.permute.xlu0 %1381
    %1383 = vrot.lane.b32.xlu0 %v1378, 16
    %v1384 = vpop.permute.xlu0 %1383
    %v1387 = vsel %vm363, %v1276, %v1382
    %v1388 = vsel %vm363, %v1277, %v1384
    %v1390 = vrot.slane %v1174, 4
    %v1391 = vrot.slane %v1177, 4
    %v1392 = vsel %vm271, %v1390, %v1391
    %1393 = vrot.lane.b32.xlu0 %v1392, 96
    %v1394 = vpop.permute.xlu0 %1393
    %1395 = vrot.lane.b32.xlu0 %v1391, 96
    %v1396 = vpop.permute.xlu0 %1395
    %v1397 = vsel %vm363, %v1392, 0
    %v1399 = vsel %vm363, %v1391, 0
    %v1401 = vsel %vm363, %v1394, 0
    %v1403 = vsel %vm363, %v1396, 0
    %1405 = vmatpush.xpose.msra.mxu0 0.0
    %1406 = vmatpush.xpose.msra.mxu0 0.0
    %1407 = vmatpush.xpose.msra.mxu0 0.0
    %1408 = vmatpush.xpose.msra.mxu0 0.0
    %1409 = vmatpush.xpose.msra.mxu0 0.0
    %1410 = vmatpush.xpose.msra.mxu0 0.0
    %1411 = vmatpush.xpose.msra.mxu0 0.0
    %1412 = vmatpush.xpose.msra.mxu0 0.0
    %1413 = vmatpush.xpose.msra.mxu0 0.0
    %1414 = vmatpush.xpose.msra.mxu0 0.0
    %1415 = vmatpush.xpose.msra.mxu0 0.0
    %1416 = vmatpush.xpose.msra.mxu0 0.0
    %1417 = vmatpush.xpose.msra.mxu0 0.0
    %1418 = vmatpush.xpose.msra.mxu0 0.0
    %1419 = vmatpush.xpose.msra.mxu0 %v1403
    %1420 = vmatpush.xpose.msra.mxu0 %v1401
    %1421 = vmatmul.f32.gmra.mxu0 %v1397
    %v1422 = vpop.f32.mrf.mxu0
    %v1423 = vadd.f32 0.0, %v1422
    %1424 = vmatmul.f32.gmra.mxu0 %v1399
    %v1425 = vpop.f32.mrf.mxu0
    %v1426 = vadd.f32 0.0, %v1425
    %1427 = vdwg.mxu0
    %v1428 = vmul.f32 %v1423, 0.25
    %v1429 = vmul.f32 %v1426, 0.25
    %v1430 = vadd.f32 %v1428, %v612
    %v1431 = vadd.f32 %v1429, %v612
    %v1432 = vsel %vm400, %v1430, -inf
    %1433 = vmax.xlane.f32.xlu0 %v1432
    %v1434 = vpop.xlane.xlu0 %1433
    %v1435 = vsel %vm404, %v1431, -inf
    %1436 = vmax.xlane.f32.xlu0 %v1435
    %v1437 = vpop.xlane.xlu0 %1436
    %v1438 = vsub.f32 %v1430, %v1434
    %v1439 = vsub.f32 %v1431, %v1437
    %v1440 = vmul.f32 %v1438, 1.442695
    %v1441 = vpow.pop %v1440
    %v1442 = vmul.f32 %v1439, 1.442695
    %v1443 = vpow.pop %v1442
    %v1444 = vsel %vm400, %v1441, 0.0
    %1445 = vadd.xlane.f32.xlu0 %v1444
    %v1446 = vpop.xlane.xlu0 %1445
    %v1447 = vsel %vm404, %v1443, 0.0
    %1448 = vadd.xlane.f32.xlu0 %v1447
    %v1449 = vpop.xlane.xlu0 %1448
    %1450 = vrot.lane.b32.xlu0 %v1392, 64
    %v1451 = vpop.permute.xlu0 %1450
    %1452 = vrot.lane.b32.xlu0 %v1391, 64
    %v1453 = vpop.permute.xlu0 %1452
    %v1456 = vsel %vm400, %v1441, 0
    %v1459 = vsel %vm400, %v1443, 0
    %v1461 = vsel %vm271, %v1453, 0
    %1463 = vmatpush.msra.mxu0 0.0
    %1464 = vmatpush.msra.mxu0 0.0
    %1465 = vmatpush.msra.mxu0 0.0
    %1466 = vmatpush.msra.mxu0 0.0
    %1467 = vmatpush.msra.mxu0 0.0
    %1468 = vmatpush.msra.mxu0 0.0
    %1469 = vmatpush.msra.mxu0 0.0
    %1470 = vmatpush.msra.mxu0 0.0
    %1471 = vmatpush.msra.mxu0 0.0
    %1472 = vmatpush.msra.mxu0 0.0
    %1473 = vmatpush.msra.mxu0 0.0
    %1474 = vmatpush.msra.mxu0 0.0
    %1475 = vmatpush.msra.mxu0 0.0
    %1476 = vmatpush.msra.mxu0 0.0
    %1477 = vmatpush.msra.mxu0 %v1461
    %1478 = vmatpush.msra.mxu0 %v1451
    %1479 = vmatmul.f32.gmra.mxu0 %v1456
    %v1480 = vpop.f32.mrf.mxu0
    %v1481 = vadd.f32 0.0, %v1480
    %1482 = vmatmul.f32.gmra.mxu0 %v1459
    %v1483 = vpop.f32.mrf.mxu0
    %v1484 = vadd.f32 0.0, %v1483
    %1485 = vdwg.mxu0
    %v1486 = vrcp.pop %v1446
    %v1487 = vrcp.pop %v1449
    %v1488 = vmul.f32 %v1481, %v1486
    %v1489 = vmul.f32 %v1484, %v1487
    %1490 = vrot.lane.b32.xlu0 %v1392, 112
    %v1491 = vpop.permute.xlu0 %1490
    %1492 = vrot.lane.b32.xlu0 %v1391, 112
    %v1493 = vpop.permute.xlu0 %1492
    %1494 = vrot.lane.b32.xlu0 %v1392, 80
    %v1495 = vpop.permute.xlu0 %1494
    %1496 = vrot.lane.b32.xlu0 %v1391, 80
    %v1497 = vpop.permute.xlu0 %1496
    %v1498 = vsel %vm363, %v1491, 0
    %v1500 = vsel %vm363, %v1493, 0
    %v1502 = vsel %vm363, %v1495, 0
    %v1504 = vsel %vm363, %v1497, 0
    %1506 = vmatpush.xpose.msra.mxu0 0.0
    %1507 = vmatpush.xpose.msra.mxu0 0.0
    %1508 = vmatpush.xpose.msra.mxu0 0.0
    %1509 = vmatpush.xpose.msra.mxu0 0.0
    %1510 = vmatpush.xpose.msra.mxu0 0.0
    %1511 = vmatpush.xpose.msra.mxu0 0.0
    %1512 = vmatpush.xpose.msra.mxu0 0.0
    %1513 = vmatpush.xpose.msra.mxu0 0.0
    %1514 = vmatpush.xpose.msra.mxu0 0.0
    %1515 = vmatpush.xpose.msra.mxu0 0.0
    %1516 = vmatpush.xpose.msra.mxu0 0.0
    %1517 = vmatpush.xpose.msra.mxu0 0.0
    %1518 = vmatpush.xpose.msra.mxu0 0.0
    %1519 = vmatpush.xpose.msra.mxu0 0.0
    %1520 = vmatpush.xpose.msra.mxu0 %v1504
    %1521 = vmatpush.xpose.msra.mxu0 %v1502
    %1522 = vmatmul.f32.gmra.mxu0 %v1498
    %v1523 = vpop.f32.mrf.mxu0
    %v1524 = vadd.f32 0.0, %v1523
    %1525 = vmatmul.f32.gmra.mxu0 %v1500
    %v1526 = vpop.f32.mrf.mxu0
    %v1527 = vadd.f32 0.0, %v1526
    %1528 = vdwg.mxu0
    %v1529 = vmul.f32 %v1524, 0.25
    %v1530 = vmul.f32 %v1527, 0.25
    %v1531 = vadd.f32 %v1529, %v612
    %v1532 = vadd.f32 %v1530, %v612
    %v1533 = vsel %vm400, %v1531, -inf
    %1534 = vmax.xlane.f32.xlu0 %v1533
    %v1535 = vpop.xlane.xlu0 %1534
    %v1536 = vsel %vm404, %v1532, -inf
    %1537 = vmax.xlane.f32.xlu0 %v1536
    %v1538 = vpop.xlane.xlu0 %1537
    %v1539 = vsub.f32 %v1531, %v1535
    %v1540 = vsub.f32 %v1532, %v1538
    %v1541 = vmul.f32 %v1539, 1.442695
    %v1542 = vpow.pop %v1541
    %v1543 = vmul.f32 %v1540, 1.442695
    %v1544 = vpow.pop %v1543
    %v1545 = vsel %vm400, %v1542, 0.0
    %1546 = vadd.xlane.f32.xlu0 %v1545
    %v1547 = vpop.xlane.xlu0 %1546
    %v1548 = vsel %vm404, %v1544, 0.0
    %1549 = vadd.xlane.f32.xlu0 %v1548
    %v1550 = vpop.xlane.xlu0 %1549
    %1551 = vrot.lane.b32.xlu0 %v1392, 48
    %v1552 = vpop.permute.xlu0 %1551
    %1553 = vrot.lane.b32.xlu0 %v1391, 48
    %v1554 = vpop.permute.xlu0 %1553
    %v1557 = vsel %vm400, %v1542, 0
    %v1560 = vsel %vm400, %v1544, 0
    %v1562 = vsel %vm271, %v1554, 0
    %1564 = vmatpush.msra.mxu0 0.0
    %1565 = vmatpush.msra.mxu0 0.0
    %1566 = vmatpush.msra.mxu0 0.0
    %1567 = vmatpush.msra.mxu0 0.0
    %1568 = vmatpush.msra.mxu0 0.0
    %1569 = vmatpush.msra.mxu0 0.0
    %1570 = vmatpush.msra.mxu0 0.0
    %1571 = vmatpush.msra.mxu0 0.0
    %1572 = vmatpush.msra.mxu0 0.0
    %1573 = vmatpush.msra.mxu0 0.0
    %1574 = vmatpush.msra.mxu0 0.0
    %1575 = vmatpush.msra.mxu0 0.0
    %1576 = vmatpush.msra.mxu0 0.0
    %1577 = vmatpush.msra.mxu0 0.0
    %1578 = vmatpush.msra.mxu0 %v1562
    %1579 = vmatpush.msra.mxu0 %v1552
    %1580 = vmatmul.f32.gmra.mxu0 %v1557
    %v1581 = vpop.f32.mrf.mxu0
    %v1582 = vadd.f32 0.0, %v1581
    %1583 = vmatmul.f32.gmra.mxu0 %v1560
    %v1584 = vpop.f32.mrf.mxu0
    %v1585 = vadd.f32 0.0, %v1584
    %1586 = vdwg.mxu0
    %v1587 = vrcp.pop %v1547
    %v1588 = vrcp.pop %v1550
    %v1589 = vmul.f32 %v1582, %v1587
    %v1590 = vmul.f32 %v1585, %v1588
    %1593 = vrot.lane.b32.xlu0 %v1589, 16
    %v1594 = vpop.permute.xlu0 %1593
    %1595 = vrot.lane.b32.xlu0 %v1590, 16
    %v1596 = vpop.permute.xlu0 %1595
    %v1599 = vsel %vm363, %v1488, %v1594
    %v1600 = vsel %vm363, %v1489, %v1596
    %v1603 = vrot.slane %v1599, 4
    %v1604 = vrot.slane %v1600, 4
    %v1605 = vsel %vm271, %v1603, %v1604
    %v1607 = vsel %vm271, %v1388, %v1603
    %v1609 = vperm.slane %v1114, 0
    %v1612 = vsel %vm321, %v1387, 0
    %v1615 = vsel %vm321, %v1607, 0
    %v1617 = vsel %vm321, %v1605, 0
    %1619 = vmatpush.msra.mxu0 0.0
    %1620 = vmatpush.msra.mxu0 0.0
    %1621 = vmatpush.msra.mxu0 0.0
    %1622 = vmatpush.msra.mxu0 0.0
    %1623 = vmatpush.msra.mxu0 0.0
    %1624 = vmatpush.msra.mxu0 0.0
    %1625 = vmatpush.msra.mxu0 0.0
    %1626 = vmatpush.msra.mxu0 0.0
    %1627 = vmatpush.msra.mxu0 0.0
    %1628 = vmatpush.msra.mxu0 0.0
    %1629 = vmatpush.msra.mxu0 0.0
    %1630 = vmatpush.msra.mxu0 0.0
    %1631 = vmatpush.msra.mxu0 %v1112
    %1632 = vmatpush.msra.mxu0 %v1111
    %1633 = vmatpush.msra.mxu0 %v1110
    %1634 = vmatpush.msra.mxu0 %v1109
    %1635 = vmatmul.f32.gmra.mxu0 %v1612
    %v1636 = vpop.f32.mrf.mxu0
    %v1637 = vadd.f32 %v1609, %v1636
    %1638 = vmatmul.f32.gmra.mxu0 %v1615
    %v1639 = vpop.f32.mrf.mxu0
    %v1640 = vadd.f32 %v1609, %v1639
    %1641 = vmatmul.f32.gmra.mxu0 %v1617
    %v1642 = vpop.f32.mrf.mxu0
    %v1643 = vadd.f32 %v1609, %v1642
    %1644 = vdwg.mxu0
    %v1645 = vadd.f32 %v1098, %v1637
    %v1646 = vadd.f32 %v1099, %v1640
    %v1647 = vadd.f32 %v1100, %v1643
    %v1648 = vsel %vm321, %v1645, 0.0
    %1649 = vadd.xlane.f32.xlu0 %v1648
    %v1650 = vpop.xlane.xlu0 %1649
    %v1651 = vsel %vm321, %v1646, 0.0
    %1652 = vadd.xlane.f32.xlu0 %v1651
    %v1653 = vpop.xlane.xlu0 %1652
    %v1654 = vsel %vm321, %v1647, 0.0
    %1655 = vadd.xlane.f32.xlu0 %v1654
    %v1656 = vpop.xlane.xlu0 %1655
    %v1657 = vmul.f32 %v1650, %v846
    %v1658 = vmul.f32 %v1653, %v846
    %v1659 = vmul.f32 %v1656, %v846
    %v1660 = vsub.f32 %v1645, %v1657
    %v1661 = vsub.f32 %v1646, %v1658
    %v1662 = vsub.f32 %v1647, %v1659
    %v1663 = vmul.f32 %v1660, %v1660
    %v1664 = vmul.f32 %v1661, %v1661
    %v1665 = vmul.f32 %v1662, %v1662
    %v1666 = vsel %vm321, %v1663, 0.0
    %1667 = vadd.xlane.f32.xlu0 %v1666
    %v1668 = vpop.xlane.xlu0 %1667
    %v1669 = vsel %vm321, %v1664, 0.0
    %1670 = vadd.xlane.f32.xlu0 %v1669
    %v1671 = vpop.xlane.xlu0 %1670
    %v1672 = vsel %vm321, %v1665, 0.0
    %1673 = vadd.xlane.f32.xlu0 %v1672
    %v1674 = vpop.xlane.xlu0 %1673
    %v1675 = vmul.f32 %v1668, %v846
    %v1676 = vmul.f32 %v1671, %v846
    %v1677 = vmul.f32 %v1674, %v846
    %v1678 = vadd.f32 %v1675, 1e-05
    %v1679 = vadd.f32 %v1676, 1e-05
    %v1680 = vadd.f32 %v1677, 1e-05
    %v1681 = vrsqrt.pop %v1678
    %v1682 = vmul.f32 %v1681, %v1678
    %v1683 = vmul.f32 %v1682, %v1681
    %v1684 = vmul.f32 0.5, %v1683
    %v1685 = vsub.f32 1.5, %v1684
    %v1686 = vmul.f32 %v1681, %v1685
    %vm1687 = vweird.f32 %v1678
    %vm1688 = vweird.f32 %v1681
    %vm1689 = vmor %vm1687, %vm1688
    %v1690 = vsel %vm1689, %v1681, %v1686
    %v1691 = vrsqrt.pop %v1679
    %v1692 = vmul.f32 %v1691, %v1679
    %v1693 = vmul.f32 %v1692, %v1691
    %v1694 = vmul.f32 0.5, %v1693
    %v1695 = vsub.f32 1.5, %v1694
    %v1696 = vmul.f32 %v1691, %v1695
    %vm1697 = vweird.f32 %v1679
    %vm1698 = vweird.f32 %v1691
    %vm1699 = vmor %vm1697, %vm1698
    %v1700 = vsel %vm1699, %v1691, %v1696
    %v1701 = vrsqrt.pop %v1680
    %v1702 = vmul.f32 %v1701, %v1680
    %v1703 = vmul.f32 %v1702, %v1701
    %v1704 = vmul.f32 0.5, %v1703
    %v1705 = vsub.f32 1.5, %v1704
    %v1706 = vmul.f32 %v1701, %v1705
    %vm1707 = vweird.f32 %v1680
    %vm1708 = vweird.f32 %v1701
    %vm1709 = vmor %vm1707, %vm1708
    %v1710 = vsel %vm1709, %v1701, %v1706
    %v1711 = vmul.f32 %v1660, %v1690
    %v1712 = vmul.f32 %v1661, %v1700
    %v1713 = vmul.f32 %v1662, %v1710
    %v1715 = vperm.slane %v1134, 0
    %v1717 = vmul.f32 %v1711, %v1715
    %v1718 = vmul.f32 %v1712, %v1715
    %v1719 = vmul.f32 %v1713, %v1715
    %v1721 = vperm.slane %v1136, 0
    %v1723 = vadd.f32 %v1717, %v1721
    %v1724 = vadd.f32 %v1718, %v1721
    %v1725 = vadd.f32 %v1719, %v1721
    %v1727 = vperm.slane %v1121, 0
    %v1730 = vsel %vm321, %v1723, 0
    %v1733 = vsel %vm321, %v1724, 0
    %v1736 = vsel %vm321, %v1725, 0
    %1738 = vmatpush.msra.mxu0 0.0
    %1739 = vmatpush.msra.mxu0 0.0
    %1740 = vmatpush.msra.mxu0 0.0
    %1741 = vmatpush.msra.mxu0 0.0
    %1742 = vmatpush.msra.mxu0 0.0
    %1743 = vmatpush.msra.mxu0 0.0
    %1744 = vmatpush.msra.mxu0 0.0
    %1745 = vmatpush.msra.mxu0 0.0
    %1746 = vmatpush.msra.mxu0 0.0
    %1747 = vmatpush.msra.mxu0 0.0
    %1748 = vmatpush.msra.mxu0 0.0
    %1749 = vmatpush.msra.mxu0 0.0
    %1750 = vmatpush.msra.mxu0 %v1119
    %1751 = vmatpush.msra.mxu0 %v1118
    %1752 = vmatpush.msra.mxu0 %v1117
    %1753 = vmatpush.msra.mxu0 %v1116
    %1754 = vmatmul.f32.gmra.mxu0 %v1730
    %v1755 = vpop.f32.mrf.mxu0
    %v1756 = vadd.f32 %v1727, %v1755
    %1757 = vmatmul.f32.gmra.mxu0 %v1733
    %v1758 = vpop.f32.mrf.mxu0
    %v1759 = vadd.f32 %v1727, %v1758
    %1760 = vmatmul.f32.gmra.mxu0 %v1736
    %v1761 = vpop.f32.mrf.mxu0
    %v1762 = vadd.f32 %v1727, %v1761
    %1763 = vdwg.mxu0
    %v1764 = vmul.f32 %v1756, 0.5
    %v1765 = vmul.f32 %v1759, 0.5
    %v1766 = vmul.f32 %v1762, 0.5
    %v1767 = vmul.f32 %v1756, 0.044715
    %v1768 = vmul.f32 %v1759, 0.044715
    %v1769 = vmul.f32 %v1762, 0.044715
    %v1770 = vmul.f32 %v1767, %v1756
    %v1771 = vmul.f32 %v1768, %v1759
    %v1772 = vmul.f32 %v1769, %v1762
    %v1773 = vmul.f32 %v1770, %v1756
    %v1774 = vmul.f32 %v1771, %v1759
    %v1775 = vmul.f32 %v1772, %v1762
    %v1776 = vadd.f32 %v1756, %v1773
    %v1777 = vadd.f32 %v1759, %v1774
    %v1778 = vadd.f32 %v1762, %v1775
    %v1779 = vmul.f32 %v1776, 0.7978846
    %v1780 = vmul.f32 %v1777, 0.7978846
    %v1781 = vmul.f32 %v1778, 0.7978846
    %v1782 = vtanh.pop %v1779
    %v1783 = vtanh.pop %v1780
    %v1784 = vtanh.pop %v1781
    %v1785 = vadd.f32 %v1782, 1.0
    %v1786 = vadd.f32 %v1783, 1.0
    %v1787 = vadd.f32 %v1784, 1.0
    %v1788 = vmul.f32 %v1764, %v1785
    %v1789 = vmul.f32 %v1765, %v1786
    %v1790 = vmul.f32 %v1766, %v1787
    %v1792 = vperm.slane %v1132, 0
    %v1795 = vsel %vm984, %v1788, 0
    %v1798 = vsel %vm984, %v1789, 0
    %v1801 = vsel %vm984, %v1790, 0
    %1803 = vmatpush.msra.mxu0 0.0
    %1804 = vmatpush.msra.mxu0 0.0
    %1805 = vmatpush.msra.mxu0 0.0
    %1806 = vmatpush.msra.mxu0 0.0
    %1807 = vmatpush.msra.mxu0 0.0
    %1808 = vmatpush.msra.mxu0 0.0
    %1809 = vmatpush.msra.mxu0 0.0
    %1810 = vmatpush.msra.mxu0 0.0
    %1811 = vmatpush.msra.mxu0 %v1130
    %1812 = vmatpush.msra.mxu0 %v1129
    %1813 = vmatpush.msra.mxu0 %v1128
    %1814 = vmatpush.msra.mxu0 %v1127
    %1815 = vmatpush.msra.mxu0 %v1126
    %1816 = vmatpush.msra.mxu0 %v1125
    %1817 = vmatpush.msra.mxu0 %v1124
    %1818 = vmatpush.msra.mxu0 %v1123
    %1819 = vmatmul.f32.gmra.mxu0 %v1795
    %v1820 = vpop.f32.mrf.mxu0
    %v1821 = vadd.f32 %v1792, %v1820
    %1822 = vmatmul.f32.gmra.mxu0 %v1798
    %v1823 = vpop.f32.mrf.mxu0
    %v1824 = vadd.f32 %v1792, %v1823
    %1825 = vmatmul.f32.gmra.mxu0 %v1801
    %v1826 = vpop.f32.mrf.mxu0
    %1827 = vdwg.mxu0
    %v1828 = vadd.f32 %v1723, %v1821
    %v1829 = vadd.f32 %v1724, %v1824
    %v1830 = vsel %vm321, %v1828, 0.0
    %1831 = vadd.xlane.f32.xlu0 %v1830
    %v1832 = vpop.xlane.xlu0 %1831
    %v1833 = vsel %vm321, %v1829, 0.0
    %1834 = vadd.xlane.f32.xlu0 %v1833
    %v1835 = vpop.xlane.xlu0 %1834
    %v1836 = vmul.f32 %v1832, %v846
    %v1837 = vmul.f32 %v1835, %v846
    %v1838 = vsub.f32 %v1828, %v1836
    %v1839 = vsub.f32 %v1829, %v1837
    %v1840 = vmul.f32 %v1838, %v1838
    %v1841 = vmul.f32 %v1839, %v1839
    %v1842 = vsel %vm321, %v1840, 0.0
    %1843 = vadd.xlane.f32.xlu0 %v1842
    %v1844 = vpop.xlane.xlu0 %1843
    %v1845 = vsel %vm321, %v1841, 0.0
    %1846 = vadd.xlane.f32.xlu0 %v1845
    %v1847 = vpop.xlane.xlu0 %1846
    %v1848 = vmul.f32 %v1844, %v846
    %v1849 = vmul.f32 %v1847, %v846
    %v1850 = vadd.f32 %v1848, 1e-05
    %v1851 = vadd.f32 %v1849, 1e-05
    %v1852 = vrsqrt.pop %v1850
    %v1853 = vmul.f32 %v1852, %v1850
    %v1854 = vmul.f32 %v1853, %v1852
    %v1855 = vmul.f32 0.5, %v1854
    %v1856 = vsub.f32 1.5, %v1855
    %v1857 = vmul.f32 %v1852, %v1856
    %vm1858 = vweird.f32 %v1850
    %vm1859 = vweird.f32 %v1852
    %vm1860 = vmor %vm1858, %vm1859
    %v1861 = vsel %vm1860, %v1852, %v1857
    %v1862 = vrsqrt.pop %v1851
    %v1863 = vmul.f32 %v1862, %v1851
    %v1864 = vmul.f32 %v1863, %v1862
    %v1865 = vmul.f32 0.5, %v1864
    %v1866 = vsub.f32 1.5, %v1865
    %v1867 = vmul.f32 %v1862, %v1866
    %vm1868 = vweird.f32 %v1851
    %vm1869 = vweird.f32 %v1862
    %vm1870 = vmor %vm1868, %vm1869
    %v1871 = vsel %vm1870, %v1862, %v1867
    %v1872 = vmul.f32 %v1838, %v1861
    %v1873 = vmul.f32 %v1839, %v1871
    %v1875 = vperm.slane %v1138, 0
    %v1877 = vmul.f32 %v1872, %v1875
    %v1878 = vmul.f32 %v1873, %v1875
    %v1880 = vperm.slane %v1140, 0
    %v1882 = vadd.f32 %v1877, %v1880
    %v1883 = vadd.f32 %v1878, %v1880
    %v1885 = vrot.slane %v1883, 3
    %v1887 = vsel %vm277, %v1882, %v1885
    %v1889 = vrot.slane %v1882, 1
    %v1891 = vrot.slane %v1883, 4
    %v1893 = vsel %vm277, %v1889, %v1891
    %vm1894 = vcmask 254976
    %1895 = vst.msk [vmem:[#allocation2] sm:$0x3] %vm1894, %v1887
    %1896 = vst.msk [vmem:[#allocation4] sm:$0x3] %vm1894, %v1893
    %v1897 = vld [vmem:[%s19] sm:$0x1f]
    %v1899 = vsel %vm182, %v1897, 0
    %1901 = vmatpush.msra.mxu0 0.0
    %1902 = vmatpush.msra.mxu0 0.0
    %1903 = vmatpush.msra.mxu0 0.0
    %1904 = vmatpush.msra.mxu0 0.0
    %1905 = vmatpush.msra.mxu0 0.0
    %1906 = vmatpush.msra.mxu0 0.0
    %1907 = vmatpush.msra.mxu0 0.0
    %1908 = vmatpush.msra.mxu0 0.0
    %1909 = vmatpush.msra.mxu0 0.0
    %1910 = vmatpush.msra.mxu0 0.0
    %1911 = vmatpush.msra.mxu0 0.0
    %1912 = vmatpush.msra.mxu0 0.0
    %1913 = vmatpush.msra.mxu0 0.0
    %1914 = vmatpush.msra.mxu0 0.0
    %1915 = vmatpush.msra.mxu0 0.0
    %1916 = vmatpush.msra.mxu0 %v1899
    %1917 = vmatmul.f32.gmra.mxu0 %v180
    %v1918 = vpop.f32.mrf.mxu0
    %v1919 = vadd.f32 0.0, %v1918
    %1920 = vdwg.mxu0
    %v1921 = vadd.f32 %v1887, %v1919
    %v1922 = vrot.slane %v175, 6
    %v1924 = vsel %vm271, %v174, %v1922
    %v1925 = vld [vmem:[%s21] sm:$0x3f]
    %v1926 = vld [vmem:[%s23] sm:$0x1]
    %v1928 = vperm.slane %v1926, 0
    %v1931 = vsel %vm211, %v1924, 0
    %v1934 = vsel %vm221, %v1925, 0
    %1936 = vmatpush.msra.mxu0 0.0
    %1937 = vmatpush.msra.mxu0 0.0
    %1938 = vmatpush.msra.mxu0 0.0
    %1939 = vmatpush.msra.mxu0 0.0
    %1940 = vmatpush.msra.mxu0 0.0
    %1941 = vmatpush.msra.mxu0 0.0
    %1942 = vmatpush.msra.mxu0 0.0
    %1943 = vmatpush.msra.mxu0 0.0
    %1944 = vmatpush.msra.mxu0 0.0
    %1945 = vmatpush.msra.mxu0 0.0
    %1946 = vmatpush.msra.mxu0 0.0
    %1947 = vmatpush.msra.mxu0 0.0
    %1948 = vmatpush.msra.mxu0 0.0
    %1949 = vmatpush.msra.mxu0 0.0
    %1950 = vmatpush.msra.mxu0 0.0
    %1951 = vmatpush.msra.mxu0 %v1934
    %1952 = vmatmul.f32.gmra.mxu0 %v1931
    %v1953 = vpop.f32.mrf.mxu0
    %v1954 = vadd.f32 %v1928, %v1953
    %1955 = vdwg.mxu0
    %v1956 = vperm.slane %v1954, 3
    %v1957 = vperm.slane %v1954, 7
    %v1959 = vrot.slane %v1954, 2
    %v1961 = vsel %vm271, %v1954, %v1956
    %v1962 = vsel %vm258, %v1956, %v1959
    %v1963 = vsel %vm221, %v1962, %v1957
    %v1964 = vld [vmem:[%s11] sm:$0xff]
    %v1965 = vld [vmem:[%s11 + $0x8] sm:$0xff]
    %v1966 = vld [vmem:[%s11 + $0x10] sm:$0xf]
    %v1967 = vadd.f32 %v1961, %v1964
    %v1968 = vadd.f32 %v1963, %v1965
    %v1969 = vadd.f32 %v1957, %v1966
    %v1970 = vld [vmem:[%s7] sm:$0xff]
    %v1971 = vld [vmem:[%s7 + $0x8] sm:$0x7]
    %v1972 = vld [vmem:[%s77] sm:$0xff]
    %v1973 = vld [vmem:[%s77 + $0x8] sm:$0xff]
    %v1974 = vld [vmem:[%s77 + $0x10] sm:$0xff]
    %v1975 = vld [vmem:[%s77 + $0x18] sm:$0xff]
    %v1976 = vld [vmem:[%s79] sm:$0x1]
    %v1978 = vperm.slane %v1976, 0
    %v1981 = vsel %vm321, %v1921, 0
    %1983 = vmatpush.msra.mxu0 0.0
    %1984 = vmatpush.msra.mxu0 0.0
    %1985 = vmatpush.msra.mxu0 0.0
    %1986 = vmatpush.msra.mxu0 0.0
    %1987 = vmatpush.msra.mxu0 0.0
    %1988 = vmatpush.msra.mxu0 0.0
    %1989 = vmatpush.msra.mxu0 0.0
    %1990 = vmatpush.msra.mxu0 0.0
    %1991 = vmatpush.msra.mxu0 0.0
    %1992 = vmatpush.msra.mxu0 0.0
    %1993 = vmatpush.msra.mxu0 0.0
    %1994 = vmatpush.msra.mxu0 0.0
    %1995 = vmatpush.msra.mxu0 %v1975
    %1996 = vmatpush.msra.mxu0 %v1974
    %1997 = vmatpush.msra.mxu0 %v1973
    %1998 = vmatpush.msra.mxu0 %v1972
    %1999 = vmatmul.f32.gmra.mxu0 %v1981
    %v2000 = vpop.f32.mrf.mxu0
    %v2001 = vadd.f32 %v1978, %v2000
    %2002 = vdwg.mxu0
    %v2005 = vrot.slane %v1967, 7
    %v2006 = vrot.slane %v1968, 7
    %v2007 = vsel %vm277, %v2005, %v2006
    %v2011 = vrot.slane %v2001, 6
    %v2014 = vrot.slane %v1968, 6
    %v2015 = vrot.slane %v1969, 6
    %v2016 = vsel %vm258, %v2014, %v2015
    %v2019 = vsel %vm277, %v2001, %v2005
    %vm2020 = vcmask 1042432
    %v2021 = vsel %vm2020, %v2007, %v2011
    %v2022 = vsel %vm271, %v2021, %v2014
    %v2023 = vld [vmem:[%s53] sm:$0xff]
    %v2024 = vld [vmem:[%s53 + $0x8] sm:$0xff]
    %v2025 = vld [vmem:[%s53 + $0x10] sm:$0xff]
    %v2026 = vld [vmem:[%s53 + $0x18] sm:$0xff]
    %v2027 = vld [vmem:[%s55] sm:$0x1]
    %v2028 = vld [vmem:[%s57] sm:$0xff]
    %v2029 = vld [vmem:[%s57 + $0x8] sm:$0xff]
    %v2030 = vld [vmem:[%s57 + $0x10] sm:$0xff]
    %v2031 = vld [vmem:[%s57 + $0x18] sm:$0xff]
    %v2032 = vld [vmem:[%s59] sm:$0x1]
    %v2033 = vld [vmem:[%s61] sm:$0xff]
    %v2034 = vld [vmem:[%s61 + $0x8] sm:$0xff]
    %v2035 = vld [vmem:[%s61 + $0x10] sm:$0xff]
    %v2036 = vld [vmem:[%s61 + $0x18] sm:$0xff]
    %v2037 = vld [vmem:[%s63] sm:$0x1]
    %v2038 = vld [vmem:[%s65] sm:$0xff]
    %v2039 = vld [vmem:[%s65 + $0x8] sm:$0xff]
    %v2040 = vld [vmem:[%s65 + $0x10] sm:$0xff]
    %v2041 = vld [vmem:[%s65 + $0x18] sm:$0xff]
    %v2042 = vld [vmem:[%s65 + $0x20] sm:$0xff]
    %v2043 = vld [vmem:[%s65 + $0x28] sm:$0xff]
    %v2044 = vld [vmem:[%s65 + $0x30] sm:$0xff]
    %v2045 = vld [vmem:[%s65 + $0x38] sm:$0xff]
    %v2046 = vld [vmem:[%s67] sm:$0x1]
    %v2047 = vld [vmem:[%s69] sm:$0x1]
    %v2048 = vld [vmem:[%s71] sm:$0x1]
    %v2049 = vld [vmem:[%s73] sm:$0x1]
    %v2050 = vld [vmem:[%s75] sm:$0x1]
    %v2052 = vperm.slane %v2027, 0
    %v2055 = vsel %vm321, %v2019, 0
    %v2058 = vsel %vm321, %v2022, 0
    %v2060 = vsel %vm321, %v2016, 0
    %2062 = vmatpush.msra.mxu0 0.0
    %2063 = vmatpush.msra.mxu0 0.0
    %2064 = vmatpush.msra.mxu0 0.0
    %2065 = vmatpush.msra.mxu0 0.0
    %2066 = vmatpush.msra.mxu0 0.0
    %2067 = vmatpush.msra.mxu0 0.0
    %2068 = vmatpush.msra.mxu0 0.0
    %2069 = vmatpush.msra.mxu0 0.0
    %2070 = vmatpush.msra.mxu0 0.0
    %2071 = vmatpush.msra.mxu0 0.0
    %2072 = vmatpush.msra.mxu0 0.0
    %2073 = vmatpush.msra.mxu0 0.0
    %2074 = vmatpush.msra.mxu0 %v2026
    %2075 = vmatpush.msra.mxu0 %v2025
    %2076 = vmatpush.msra.mxu0 %v2024
    %2077 = vmatpush.msra.mxu0 %v2023
    %2078 = vmatmul.f32.gmra.mxu0 %v2055
    %v2079 = vpop.f32.mrf.mxu0
    %v2080 = vadd.f32 %v2052, %v2079
    %2081 = vmatmul.f32.gmra.mxu0 %v2058
    %v2082 = vpop.f32.mrf.mxu0
    %v2083 = vadd.f32 %v2052, %v2082
    %2084 = vmatmul.f32.gmra.mxu0 %v2060
    %v2085 = vpop.f32.mrf.mxu0
    %v2086 = vadd.f32 %v2052, %v2085
    %2087 = vdwg.mxu0
    %2090 = vrot.lane.b32.xlu0 %v2080, 96
    %v2091 = vpop.permute.xlu0 %2090
    %2092 = vrot.lane.b32.xlu0 %v2083, 96
    %v2093 = vpop.permute.xlu0 %2092
    %v2094 = vsel %vm363, %v2080, 0
    %v2096 = vsel %vm363, %v2083, 0
    %v2098 = vsel %vm363, %v2091, 0
    %v2100 = vsel %vm363, %v2093, 0
    %2102 = vmatpush.xpose.msra.mxu0 0.0
    %2103 = vmatpush.xpose.msra.mxu0 0.0
    %2104 = vmatpush.xpose.msra.mxu0 0.0
    %2105 = vmatpush.xpose.msra.mxu0 0.0
    %2106 = vmatpush.xpose.msra.mxu0 0.0
    %2107 = vmatpush.xpose.msra.mxu0 0.0
    %2108 = vmatpush.xpose.msra.mxu0 0.0
    %2109 = vmatpush.xpose.msra.mxu0 0.0
    %2110 = vmatpush.xpose.msra.mxu0 0.0
    %2111 = vmatpush.xpose.msra.mxu0 0.0
    %2112 = vmatpush.xpose.msra.mxu0 0.0
    %2113 = vmatpush.xpose.msra.mxu0 0.0
    %2114 = vmatpush.xpose.msra.mxu0 0.0
    %2115 = vmatpush.xpose.msra.mxu0 0.0
    %2116 = vmatpush.xpose.msra.mxu0 %v2100
    %2117 = vmatpush.xpose.msra.mxu0 %v2098
    %2118 = vmatmul.f32.gmra.mxu0 %v2094
    %v2119 = vpop.f32.mrf.mxu0
    %v2120 = vadd.f32 0.0, %v2119
    %2121 = vmatmul.f32.gmra.mxu0 %v2096
    %v2122 = vpop.f32.mrf.mxu0
    %v2123 = vadd.f32 0.0, %v2122
    %2124 = vdwg.mxu0
    %v2125 = vmul.f32 %v2120, 0.25
    %v2126 = vmul.f32 %v2123, 0.25
    %v2127 = vadd.f32 %v2125, %v1970
    %v2128 = vadd.f32 %v2126, %v1971
    %vm2129 = vcmask 89088
    %v2130 = vsel %vm2129, %v2127, -inf
    %2131 = vmax.xlane.f32.xlu0 %v2130
    %v2132 = vpop.xlane.xlu0 %2131
    %vm2133 = vcmask 83968
    %v2134 = vsel %vm2133, %v2128, -inf
    %2135 = vmax.xlane.f32.xlu0 %v2134
    %v2136 = vpop.xlane.xlu0 %2135
    %v2137 = vsub.f32 %v2127, %v2132
    %v2138 = vsub.f32 %v2128, %v2136
    %v2139 = vmul.f32 %v2137, 1.442695
    %v2140 = vpow.pop %v2139
    %v2141 = vmul.f32 %v2138, 1.442695
    %v2142 = vpow.pop %v2141
    %v2143 = vsel %vm2129, %v2140, 0.0
    %2144 = vadd.xlane.f32.xlu0 %v2143
    %v2145 = vpop.xlane.xlu0 %2144
    %v2146 = vsel %vm2133, %v2142, 0.0
    %2147 = vadd.xlane.f32.xlu0 %v2146
    %v2148 = vpop.xlane.xlu0 %2147
    %2149 = vrot.lane.b32.xlu0 %v2080, 64
    %v2150 = vpop.permute.xlu0 %2149
    %2151 = vrot.lane.b32.xlu0 %v2083, 64
    %v2152 = vpop.permute.xlu0 %2151
    %v2155 = vsel %vm2129, %v2140, 0
    %v2158 = vsel %vm2129, %v2142, 0
    %v2160 = vsel %vm2020, %v2152, 0
    %2162 = vmatpush.msra.mxu0 0.0
    %2163 = vmatpush.msra.mxu0 0.0
    %2164 = vmatpush.msra.mxu0 0.0
    %2165 = vmatpush.msra.mxu0 0.0
    %2166 = vmatpush.msra.mxu0 0.0
    %2167 = vmatpush.msra.mxu0 0.0
    %2168 = vmatpush.msra.mxu0 0.0
    %2169 = vmatpush.msra.mxu0 0.0
    %2170 = vmatpush.msra.mxu0 0.0
    %2171 = vmatpush.msra.mxu0 0.0
    %2172 = vmatpush.msra.mxu0 0.0
    %2173 = vmatpush.msra.mxu0 0.0
    %2174 = vmatpush.msra.mxu0 0.0
    %2175 = vmatpush.msra.mxu0 0.0
    %2176 = vmatpush.msra.mxu0 %v2160
    %2177 = vmatpush.msra.mxu0 %v2150
    %2178 = vmatmul.f32.gmra.mxu0 %v2155
    %v2179 = vpop.f32.mrf.mxu0
    %v2180 = vadd.f32 0.0, %v2179
    %2181 = vmatmul.f32.gmra.mxu0 %v2158
    %v2182 = vpop.f32.mrf.mxu0
    %v2183 = vadd.f32 0.0, %v2182
    %2184 = vdwg.mxu0
    %v2185 = vrcp.pop %v2145
    %v2186 = vrcp.pop %v2148
    %v2187 = vmul.f32 %v2180, %v2185
    %v2188 = vmul.f32 %v2183, %v2186
    %2189 = vrot.lane.b32.xlu0 %v2080, 112
    %v2190 = vpop.permute.xlu0 %2189
    %2191 = vrot.lane.b32.xlu0 %v2083, 112
    %v2192 = vpop.permute.xlu0 %2191
    %2193 = vrot.lane.b32.xlu0 %v2080, 80
    %v2194 = vpop.permute.xlu0 %2193
    %2195 = vrot.lane.b32.xlu0 %v2083, 80
    %v2196 = vpop.permute.xlu0 %2195
    %v2197 = vsel %vm363, %v2190, 0
    %v2199 = vsel %vm363, %v2192, 0
    %v2201 = vsel %vm363, %v2194, 0
    %v2203 = vsel %vm363, %v2196, 0
    %2205 = vmatpush.xpose.msra.mxu0 0.0
    %2206 = vmatpush.xpose.msra.mxu0 0.0
    %2207 = vmatpush.xpose.msra.mxu0 0.0
    %2208 = vmatpush.xpose.msra.mxu0 0.0
    %2209 = vmatpush.xpose.msra.mxu0 0.0
    %2210 = vmatpush.xpose.msra.mxu0 0.0
    %2211 = vmatpush.xpose.msra.mxu0 0.0
    %2212 = vmatpush.xpose.msra.mxu0 0.0
    %2213 = vmatpush.xpose.msra.mxu0 0.0
    %2214 = vmatpush.xpose.msra.mxu0 0.0
    %2215 = vmatpush.xpose.msra.mxu0 0.0
    %2216 = vmatpush.xpose.msra.mxu0 0.0
    %2217 = vmatpush.xpose.msra.mxu0 0.0
    %2218 = vmatpush.xpose.msra.mxu0 0.0
    %2219 = vmatpush.xpose.msra.mxu0 %v2203
    %2220 = vmatpush.xpose.msra.mxu0 %v2201
    %2221 = vmatmul.f32.gmra.mxu0 %v2197
    %v2222 = vpop.f32.mrf.mxu0
    %v2223 = vadd.f32 0.0, %v2222
    %2224 = vmatmul.f32.gmra.mxu0 %v2199
    %v2225 = vpop.f32.mrf.mxu0
    %v2226 = vadd.f32 0.0, %v2225
    %2227 = vdwg.mxu0
    %v2228 = vmul.f32 %v2223, 0.25
    %v2229 = vmul.f32 %v2226, 0.25
    %v2230 = vadd.f32 %v2228, %v1970
    %v2231 = vadd.f32 %v2229, %v1971
    %v2232 = vsel %vm2129, %v2230, -inf
    %2233 = vmax.xlane.f32.xlu0 %v2232
    %v2234 = vpop.xlane.xlu0 %2233
    %v2235 = vsel %vm2133, %v2231, -inf
    %2236 = vmax.xlane.f32.xlu0 %v2235
    %v2237 = vpop.xlane.xlu0 %2236
    %v2238 = vsub.f32 %v2230, %v2234
    %v2239 = vsub.f32 %v2231, %v2237
    %v2240 = vmul.f32 %v2238, 1.442695
    %v2241 = vpow.pop %v2240
    %v2242 = vmul.f32 %v2239, 1.442695
    %v2243 = vpow.pop %v2242
    %v2244 = vsel %vm2129, %v2241, 0.0
    %2245 = vadd.xlane.f32.xlu0 %v2244
    %v2246 = vpop.xlane.xlu0 %2245
    %v2247 = vsel %vm2133, %v2243, 0.0
    %2248 = vadd.xlane.f32.xlu0 %v2247
    %v2249 = vpop.xlane.xlu0 %2248
    %2250 = vrot.lane.b32.xlu0 %v2080, 48
    %v2251 = vpop.permute.xlu0 %2250
    %2252 = vrot.lane.b32.xlu0 %v2083, 48
    %v2253 = vpop.permute.xlu0 %2252
    %v2256 = vsel %vm2129, %v2241, 0
    %v2259 = vsel %vm2129, %v2243, 0
    %v2261 = vsel %vm2020, %v2253, 0
    %2263 = vmatpush.msra.mxu0 0.0
    %2264 = vmatpush.msra.mxu0 0.0
    %2265 = vmatpush.msra.mxu0 0.0
    %2266 = vmatpush.msra.mxu0 0.0
    %2267 = vmatpush.msra.mxu0 0.0
    %2268 = vmatpush.msra.mxu0 0.0
    %2269 = vmatpush.msra.mxu0 0.0
    %2270 = vmatpush.msra.mxu0 0.0
    %2271 = vmatpush.msra.mxu0 0.0
    %2272 = vmatpush.msra.mxu0 0.0
    %2273 = vmatpush.msra.mxu0 0.0
    %2274 = vmatpush.msra.mxu0 0.0
    %2275 = vmatpush.msra.mxu0 0.0
    %2276 = vmatpush.msra.mxu0 0.0
    %2277 = vmatpush.msra.mxu0 %v2261
    %2278 = vmatpush.msra.mxu0 %v2251
    %2279 = vmatmul.f32.gmra.mxu0 %v2256
    %v2280 = vpop.f32.mrf.mxu0
    %v2281 = vadd.f32 0.0, %v2280
    %2282 = vmatmul.f32.gmra.mxu0 %v2259
    %v2283 = vpop.f32.mrf.mxu0
    %v2284 = vadd.f32 0.0, %v2283
    %2285 = vdwg.mxu0
    %v2286 = vrcp.pop %v2246
    %v2287 = vrcp.pop %v2249
    %v2288 = vmul.f32 %v2281, %v2286
    %v2289 = vmul.f32 %v2284, %v2287
    %2292 = vrot.lane.b32.xlu0 %v2288, 16
    %v2293 = vpop.permute.xlu0 %2292
    %2294 = vrot.lane.b32.xlu0 %v2289, 16
    %v2295 = vpop.permute.xlu0 %2294
    %v2298 = vsel %vm363, %v2187, %v2293
    %v2299 = vsel %vm363, %v2188, %v2295
    %v2301 = vrot.slane %v2083, 3
    %v2302 = vrot.slane %v2086, 3
    %v2303 = vsel %vm182, %v2301, %v2302
    %2304 = vrot.lane.b32.xlu0 %v2303, 96
    %v2305 = vpop.permute.xlu0 %2304
    %2306 = vrot.lane.b32.xlu0 %v2302, 96
    %v2307 = vpop.permute.xlu0 %2306
    %v2308 = vsel %vm363, %v2303, 0
    %v2310 = vsel %vm363, %v2302, 0
    %v2312 = vsel %vm363, %v2305, 0
    %v2314 = vsel %vm363, %v2307, 0
    %2316 = vmatpush.xpose.msra.mxu0 0.0
    %2317 = vmatpush.xpose.msra.mxu0 0.0
    %2318 = vmatpush.xpose.msra.mxu0 0.0
    %2319 = vmatpush.xpose.msra.mxu0 0.0
    %2320 = vmatpush.xpose.msra.mxu0 0.0
    %2321 = vmatpush.xpose.msra.mxu0 0.0
    %2322 = vmatpush.xpose.msra.mxu0 0.0
    %2323 = vmatpush.xpose.msra.mxu0 0.0
    %2324 = vmatpush.xpose.msra.mxu0 0.0
    %2325 = vmatpush.xpose.msra.mxu0 0.0
    %2326 = vmatpush.xpose.msra.mxu0 0.0
    %2327 = vmatpush.xpose.msra.mxu0 0.0
    %2328 = vmatpush.xpose.msra.mxu0 0.0
    %2329 = vmatpush.xpose.msra.mxu0 0.0
    %2330 = vmatpush.xpose.msra.mxu0 %v2314
    %2331 = vmatpush.xpose.msra.mxu0 %v2312
    %2332 = vmatmul.f32.gmra.mxu0 %v2308
    %v2333 = vpop.f32.mrf.mxu0
    %v2334 = vadd.f32 0.0, %v2333
    %2335 = vmatmul.f32.gmra.mxu0 %v2310
    %v2336 = vpop.f32.mrf.mxu0
    %v2337 = vadd.f32 0.0, %v2336
    %2338 = vdwg.mxu0
    %v2339 = vmul.f32 %v2334, 0.25
    %v2340 = vmul.f32 %v2337, 0.25
    %v2341 = vadd.f32 %v2339, %v1970
    %v2342 = vadd.f32 %v2340, %v1971
    %v2343 = vsel %vm2129, %v2341, -inf
    %2344 = vmax.xlane.f32.xlu0 %v2343
    %v2345 = vpop.xlane.xlu0 %2344
    %v2346 = vsel %vm2133, %v2342, -inf
    %2347 = vmax.xlane.f32.xlu0 %v2346
    %v2348 = vpop.xlane.xlu0 %2347
    %v2349 = vsub.f32 %v2341, %v2345
    %v2350 = vsub.f32 %v2342, %v2348
    %v2351 = vmul.f32 %v2349, 1.442695
    %v2352 = vpow.pop %v2351
    %v2353 = vmul.f32 %v2350, 1.442695
    %v2354 = vpow.pop %v2353
    %v2355 = vsel %vm2129, %v2352, 0.0
    %2356 = vadd.xlane.f32.xlu0 %v2355
    %v2357 = vpop.xlane.xlu0 %2356
    %v2358 = vsel %vm2133, %v2354, 0.0
    %2359 = vadd.xlane.f32.xlu0 %v2358
    %v2360 = vpop.xlane.xlu0 %2359
    %2361 = vrot.lane.b32.xlu0 %v2303, 64
    %v2362 = vpop.permute.xlu0 %2361
    %2363 = vrot.lane.b32.xlu0 %v2302, 64
    %v2364 = vpop.permute.xlu0 %2363
    %v2367 = vsel %vm2129, %v2352, 0
    %v2370 = vsel %vm2129, %v2354, 0
    %v2372 = vsel %vm2020, %v2364, 0
    %2374 = vmatpush.msra.mxu0 0.0
    %2375 = vmatpush.msra.mxu0 0.0
    %2376 = vmatpush.msra.mxu0 0.0
    %2377 = vmatpush.msra.mxu0 0.0
    %2378 = vmatpush.msra.mxu0 0.0
    %2379 = vmatpush.msra.mxu0 0.0
    %2380 = vmatpush.msra.mxu0 0.0
    %2381 = vmatpush.msra.mxu0 0.0
    %2382 = vmatpush.msra.mxu0 0.0
    %2383 = vmatpush.msra.mxu0 0.0
    %2384 = vmatpush.msra.mxu0 0.0
    %2385 = vmatpush.msra.mxu0 0.0
    %2386 = vmatpush.msra.mxu0 0.0
    %2387 = vmatpush.msra.mxu0 0.0
    %2388 = vmatpush.msra.mxu0 %v2372
    %2389 = vmatpush.msra.mxu0 %v2362
    %2390 = vmatmul.f32.gmra.mxu0 %v2367
    %v2391 = vpop.f32.mrf.mxu0
    %v2392 = vadd.f32 0.0, %v2391
    %2393 = vmatmul.f32.gmra.mxu0 %v2370
    %v2394 = vpop.f32.mrf.mxu0
    %v2395 = vadd.f32 0.0, %v2394
    %2396 = vdwg.mxu0
    %v2397 = vrcp.pop %v2357
    %v2398 = vrcp.pop %v2360
    %v2399 = vmul.f32 %v2392, %v2397
    %v2400 = vmul.f32 %v2395, %v2398
    %2401 = vrot.lane.b32.xlu0 %v2303, 112
    %v2402 = vpop.permute.xlu0 %2401
    %2403 = vrot.lane.b32.xlu0 %v2302, 112
    %v2404 = vpop.permute.xlu0 %2403
    %2405 = vrot.lane.b32.xlu0 %v2303, 80
    %v2406 = vpop.permute.xlu0 %2405
    %2407 = vrot.lane.b32.xlu0 %v2302, 80
    %v2408 = vpop.permute.xlu0 %2407
    %v2409 = vsel %vm363, %v2402, 0
    %v2411 = vsel %vm363, %v2404, 0
    %v2413 = vsel %vm363, %v2406, 0
    %v2415 = vsel %vm363, %v2408, 0
    %2417 = vmatpush.xpose.msra.mxu0 0.0
    %2418 = vmatpush.xpose.msra.mxu0 0.0
    %2419 = vmatpush.xpose.msra.mxu0 0.0
    %2420 = vmatpush.xpose.msra.mxu0 0.0
    %2421 = vmatpush.xpose.msra.mxu0 0.0
    %2422 = vmatpush.xpose.msra.mxu0 0.0
    %2423 = vmatpush.xpose.msra.mxu0 0.0
    %2424 = vmatpush.xpose.msra.mxu0 0.0
    %2425 = vmatpush.xpose.msra.mxu0 0.0
    %2426 = vmatpush.xpose.msra.mxu0 0.0
    %2427 = vmatpush.xpose.msra.mxu0 0.0
    %2428 = vmatpush.xpose.msra.mxu0 0.0
    %2429 = vmatpush.xpose.msra.mxu0 0.0
    %2430 = vmatpush.xpose.msra.mxu0 0.0
    %2431 = vmatpush.xpose.msra.mxu0 %v2415
    %2432 = vmatpush.xpose.msra.mxu0 %v2413
    %2433 = vmatmul.f32.gmra.mxu0 %v2409
    %v2434 = vpop.f32.mrf.mxu0
    %v2435 = vadd.f32 0.0, %v2434
    %2436 = vmatmul.f32.gmra.mxu0 %v2411
    %v2437 = vpop.f32.mrf.mxu0
    %v2438 = vadd.f32 0.0, %v2437
    %2439 = vdwg.mxu0
    %v2440 = vmul.f32 %v2435, 0.25
    %v2441 = vmul.f32 %v2438, 0.25
    %v2442 = vadd.f32 %v2440, %v1970
    %v2443 = vadd.f32 %v2441, %v1971
    %v2444 = vsel %vm2129, %v2442, -inf
    %2445 = vmax.xlane.f32.xlu0 %v2444
    %v2446 = vpop.xlane.xlu0 %2445
    %v2447 = vsel %vm2133, %v2443, -inf
    %2448 = vmax.xlane.f32.xlu0 %v2447
    %v2449 = vpop.xlane.xlu0 %2448
    %v2450 = vsub.f32 %v2442, %v2446
    %v2451 = vsub.f32 %v2443, %v2449
    %v2452 = vmul.f32 %v2450, 1.442695
    %v2453 = vpow.pop %v2452
    %v2454 = vmul.f32 %v2451, 1.442695
    %v2455 = vpow.pop %v2454
    %v2456 = vsel %vm2129, %v2453, 0.0
    %2457 = vadd.xlane.f32.xlu0 %v2456
    %v2458 = vpop.xlane.xlu0 %2457
    %v2459 = vsel %vm2133, %v2455, 0.0
    %2460 = vadd.xlane.f32.xlu0 %v2459
    %v2461 = vpop.xlane.xlu0 %2460
    %2462 = vrot.lane.b32.xlu0 %v2303, 48
    %v2463 = vpop.permute.xlu0 %2462
    %2464 = vrot.lane.b32.xlu0 %v2302, 48
    %v2465 = vpop.permute.xlu0 %2464
    %v2468 = vsel %vm2129, %v2453, 0
    %v2471 = vsel %vm2129, %v2455, 0
    %v2473 = vsel %vm2020, %v2465, 0
    %2475 = vmatpush.msra.mxu0 0.0
    %2476 = vmatpush.msra.mxu0 0.0
    %2477 = vmatpush.msra.mxu0 0.0
    %2478 = vmatpush.msra.mxu0 0.0
    %2479 = vmatpush.msra.mxu0 0.0
    %2480 = vmatpush.msra.mxu0 0.0
    %2481 = vmatpush.msra.mxu0 0.0
    %2482 = vmatpush.msra.mxu0 0.0
    %2483 = vmatpush.msra.mxu0 0.0
    %2484 = vmatpush.msra.mxu0 0.0
    %2485 = vmatpush.msra.mxu0 0.0
    %2486 = vmatpush.msra.mxu0 0.0
    %2487 = vmatpush.msra.mxu0 0.0
    %2488 = vmatpush.msra.mxu0 0.0
    %2489 = vmatpush.msra.mxu0 %v2473
    %2490 = vmatpush.msra.mxu0 %v2463
    %2491 = vmatmul.f32.gmra.mxu0 %v2468
    %v2492 = vpop.f32.mrf.mxu0
    %v2493 = vadd.f32 0.0, %v2492
    %2494 = vmatmul.f32.gmra.mxu0 %v2471
    %v2495 = vpop.f32.mrf.mxu0
    %v2496 = vadd.f32 0.0, %v2495
    %2497 = vdwg.mxu0
    %v2498 = vrcp.pop %v2458
    %v2499 = vrcp.pop %v2461
    %v2500 = vmul.f32 %v2493, %v2498
    %v2501 = vmul.f32 %v2496, %v2499
    %2504 = vrot.lane.b32.xlu0 %v2500, 16
    %v2505 = vpop.permute.xlu0 %2504
    %2506 = vrot.lane.b32.xlu0 %v2501, 16
    %v2507 = vpop.permute.xlu0 %2506
    %v2510 = vsel %vm363, %v2399, %v2505
    %v2511 = vsel %vm363, %v2400, %v2507
    %v2514 = vrot.slane %v2510, 5
    %v2515 = vrot.slane %v2511, 5
    %v2516 = vsel %vm2020, %v2514, %v2515
    %v2518 = vsel %vm2020, %v2299, %v2514
    %v2520 = vperm.slane %v2032, 0
    %v2523 = vsel %vm321, %v2298, 0
    %v2526 = vsel %vm321, %v2518, 0
    %v2528 = vsel %vm321, %v2516, 0
    %2530 = vmatpush.msra.mxu0 0.0
    %2531 = vmatpush.msra.mxu0 0.0
    %2532 = vmatpush.msra.mxu0 0.0
    %2533 = vmatpush.msra.mxu0 0.0
    %2534 = vmatpush.msra.mxu0 0.0
    %2535 = vmatpush.msra.mxu0 0.0
    %2536 = vmatpush.msra.mxu0 0.0
    %2537 = vmatpush.msra.mxu0 0.0
    %2538 = vmatpush.msra.mxu0 0.0
    %2539 = vmatpush.msra.mxu0 0.0
    %2540 = vmatpush.msra.mxu0 0.0
    %2541 = vmatpush.msra.mxu0 0.0
    %2542 = vmatpush.msra.mxu0 %v2031
    %2543 = vmatpush.msra.mxu0 %v2030
    %2544 = vmatpush.msra.mxu0 %v2029
    %2545 = vmatpush.msra.mxu0 %v2028
    %2546 = vmatmul.f32.gmra.mxu0 %v2523
    %v2547 = vpop.f32.mrf.mxu0
    %v2548 = vadd.f32 %v2520, %v2547
    %2549 = vmatmul.f32.gmra.mxu0 %v2526
    %v2550 = vpop.f32.mrf.mxu0
    %v2551 = vadd.f32 %v2520, %v2550
    %2552 = vmatmul.f32.gmra.mxu0 %v2528
    %v2553 = vpop.f32.mrf.mxu0
    %v2554 = vadd.f32 %v2520, %v2553
    %2555 = vdwg.mxu0
    %v2556 = vadd.f32 %v2019, %v2548
    %v2557 = vadd.f32 %v2022, %v2551
    %v2558 = vadd.f32 %v2016, %v2554
    %v2559 = vsel %vm321, %v2556, 0.0
    %2560 = vadd.xlane.f32.xlu0 %v2559
    %v2561 = vpop.xlane.xlu0 %2560
    %v2562 = vsel %vm321, %v2557, 0.0
    %2563 = vadd.xlane.f32.xlu0 %v2562
    %v2564 = vpop.xlane.xlu0 %2563
    %vm2565 = vcmask 259072
    %v2566 = vsel %vm2565, %v2558, 0.0
    %2567 = vadd.xlane.f32.xlu0 %v2566
    %v2568 = vpop.xlane.xlu0 %2567
    %v2569 = vmul.f32 %v2561, %v846
    %v2570 = vmul.f32 %v2564, %v846
    %v2571 = vmul.f32 %v2568, %v846
    %v2572 = vsub.f32 %v2556, %v2569
    %v2573 = vsub.f32 %v2557, %v2570
    %v2574 = vsub.f32 %v2558, %v2571
    %v2575 = vmul.f32 %v2572, %v2572
    %v2576 = vmul.f32 %v2573, %v2573
    %v2577 = vmul.f32 %v2574, %v2574
    %v2578 = vsel %vm321, %v2575, 0.0
    %2579 = vadd.xlane.f32.xlu0 %v2578
    %v2580 = vpop.xlane.xlu0 %2579
    %v2581 = vsel %vm321, %v2576, 0.0
    %2582 = vadd.xlane.f32.xlu0 %v2581
    %v2583 = vpop.xlane.xlu0 %2582
    %v2584 = vsel %vm2565, %v2577, 0.0
    %2585 = vadd.xlane.f32.xlu0 %v2584
    %v2586 = vpop.xlane.xlu0 %2585
    %v2587 = vmul.f32 %v2580, %v846
    %v2588 = vmul.f32 %v2583, %v846
    %v2589 = vmul.f32 %v2586, %v846
    %v2590 = vadd.f32 %v2587, 1e-05
    %v2591 = vadd.f32 %v2588, 1e-05
    %v2592 = vadd.f32 %v2589, 1e-05
    %v2593 = vrsqrt.pop %v2590
    %v2594 = vmul.f32 %v2593, %v2590
    %v2595 = vmul.f32 %v2594, %v2593
    %v2596 = vmul.f32 0.5, %v2595
    %v2597 = vsub.f32 1.5, %v2596
    %v2598 = vmul.f32 %v2593, %v2597
    %vm2599 = vweird.f32 %v2590
    %vm2600 = vweird.f32 %v2593
    %vm2601 = vmor %vm2599, %vm2600
    %v2602 = vsel %vm2601, %v2593, %v2598
    %v2603 = vrsqrt.pop %v2591
    %v2604 = vmul.f32 %v2603, %v2591
    %v2605 = vmul.f32 %v2604, %v2603
    %v2606 = vmul.f32 0.5, %v2605
    %v2607 = vsub.f32 1.5, %v2606
    %v2608 = vmul.f32 %v2603, %v2607
    %vm2609 = vweird.f32 %v2591
    %vm2610 = vweird.f32 %v2603
    %vm2611 = vmor %vm2609, %vm2610
    %v2612 = vsel %vm2611, %v2603, %v2608
    %v2613 = vrsqrt.pop %v2592
    %v2614 = vmul.f32 %v2613, %v2592
    %v2615 = vmul.f32 %v2614, %v2613
    %v2616 = vmul.f32 0.5, %v2615
    %v2617 = vsub.f32 1.5, %v2616
    %v2618 = vmul.f32 %v2613, %v2617
    %vm2619 = vweird.f32 %v2592
    %vm2620 = vweird.f32 %v2613
    %vm2621 = vmor %vm2619, %vm2620
    %v2622 = vsel %vm2621, %v2613, %v2618
    %v2623 = vmul.f32 %v2572, %v2602
    %v2624 = vmul.f32 %v2573, %v2612
    %v2625 = vmul.f32 %v2574, %v2622
    %v2627 = vperm.slane %v2047, 0
    %v2629 = vmul.f32 %v2623, %v2627
    %v2630 = vmul.f32 %v2624, %v2627
    %v2631 = vmul.f32 %v2625, %v2627
    %v2633 = vperm.slane %v2048, 0
    %v2635 = vadd.f32 %v2629, %v2633
    %v2636 = vadd.f32 %v2630, %v2633
    %v2637 = vadd.f32 %v2631, %v2633
    %v2639 = vperm.slane %v2037, 0
    %v2642 = vsel %vm321, %v2635, 0
    %v2645 = vsel %vm321, %v2636, 0
    %v2648 = vsel %vm321, %v2637, 0
    %2650 = vmatpush.msra.mxu0 0.0
    %2651 = vmatpush.msra.mxu0 0.0
    %2652 = vmatpush.msra.mxu0 0.0
    %2653 = vmatpush.msra.mxu0 0.0
    %2654 = vmatpush.msra.mxu0 0.0
    %2655 = vmatpush.msra.mxu0 0.0
    %2656 = vmatpush.msra.mxu0 0.0
    %2657 = vmatpush.msra.mxu0 0.0
    %2658 = vmatpush.msra.mxu0 0.0
    %2659 = vmatpush.msra.mxu0 0.0
    %2660 = vmatpush.msra.mxu0 0.0
    %2661 = vmatpush.msra.mxu0 0.0
    %2662 = vmatpush.msra.mxu0 %v2036
    %2663 = vmatpush.msra.mxu0 %v2035
    %2664 = vmatpush.msra.mxu0 %v2034
    %2665 = vmatpush.msra.mxu0 %v2033
    %2666 = vmatmul.f32.gmra.mxu0 %v2642
    %v2667 = vpop.f32.mrf.mxu0
    %v2668 = vadd.f32 %v2639, %v2667
    %2669 = vmatmul.f32.gmra.mxu0 %v2645
    %v2670 = vpop.f32.mrf.mxu0
    %v2671 = vadd.f32 %v2639, %v2670
    %2672 = vmatmul.f32.gmra.mxu0 %v2648
    %v2673 = vpop.f32.mrf.mxu0
    %v2674 = vadd.f32 %v2639, %v2673
    %2675 = vdwg.mxu0
    %v2676 = vmul.f32 %v2668, 0.5
    %v2677 = vmul.f32 %v2671, 0.5
    %v2678 = vmul.f32 %v2674, 0.5
    %v2679 = vmul.f32 %v2668, 0.044715
    %v2680 = vmul.f32 %v2671, 0.044715
    %v2681 = vmul.f32 %v2674, 0.044715
    %v2682 = vmul.f32 %v2679, %v2668
    %v2683 = vmul.f32 %v2680, %v2671
    %v2684 = vmul.f32 %v2681, %v2674
    %v2685 = vmul.f32 %v2682, %v2668
    %v2686 = vmul.f32 %v2683, %v2671
    %v2687 = vmul.f32 %v2684, %v2674
    %v2688 = vadd.f32 %v2668, %v2685
    %v2689 = vadd.f32 %v2671, %v2686
    %v2690 = vadd.f32 %v2674, %v2687
    %v2691 = vmul.f32 %v2688, 0.7978846
    %v2692 = vmul.f32 %v2689, 0.7978846
    %v2693 = vmul.f32 %v2690, 0.7978846
    %v2694 = vtanh.pop %v2691
    %v2695 = vtanh.pop %v2692
    %v2696 = vtanh.pop %v2693
    %v2697 = vadd.f32 %v2694, 1.0
    %v2698 = vadd.f32 %v2695, 1.0
    %v2699 = vadd.f32 %v2696, 1.0
    %v2700 = vmul.f32 %v2676, %v2697
    %v2701 = vmul.f32 %v2677, %v2698
    %v2702 = vmul.f32 %v2678, %v2699
    %v2704 = vperm.slane %v2046, 0
    %v2707 = vsel %vm984, %v2700, 0
    %v2710 = vsel %vm984, %v2701, 0
    %v2713 = vsel %vm984, %v2702, 0
    %2715 = vmatpush.msra.mxu0 0.0
    %2716 = vmatpush.msra.mxu0 0.0
    %2717 = vmatpush.msra.mxu0 0.0
    %2718 = vmatpush.msra.mxu0 0.0
    %2719 = vmatpush.msra.mxu0 0.0
    %2720 = vmatpush.msra.mxu0 0.0
    %2721 = vmatpush.msra.mxu0 0.0
    %2722 = vmatpush.msra.mxu0 0.0
    %2723 = vmatpush.msra.mxu0 %v2045
    %2724 = vmatpush.msra.mxu0 %v2044
    %2725 = vmatpush.msra.mxu0 %v2043
    %2726 = vmatpush.msra.mxu0 %v2042
    %2727 = vmatpush.msra.mxu0 %v2041
    %2728 = vmatpush.msra.mxu0 %v2040
    %2729 = vmatpush.msra.mxu0 %v2039
    %2730 = vmatpush.msra.mxu0 %v2038
    %2731 = vmatmul.f32.gmra.mxu0 %v2707
    %v2732 = vpop.f32.mrf.mxu0
    %v2733 = vadd.f32 %v2704, %v2732
    %2734 = vmatmul.f32.gmra.mxu0 %v2710
    %v2735 = vpop.f32.mrf.mxu0
    %v2736 = vadd.f32 %v2704, %v2735
    %2737 = vmatmul.f32.gmra.mxu0 %v2713
    %v2738 = vpop.f32.mrf.mxu0
    %v2739 = vadd.f32 %v2704, %v2738
    %2740 = vdwg.mxu0
    %v2741 = vadd.f32 %v2635, %v2733
    %v2742 = vadd.f32 %v2636, %v2736
    %v2743 = vadd.f32 %v2637, %v2739
    %v2744 = vsel %vm321, %v2741, 0.0
    %2745 = vadd.xlane.f32.xlu0 %v2744
    %v2746 = vpop.xlane.xlu0 %2745
    %v2747 = vsel %vm321, %v2742, 0.0
    %2748 = vadd.xlane.f32.xlu0 %v2747
    %v2749 = vpop.xlane.xlu0 %2748
    %v2750 = vsel %vm2565, %v2743, 0.0
    %2751 = vadd.xlane.f32.xlu0 %v2750
    %v2752 = vpop.xlane.xlu0 %2751
    %v2753 = vmul.f32 %v2746, %v846
    %v2754 = vmul.f32 %v2749, %v846
    %v2755 = vmul.f32 %v2752, %v846
    %v2756 = vsub.f32 %v2741, %v2753
    %v2757 = vsub.f32 %v2742, %v2754
    %v2758 = vsub.f32 %v2743, %v2755
    %v2759 = vmul.f32 %v2756, %v2756
    %v2760 = vmul.f32 %v2757, %v2757
    %v2761 = vmul.f32 %v2758, %v2758
    %v2762 = vsel %vm321, %v2759, 0.0
    %2763 = vadd.xlane.f32.xlu0 %v2762
    %v2764 = vpop.xlane.xlu0 %2763
    %v2765 = vsel %vm321, %v2760, 0.0
    %2766 = vadd.xlane.f32.xlu0 %v2765
    %v2767 = vpop.xlane.xlu0 %2766
    %v2768 = vsel %vm2565, %v2761, 0.0
    %2769 = vadd.xlane.f32.xlu0 %v2768
    %v2770 = vpop.xlane.xlu0 %2769
    %v2771 = vmul.f32 %v2764, %v846
    %v2772 = vmul.f32 %v2767, %v846
    %v2773 = vmul.f32 %v2770, %v846
    %v2774 = vadd.f32 %v2771, 1e-05
    %v2775 = vadd.f32 %v2772, 1e-05
    %v2776 = vadd.f32 %v2773, 1e-05
    %v2777 = vrsqrt.pop %v2774
    %v2778 = vmul.f32 %v2777, %v2774
    %v2779 = vmul.f32 %v2778, %v2777
    %v2780 = vmul.f32 0.5, %v2779
    %v2781 = vsub.f32 1.5, %v2780
    %v2782 = vmul.f32 %v2777, %v2781
    %vm2783 = vweird.f32 %v2774
    %vm2784 = vweird.f32 %v2777
    %vm2785 = vmor %vm2783, %vm2784
    %v2786 = vsel %vm2785, %v2777, %v2782
    %v2787 = vrsqrt.pop %v2775
    %v2788 = vmul.f32 %v2787, %v2775
    %v2789 = vmul.f32 %v2788, %v2787
    %v2790 = vmul.f32 0.5, %v2789
    %v2791 = vsub.f32 1.5, %v2790
    %v2792 = vmul.f32 %v2787, %v2791
    %vm2793 = vweird.f32 %v2775
    %vm2794 = vweird.f32 %v2787
    %vm2795 = vmor %vm2793, %vm2794
    %v2796 = vsel %vm2795, %v2787, %v2792
    %v2797 = vrsqrt.pop %v2776
    %v2798 = vmul.f32 %v2797, %v2776
    %v2799 = vmul.f32 %v2798, %v2797
    %v2800 = vmul.f32 0.5, %v2799
    %v2801 = vsub.f32 1.5, %v2800
    %v2802 = vmul.f32 %v2797, %v2801
    %vm2803 = vweird.f32 %v2776
    %vm2804 = vweird.f32 %v2797
    %vm2805 = vmor %vm2803, %vm2804
    %v2806 = vsel %vm2805, %v2797, %v2802
    %v2807 = vmul.f32 %v2756, %v2786
    %v2808 = vmul.f32 %v2757, %v2796
    %v2809 = vmul.f32 %v2758, %v2806
    %v2811 = vperm.slane %v2049, 0
    %v2813 = vmul.f32 %v2807, %v2811
    %v2814 = vmul.f32 %v2808, %v2811
    %v2815 = vmul.f32 %v2809, %v2811
    %v2817 = vperm.slane %v2050, 0
    %v2819 = vadd.f32 %v2813, %v2817
    %v2820 = vadd.f32 %v2814, %v2817
    %v2821 = vadd.f32 %v2815, %v2817
    %vm2824 = vcmask 1046528
    %v2825 = vrot.slane %v2819, 1
    %v2826 = vrot.slane %v2820, 1
    %v2827 = vsel %vm2824, %v2825, %v2826
    %v2830 = vrot.slane %v2820, 2
    %v2831 = vrot.slane %v2821, 2
    %v2832 = vsel %vm221, %v2830, %v2831
    %v2834 = vsel %vm258, %v2826, %v2832
    %s2835 = scalar_lea.vmem %s77, 32
    %v2836 = vld [vmem:[%s2835] sm:$0xff]
    %v2837 = vld [vmem:[%s2835 + $0x8] sm:$0xff]
    %v2838 = vld [vmem:[%s2835 + $0x10] sm:$0xff]
    %v2839 = vld [vmem:[%s2835 + $0x18] sm:$0xff]
    %s2840 = scalar_lea.vmem %s79, 1
    %v2841 = vld [vmem:[%s2840] sm:$0x1]
    %v2843 = vperm.slane %v2841, 0
    %2845 = vmatpush.msra.mxu0 0.0
    %2846 = vmatpush.msra.mxu0 0.0
    %2847 = vmatpush.msra.mxu0 0.0
    %2848 = vmatpush.msra.mxu0 0.0
    %2849 = vmatpush.msra.mxu0 0.0
    %2850 = vmatpush.msra.mxu0 0.0
    %2851 = vmatpush.msra.mxu0 0.0
    %2852 = vmatpush.msra.mxu0 0.0
    %2853 = vmatpush.msra.mxu0 0.0
    %2854 = vmatpush.msra.mxu0 0.0
    %2855 = vmatpush.msra.mxu0 0.0
    %2856 = vmatpush.msra.mxu0 0.0
    %2857 = vmatpush.msra.mxu0 %v2839
    %2858 = vmatpush.msra.mxu0 %v2838
    %2859 = vmatpush.msra.mxu0 %v2837
    %2860 = vmatpush.msra.mxu0 %v2836
    %2861 = vmatmul.f32.gmra.mxu0 %v1981
    %v2862 = vpop.f32.mrf.mxu0
    %v2863 = vadd.f32 %v2843, %v2862
    %2864 = vdwg.mxu0
    %v2866 = vrot.slane %v2827, 7
    %v2867 = vrot.slane %v2834, 7
    %v2868 = vsel %vm277, %v2866, %v2867
    %v2872 = vrot.slane %v2863, 6
    %v2874 = vrot.slane %v2834, 6
    %v2875 = vrot.slane %v2831, 6
    %v2876 = vsel %vm258, %v2874, %v2875
    %v2879 = vsel %vm277, %v2863, %v2866
    %v2880 = vsel %vm2020, %v2868, %v2872
    %v2881 = vsel %vm271, %v2880, %v2874
    %s2882 = scalar_lea.vmem %s53, 32
    %v2883 = vld [vmem:[%s2882] sm:$0xff]
    %v2884 = vld [vmem:[%s2882 + $0x8] sm:$0xff]
    %v2885 = vld [vmem:[%s2882 + $0x10] sm:$0xff]
    %v2886 = vld [vmem:[%s2882 + $0x18] sm:$0xff]
    %s2887 = scalar_lea.vmem %s55, 1
    %v2888 = vld [vmem:[%s2887] sm:$0x1]
    %s2889 = scalar_lea.vmem %s57, 32
    %v2890 = vld [vmem:[%s2889] sm:$0xff]
    %v2891 = vld [vmem:[%s2889 + $0x8] sm:$0xff]
    %v2892 = vld [vmem:[%s2889 + $0x10] sm:$0xff]
    %v2893 = vld [vmem:[%s2889 + $0x18] sm:$0xff]
    %s2894 = scalar_lea.vmem %s59, 1
    %v2895 = vld [vmem:[%s2894] sm:$0x1]
    %s2896 = scalar_lea.vmem %s61, 32
    %v2897 = vld [vmem:[%s2896] sm:$0xff]
    %v2898 = vld [vmem:[%s2896 + $0x8] sm:$0xff]
    %v2899 = vld [vmem:[%s2896 + $0x10] sm:$0xff]
    %v2900 = vld [vmem:[%s2896 + $0x18] sm:$0xff]
    %s2901 = scalar_lea.vmem %s63, 1
    %v2902 = vld [vmem:[%s2901] sm:$0x1]
    %s2903 = scalar_lea.vmem %s65, 64
    %v2904 = vld [vmem:[%s2903] sm:$0xff]
    %v2905 = vld [vmem:[%s2903 + $0x8] sm:$0xff]
    %v2906 = vld [vmem:[%s2903 + $0x10] sm:$0xff]
    %v2907 = vld [vmem:[%s2903 + $0x18] sm:$0xff]
    %v2908 = vld [vmem:[%s2903 + $0x20] sm:$0xff]
    %v2909 = vld [vmem:[%s2903 + $0x28] sm:$0xff]
    %v2910 = vld [vmem:[%s2903 + $0x30] sm:$0xff]
    %v2911 = vld [vmem:[%s2903 + $0x38] sm:$0xff]
    %s2912 = scalar_lea.vmem %s67, 1
    %v2913 = vld [vmem:[%s2912] sm:$0x1]
    %s2914 = scalar_lea.vmem %s69, 1
    %v2915 = vld [vmem:[%s2914] sm:$0x1]
    %s2916 = scalar_lea.vmem %s71, 1
    %v2917 = vld [vmem:[%s2916] sm:$0x1]
    %s2918 = scalar_lea.vmem %s73, 1
    %v2919 = vld [vmem:[%s2918] sm:$0x1]
    %s2920 = scalar_lea.vmem %s75, 1
    %v2921 = vld [vmem:[%s2920] sm:$0x1]
    %v2923 = vperm.slane %v2888, 0
    %v2926 = vsel %vm321, %v2879, 0
    %v2929 = vsel %vm321, %v2881, 0
    %v2931 = vsel %vm321, %v2876, 0
    %2933 = vmatpush.msra.mxu0 0.0
    %2934 = vmatpush.msra.mxu0 0.0
    %2935 = vmatpush.msra.mxu0 0.0
    %2936 = vmatpush.msra.mxu0 0.0
    %2937 = vmatpush.msra.mxu0 0.0
    %2938 = vmatpush.msra.mxu0 0.0
    %2939 = vmatpush.msra.mxu0 0.0
    %2940 = vmatpush.msra.mxu0 0.0
    %2941 = vmatpush.msra.mxu0 0.0
    %2942 = vmatpush.msra.mxu0 0.0
    %2943 = vmatpush.msra.mxu0 0.0
    %2944 = vmatpush.msra.mxu0 0.0
    %2945 = vmatpush.msra.mxu0 %v2886
    %2946 = vmatpush.msra.mxu0 %v2885
    %2947 = vmatpush.msra.mxu0 %v2884
    %2948 = vmatpush.msra.mxu0 %v2883
    %2949 = vmatmul.f32.gmra.mxu0 %v2926
    %v2950 = vpop.f32.mrf.mxu0
    %v2951 = vadd.f32 %v2923, %v2950
    %2952 = vmatmul.f32.gmra.mxu0 %v2929
    %v2953 = vpop.f32.mrf.mxu0
    %v2954 = vadd.f32 %v2923, %v2953
    %2955 = vmatmul.f32.gmra.mxu0 %v2931
    %v2956 = vpop.f32.mrf.mxu0
    %v2957 = vadd.f32 %v2923, %v2956
    %2958 = vdwg.mxu0
    %2961 = vrot.lane.b32.xlu0 %v2951, 96
    %v2962 = vpop.permute.xlu0 %2961
    %2963 = vrot.lane.b32.xlu0 %v2954, 96
    %v2964 = vpop.permute.xlu0 %2963
    %v2965 = vsel %vm363, %v2951, 0
    %v2967 = vsel %vm363, %v2954, 0
    %v2969 = vsel %vm363, %v2962, 0
    %v2971 = vsel %vm363, %v2964, 0
    %2973 = vmatpush.xpose.msra.mxu0 0.0
    %2974 = vmatpush.xpose.msra.mxu0 0.0
    %2975 = vmatpush.xpose.msra.mxu0 0.0
    %2976 = vmatpush.xpose.msra.mxu0 0.0
    %2977 = vmatpush.xpose.msra.mxu0 0.0
    %2978 = vmatpush.xpose.msra.mxu0 0.0
    %2979 = vmatpush.xpose.msra.mxu0 0.0
    %2980 = vmatpush.xpose.msra.mxu0 0.0
    %2981 = vmatpush.xpose.msra.mxu0 0.0
    %2982 = vmatpush.xpose.msra.mxu0 0.0
    %2983 = vmatpush.xpose.msra.mxu0 0.0
    %2984 = vmatpush.xpose.msra.mxu0 0.0
    %2985 = vmatpush.xpose.msra.mxu0 0.0
    %2986 = vmatpush.xpose.msra.mxu0 0.0
    %2987 = vmatpush.xpose.msra.mxu0 %v2971
    %2988 = vmatpush.xpose.msra.mxu0 %v2969
    %2989 = vmatmul.f32.gmra.mxu0 %v2965
    %v2990 = vpop.f32.mrf.mxu0
    %v2991 = vadd.f32 0.0, %v2990
    %2992 = vmatmul.f32.gmra.mxu0 %v2967
    %v2993 = vpop.f32.mrf.mxu0
    %v2994 = vadd.f32 0.0, %v2993
    %2995 = vdwg.mxu0
    %v2996 = vmul.f32 %v2991, 0.25
    %v2997 = vmul.f32 %v2994, 0.25
    %v2998 = vadd.f32 %v2996, %v1970
    %v2999 = vadd.f32 %v2997, %v1971
    %v3000 = vsel %vm2129, %v2998, -inf
    %3001 = vmax.xlane.f32.xlu0 %v3000
    %v3002 = vpop.xlane.xlu0 %3001
    %v3003 = vsel %vm2133, %v2999, -inf
    %3004 = vmax.xlane.f32.xlu0 %v3003
    %v3005 = vpop.xlane.xlu0 %3004
    %v3006 = vsub.f32 %v2998, %v3002
    %v3007 = vsub.f32 %v2999, %v3005
    %v3008 = vmul.f32 %v3006, 1.442695
    %v3009 = vpow.pop %v3008
    %v3010 = vmul.f32 %v3007, 1.442695
    %v3011 = vpow.pop %v3010
    %v3012 = vsel %vm2129, %v3009, 0.0
    %3013 = vadd.xlane.f32.xlu0 %v3012
    %v3014 = vpop.xlane.xlu0 %3013
    %v3015 = vsel %vm2133, %v3011, 0.0
    %3016 = vadd.xlane.f32.xlu0 %v3015
    %v3017 = vpop.xlane.xlu0 %3016
    %3018 = vrot.lane.b32.xlu0 %v2951, 64
    %v3019 = vpop.permute.xlu0 %3018
    %3020 = vrot.lane.b32.xlu0 %v2954, 64
    %v3021 = vpop.permute.xlu0 %3020
    %v3024 = vsel %vm2129, %v3009, 0
    %v3027 = vsel %vm2129, %v3011, 0
    %v3029 = vsel %vm2020, %v3021, 0
    %3031 = vmatpush.msra.mxu0 0.0
    %3032 = vmatpush.msra.mxu0 0.0
    %3033 = vmatpush.msra.mxu0 0.0
    %3034 = vmatpush.msra.mxu0 0.0
    %3035 = vmatpush.msra.mxu0 0.0
    %3036 = vmatpush.msra.mxu0 0.0
    %3037 = vmatpush.msra.mxu0 0.0
    %3038 = vmatpush.msra.mxu0 0.0
    %3039 = vmatpush.msra.mxu0 0.0
    %3040 = vmatpush.msra.mxu0 0.0
    %3041 = vmatpush.msra.mxu0 0.0
    %3042 = vmatpush.msra.mxu0 0.0
    %3043 = vmatpush.msra.mxu0 0.0
    %3044 = vmatpush.msra.mxu0 0.0
    %3045 = vmatpush.msra.mxu0 %v3029
    %3046 = vmatpush.msra.mxu0 %v3019
    %3047 = vmatmul.f32.gmra.mxu0 %v3024
    %v3048 = vpop.f32.mrf.mxu0
    %v3049 = vadd.f32 0.0, %v3048
    %3050 = vmatmul.f32.gmra.mxu0 %v3027
    %v3051 = vpop.f32.mrf.mxu0
    %v3052 = vadd.f32 0.0, %v3051
    %3053 = vdwg.mxu0
    %v3054 = vrcp.pop %v3014
    %v3055 = vrcp.pop %v3017
    %v3056 = vmul.f32 %v3049, %v3054
    %v3057 = vmul.f32 %v3052, %v3055
    %3058 = vrot.lane.b32.xlu0 %v2951, 112
    %v3059 = vpop.permute.xlu0 %3058
    %3060 = vrot.lane.b32.xlu0 %v2954, 112
    %v3061 = vpop.permute.xlu0 %3060
    %3062 = vrot.lane.b32.xlu0 %v2951, 80
    %v3063 = vpop.permute.xlu0 %3062
    %3064 = vrot.lane.b32.xlu0 %v2954, 80
    %v3065 = vpop.permute.xlu0 %3064
    %v3066 = vsel %vm363, %v3059, 0
    %v3068 = vsel %vm363, %v3061, 0
    %v3070 = vsel %vm363, %v3063, 0
    %v3072 = vsel %vm363, %v3065, 0
    %3074 = vmatpush.xpose.msra.mxu0 0.0
    %3075 = vmatpush.xpose.msra.mxu0 0.0
    %3076 = vmatpush.xpose.msra.mxu0 0.0
    %3077 = vmatpush.xpose.msra.mxu0 0.0
    %3078 = vmatpush.xpose.msra.mxu0 0.0
    %3079 = vmatpush.xpose.msra.mxu0 0.0
    %3080 = vmatpush.xpose.msra.mxu0 0.0
    %3081 = vmatpush.xpose.msra.mxu0 0.0
    %3082 = vmatpush.xpose.msra.mxu0 0.0
    %3083 = vmatpush.xpose.msra.mxu0 0.0
    %3084 = vmatpush.xpose.msra.mxu0 0.0
    %3085 = vmatpush.xpose.msra.mxu0 0.0
    %3086 = vmatpush.xpose.msra.mxu0 0.0
    %3087 = vmatpush.xpose.msra.mxu0 0.0
    %3088 = vmatpush.xpose.msra.mxu0 %v3072
    %3089 = vmatpush.xpose.msra.mxu0 %v3070
    %3090 = vmatmul.f32.gmra.mxu0 %v3066
    %v3091 = vpop.f32.mrf.mxu0
    %v3092 = vadd.f32 0.0, %v3091
    %3093 = vmatmul.f32.gmra.mxu0 %v3068
    %v3094 = vpop.f32.mrf.mxu0
    %v3095 = vadd.f32 0.0, %v3094
    %3096 = vdwg.mxu0
    %v3097 = vmul.f32 %v3092, 0.25
    %v3098 = vmul.f32 %v3095, 0.25
    %v3099 = vadd.f32 %v3097, %v1970
    %v3100 = vadd.f32 %v3098, %v1971
    %v3101 = vsel %vm2129, %v3099, -inf
    %3102 = vmax.xlane.f32.xlu0 %v3101
    %v3103 = vpop.xlane.xlu0 %3102
    %v3104 = vsel %vm2133, %v3100, -inf
    %3105 = vmax.xlane.f32.xlu0 %v3104
    %v3106 = vpop.xlane.xlu0 %3105
    %v3107 = vsub.f32 %v3099, %v3103
    %v3108 = vsub.f32 %v3100, %v3106
    %v3109 = vmul.f32 %v3107, 1.442695
    %v3110 = vpow.pop %v3109
    %v3111 = vmul.f32 %v3108, 1.442695
    %v3112 = vpow.pop %v3111
    %v3113 = vsel %vm2129, %v3110, 0.0
    %3114 = vadd.xlane.f32.xlu0 %v3113
    %v3115 = vpop.xlane.xlu0 %3114
    %v3116 = vsel %vm2133, %v3112, 0.0
    %3117 = vadd.xlane.f32.xlu0 %v3116
    %v3118 = vpop.xlane.xlu0 %3117
    %3119 = vrot.lane.b32.xlu0 %v2951, 48
    %v3120 = vpop.permute.xlu0 %3119
    %3121 = vrot.lane.b32.xlu0 %v2954, 48
    %v3122 = vpop.permute.xlu0 %3121
    %v3125 = vsel %vm2129, %v3110, 0
    %v3128 = vsel %vm2129, %v3112, 0
    %v3130 = vsel %vm2020, %v3122, 0
    %3132 = vmatpush.msra.mxu0 0.0
    %3133 = vmatpush.msra.mxu0 0.0
    %3134 = vmatpush.msra.mxu0 0.0
    %3135 = vmatpush.msra.mxu0 0.0
    %3136 = vmatpush.msra.mxu0 0.0
    %3137 = vmatpush.msra.mxu0 0.0
    %3138 = vmatpush.msra.mxu0 0.0
    %3139 = vmatpush.msra.mxu0 0.0
    %3140 = vmatpush.msra.mxu0 0.0
    %3141 = vmatpush.msra.mxu0 0.0
    %3142 = vmatpush.msra.mxu0 0.0
    %3143 = vmatpush.msra.mxu0 0.0
    %3144 = vmatpush.msra.mxu0 0.0
    %3145 = vmatpush.msra.mxu0 0.0
    %3146 = vmatpush.msra.mxu0 %v3130
    %3147 = vmatpush.msra.mxu0 %v3120
    %3148 = vmatmul.f32.gmra.mxu0 %v3125
    %v3149 = vpop.f32.mrf.mxu0
    %v3150 = vadd.f32 0.0, %v3149
    %3151 = vmatmul.f32.gmra.mxu0 %v3128
    %v3152 = vpop.f32.mrf.mxu0
    %v3153 = vadd.f32 0.0, %v3152
    %3154 = vdwg.mxu0
    %v3155 = vrcp.pop %v3115
    %v3156 = vrcp.pop %v3118
    %v3157 = vmul.f32 %v3150, %v3155
    %v3158 = vmul.f32 %v3153, %v3156
    %3161 = vrot.lane.b32.xlu0 %v3157, 16
    %v3162 = vpop.permute.xlu0 %3161
    %3163 = vrot.lane.b32.xlu0 %v3158, 16
    %v3164 = vpop.permute.xlu0 %3163
    %v3167 = vsel %vm363, %v3056, %v3162
    %v3168 = vsel %vm363, %v3057, %v3164
    %v3170 = vrot.slane %v2954, 3
    %v3171 = vrot.slane %v2957, 3
    %v3172 = vsel %vm182, %v3170, %v3171
    %3173 = vrot.lane.b32.xlu0 %v3172, 96
    %v3174 = vpop.permute.xlu0 %3173
    %3175 = vrot.lane.b32.xlu0 %v3171, 96
    %v3176 = vpop.permute.xlu0 %3175
    %v3177 = vsel %vm363, %v3172, 0
    %v3179 = vsel %vm363, %v3171, 0
    %v3181 = vsel %vm363, %v3174, 0
    %v3183 = vsel %vm363, %v3176, 0
    %3185 = vmatpush.xpose.msra.mxu0 0.0
    %3186 = vmatpush.xpose.msra.mxu0 0.0
    %3187 = vmatpush.xpose.msra.mxu0 0.0
    %3188 = vmatpush.xpose.msra.mxu0 0.0
    %3189 = vmatpush.xpose.msra.mxu0 0.0
    %3190 = vmatpush.xpose.msra.mxu0 0.0
    %3191 = vmatpush.xpose.msra.mxu0 0.0
    %3192 = vmatpush.xpose.msra.mxu0 0.0
    %3193 = vmatpush.xpose.msra.mxu0 0.0
    %3194 = vmatpush.xpose.msra.mxu0 0.0
    %3195 = vmatpush.xpose.msra.mxu0 0.0
    %3196 = vmatpush.xpose.msra.mxu0 0.0
    %3197 = vmatpush.xpose.msra.mxu0 0.0
    %3198 = vmatpush.xpose.msra.mxu0 0.0
    %3199 = vmatpush.xpose.msra.mxu0 %v3183
    %3200 = vmatpush.xpose.msra.mxu0 %v3181
    %3201 = vmatmul.f32.gmra.mxu0 %v3177
    %v3202 = vpop.f32.mrf.mxu0
    %v3203 = vadd.f32 0.0, %v3202
    %3204 = vmatmul.f32.gmra.mxu0 %v3179
    %v3205 = vpop.f32.mrf.mxu0
    %v3206 = vadd.f32 0.0, %v3205
    %3207 = vdwg.mxu0
    %v3208 = vmul.f32 %v3203, 0.25
    %v3209 = vmul.f32 %v3206, 0.25
    %v3210 = vadd.f32 %v3208, %v1970
    %v3211 = vadd.f32 %v3209, %v1971
    %v3212 = vsel %vm2129, %v3210, -inf
    %3213 = vmax.xlane.f32.xlu0 %v3212
    %v3214 = vpop.xlane.xlu0 %3213
    %v3215 = vsel %vm2133, %v3211, -inf
    %3216 = vmax.xlane.f32.xlu0 %v3215
    %v3217 = vpop.xlane.xlu0 %3216
    %v3218 = vsub.f32 %v3210, %v3214
    %v3219 = vsub.f32 %v3211, %v3217
    %v3220 = vmul.f32 %v3218, 1.442695
    %v3221 = vpow.pop %v3220
    %v3222 = vmul.f32 %v3219, 1.442695
    %v3223 = vpow.pop %v3222
    %v3224 = vsel %vm2129, %v3221, 0.0
    %3225 = vadd.xlane.f32.xlu0 %v3224
    %v3226 = vpop.xlane.xlu0 %3225
    %v3227 = vsel %vm2133, %v3223, 0.0
    %3228 = vadd.xlane.f32.xlu0 %v3227
    %v3229 = vpop.xlane.xlu0 %3228
    %3230 = vrot.lane.b32.xlu0 %v3172, 64
    %v3231 = vpop.permute.xlu0 %3230
    %3232 = vrot.lane.b32.xlu0 %v3171, 64
    %v3233 = vpop.permute.xlu0 %3232
    %v3236 = vsel %vm2129, %v3221, 0
    %v3239 = vsel %vm2129, %v3223, 0
    %v3241 = vsel %vm2020, %v3233, 0
    %3243 = vmatpush.msra.mxu0 0.0
    %3244 = vmatpush.msra.mxu0 0.0
    %3245 = vmatpush.msra.mxu0 0.0
    %3246 = vmatpush.msra.mxu0 0.0
    %3247 = vmatpush.msra.mxu0 0.0
    %3248 = vmatpush.msra.mxu0 0.0
    %3249 = vmatpush.msra.mxu0 0.0
    %3250 = vmatpush.msra.mxu0 0.0
    %3251 = vmatpush.msra.mxu0 0.0
    %3252 = vmatpush.msra.mxu0 0.0
    %3253 = vmatpush.msra.mxu0 0.0
    %3254 = vmatpush.msra.mxu0 0.0
    %3255 = vmatpush.msra.mxu0 0.0
    %3256 = vmatpush.msra.mxu0 0.0
    %3257 = vmatpush.msra.mxu0 %v3241
    %3258 = vmatpush.msra.mxu0 %v3231
    %3259 = vmatmul.f32.gmra.mxu0 %v3236
    %v3260 = vpop.f32.mrf.mxu0
    %v3261 = vadd.f32 0.0, %v3260
    %3262 = vmatmul.f32.gmra.mxu0 %v3239
    %v3263 = vpop.f32.mrf.mxu0
    %v3264 = vadd.f32 0.0, %v3263
    %3265 = vdwg.mxu0
    %v3266 = vrcp.pop %v3226
    %v3267 = vrcp.pop %v3229
    %v3268 = vmul.f32 %v3261, %v3266
    %v3269 = vmul.f32 %v3264, %v3267
    %3270 = vrot.lane.b32.xlu0 %v3172, 112
    %v3271 = vpop.permute.xlu0 %3270
    %3272 = vrot.lane.b32.xlu0 %v3171, 112
    %v3273 = vpop.permute.xlu0 %3272
    %3274 = vrot.lane.b32.xlu0 %v3172, 80
    %v3275 = vpop.permute.xlu0 %3274
    %3276 = vrot.lane.b32.xlu0 %v3171, 80
    %v3277 = vpop.permute.xlu0 %3276
    %v3278 = vsel %vm363, %v3271, 0
    %v3280 = vsel %vm363, %v3273, 0
    %v3282 = vsel %vm363, %v3275, 0
    %v3284 = vsel %vm363, %v3277, 0
    %3286 = vmatpush.xpose.msra.mxu0 0.0
    %3287 = vmatpush.xpose.msra.mxu0 0.0
    %3288 = vmatpush.xpose.msra.mxu0 0.0
    %3289 = vmatpush.xpose.msra.mxu0 0.0
    %3290 = vmatpush.xpose.msra.mxu0 0.0
    %3291 = vmatpush.xpose.msra.mxu0 0.0
    %3292 = vmatpush.xpose.msra.mxu0 0.0
    %3293 = vmatpush.xpose.msra.mxu0 0.0
    %3294 = vmatpush.xpose.msra.mxu0 0.0
    %3295 = vmatpush.xpose.msra.mxu0 0.0
    %3296 = vmatpush.xpose.msra.mxu0 0.0
    %3297 = vmatpush.xpose.msra.mxu0 0.0
    %3298 = vmatpush.xpose.msra.mxu0 0.0
    %3299 = vmatpush.xpose.msra.mxu0 0.0
    %3300 = vmatpush.xpose.msra.mxu0 %v3284
    %3301 = vmatpush.xpose.msra.mxu0 %v3282
    %3302 = vmatmul.f32.gmra.mxu0 %v3278
    %v3303 = vpop.f32.mrf.mxu0
    %v3304 = vadd.f32 0.0, %v3303
    %3305 = vmatmul.f32.gmra.mxu0 %v3280
    %v3306 = vpop.f32.mrf.mxu0
    %v3307 = vadd.f32 0.0, %v3306
    %3308 = vdwg.mxu0
    %v3309 = vmul.f32 %v3304, 0.25
    %v3310 = vmul.f32 %v3307, 0.25
    %v3311 = vadd.f32 %v3309, %v1970
    %v3312 = vadd.f32 %v3310, %v1971
    %v3313 = vsel %vm2129, %v3311, -inf
    %3314 = vmax.xlane.f32.xlu0 %v3313
    %v3315 = vpop.xlane.xlu0 %3314
    %v3316 = vsel %vm2133, %v3312, -inf
    %3317 = vmax.xlane.f32.xlu0 %v3316
    %v3318 = vpop.xlane.xlu0 %3317
    %v3319 = vsub.f32 %v3311, %v3315
    %v3320 = vsub.f32 %v3312, %v3318
    %v3321 = vmul.f32 %v3319, 1.442695
    %v3322 = vpow.pop %v3321
    %v3323 = vmul.f32 %v3320, 1.442695
    %v3324 = vpow.pop %v3323
    %v3325 = vsel %vm2129, %v3322, 0.0
    %3326 = vadd.xlane.f32.xlu0 %v3325
    %v3327 = vpop.xlane.xlu0 %3326
    %v3328 = vsel %vm2133, %v3324, 0.0
    %3329 = vadd.xlane.f32.xlu0 %v3328
    %v3330 = vpop.xlane.xlu0 %3329
    %3331 = vrot.lane.b32.xlu0 %v3172, 48
    %v3332 = vpop.permute.xlu0 %3331
    %3333 = vrot.lane.b32.xlu0 %v3171, 48
    %v3334 = vpop.permute.xlu0 %3333
    %v3337 = vsel %vm2129, %v3322, 0
    %v3340 = vsel %vm2129, %v3324, 0
    %v3342 = vsel %vm2020, %v3334, 0
    %3344 = vmatpush.msra.mxu0 0.0
    %3345 = vmatpush.msra.mxu0 0.0
    %3346 = vmatpush.msra.mxu0 0.0
    %3347 = vmatpush.msra.mxu0 0.0
    %3348 = vmatpush.msra.mxu0 0.0
    %3349 = vmatpush.msra.mxu0 0.0
    %3350 = vmatpush.msra.mxu0 0.0
    %3351 = vmatpush.msra.mxu0 0.0
    %3352 = vmatpush.msra.mxu0 0.0
    %3353 = vmatpush.msra.mxu0 0.0
    %3354 = vmatpush.msra.mxu0 0.0
    %3355 = vmatpush.msra.mxu0 0.0
    %3356 = vmatpush.msra.mxu0 0.0
    %3357 = vmatpush.msra.mxu0 0.0
    %3358 = vmatpush.msra.mxu0 %v3342
    %3359 = vmatpush.msra.mxu0 %v3332
    %3360 = vmatmul.f32.gmra.mxu0 %v3337
    %v3361 = vpop.f32.mrf.mxu0
    %v3362 = vadd.f32 0.0, %v3361
    %3363 = vmatmul.f32.gmra.mxu0 %v3340
    %v3364 = vpop.f32.mrf.mxu0
    %v3365 = vadd.f32 0.0, %v3364
    %3366 = vdwg.mxu0
    %v3367 = vrcp.pop %v3327
    %v3368 = vrcp.pop %v3330
    %v3369 = vmul.f32 %v3362, %v3367
    %v3370 = vmul.f32 %v3365, %v3368
    %3373 = vrot.lane.b32.xlu0 %v3369, 16
    %v3374 = vpop.permute.xlu0 %3373
    %3375 = vrot.lane.b32.xlu0 %v3370, 16
    %v3376 = vpop.permute.xlu0 %3375
    %v3379 = vsel %vm363, %v3268, %v3374
    %v3380 = vsel %vm363, %v3269, %v3376
    %v3383 = vrot.slane %v3379, 5
    %v3384 = vrot.slane %v3380, 5
    %v3385 = vsel %vm2020, %v3383, %v3384
    %v3387 = vsel %vm2020, %v3168, %v3383
    %v3389 = vperm.slane %v2895, 0
    %v3392 = vsel %vm321, %v3167, 0
    %v3395 = vsel %vm321, %v3387, 0
    %v3397 = vsel %vm321, %v3385, 0
    %3399 = vmatpush.msra.mxu0 0.0
    %3400 = vmatpush.msra.mxu0 0.0
    %3401 = vmatpush.msra.mxu0 0.0
    %3402 = vmatpush.msra.mxu0 0.0
    %3403 = vmatpush.msra.mxu0 0.0
    %3404 = vmatpush.msra.mxu0 0.0
    %3405 = vmatpush.msra.mxu0 0.0
    %3406 = vmatpush.msra.mxu0 0.0
    %3407 = vmatpush.msra.mxu0 0.0
    %3408 = vmatpush.msra.mxu0 0.0
    %3409 = vmatpush.msra.mxu0 0.0
    %3410 = vmatpush.msra.mxu0 0.0
    %3411 = vmatpush.msra.mxu0 %v2893
    %3412 = vmatpush.msra.mxu0 %v2892
    %3413 = vmatpush.msra.mxu0 %v2891
    %3414 = vmatpush.msra.mxu0 %v2890
    %3415 = vmatmul.f32.gmra.mxu0 %v3392
    %v3416 = vpop.f32.mrf.mxu0
    %v3417 = vadd.f32 %v3389, %v3416
    %3418 = vmatmul.f32.gmra.mxu0 %v3395
    %v3419 = vpop.f32.mrf.mxu0
    %v3420 = vadd.f32 %v3389, %v3419
    %3421 = vmatmul.f32.gmra.mxu0 %v3397
    %v3422 = vpop.f32.mrf.mxu0
    %v3423 = vadd.f32 %v3389, %v3422
    %3424 = vdwg.mxu0
    %v3425 = vadd.f32 %v2879, %v3417
    %v3426 = vadd.f32 %v2881, %v3420
    %v3427 = vadd.f32 %v2876, %v3423
    %v3428 = vsel %vm321, %v3425, 0.0
    %3429 = vadd.xlane.f32.xlu0 %v3428
    %v3430 = vpop.xlane.xlu0 %3429
    %v3431 = vsel %vm321, %v3426, 0.0
    %3432 = vadd.xlane.f32.xlu0 %v3431
    %v3433 = vpop.xlane.xlu0 %3432
    %v3434 = vsel %vm2565, %v3427, 0.0
    %3435 = vadd.xlane.f32.xlu0 %v3434
    %v3436 = vpop.xlane.xlu0 %3435
    %v3437 = vmul.f32 %v3430, %v846
    %v3438 = vmul.f32 %v3433, %v846
    %v3439 = vmul.f32 %v3436, %v846
    %v3440 = vsub.f32 %v3425, %v3437
    %v3441 = vsub.f32 %v3426, %v3438
    %v3442 = vsub.f32 %v3427, %v3439
    %v3443 = vmul.f32 %v3440, %v3440
    %v3444 = vmul.f32 %v3441, %v3441
    %v3445 = vmul.f32 %v3442, %v3442
    %v3446 = vsel %vm321, %v3443, 0.0
    %3447 = vadd.xlane.f32.xlu0 %v3446
    %v3448 = vpop.xlane.xlu0 %3447
    %v3449 = vsel %vm321, %v3444, 0.0
    %3450 = vadd.xlane.f32.xlu0 %v3449
    %v3451 = vpop.xlane.xlu0 %3450
    %v3452 = vsel %vm2565, %v3445, 0.0
    %3453 = vadd.xlane.f32.xlu0 %v3452
    %v3454 = vpop.xlane.xlu0 %3453
    %v3455 = vmul.f32 %v3448, %v846
    %v3456 = vmul.f32 %v3451, %v846
    %v3457 = vmul.f32 %v3454, %v846
    %v3458 = vadd.f32 %v3455, 1e-05
    %v3459 = vadd.f32 %v3456, 1e-05
    %v3460 = vadd.f32 %v3457, 1e-05
    %v3461 = vrsqrt.pop %v3458
    %v3462 = vmul.f32 %v3461, %v3458
    %v3463 = vmul.f32 %v3462, %v3461
    %v3464 = vmul.f32 0.5, %v3463
    %v3465 = vsub.f32 1.5, %v3464
    %v3466 = vmul.f32 %v3461, %v3465
    %vm3467 = vweird.f32 %v3458
    %vm3468 = vweird.f32 %v3461
    %vm3469 = vmor %vm3467, %vm3468
    %v3470 = vsel %vm3469, %v3461, %v3466
    %v3471 = vrsqrt.pop %v3459
    %v3472 = vmul.f32 %v3471, %v3459
    %v3473 = vmul.f32 %v3472, %v3471
    %v3474 = vmul.f32 0.5, %v3473
    %v3475 = vsub.f32 1.5, %v3474
    %v3476 = vmul.f32 %v3471, %v3475
    %vm3477 = vweird.f32 %v3459
    %vm3478 = vweird.f32 %v3471
    %vm3479 = vmor %vm3477, %vm3478
    %v3480 = vsel %vm3479, %v3471, %v3476
    %v3481 = vrsqrt.pop %v3460
    %v3482 = vmul.f32 %v3481, %v3460
    %v3483 = vmul.f32 %v3482, %v3481
    %v3484 = vmul.f32 0.5, %v3483
    %v3485 = vsub.f32 1.5, %v3484
    %v3486 = vmul.f32 %v3481, %v3485
    %vm3487 = vweird.f32 %v3460
    %vm3488 = vweird.f32 %v3481
    %vm3489 = vmor %vm3487, %vm3488
    %v3490 = vsel %vm3489, %v3481, %v3486
    %v3491 = vmul.f32 %v3440, %v3470
    %v3492 = vmul.f32 %v3441, %v3480
    %v3493 = vmul.f32 %v3442, %v3490
    %v3495 = vperm.slane %v2915, 0
    %v3497 = vmul.f32 %v3491, %v3495
    %v3498 = vmul.f32 %v3492, %v3495
    %v3499 = vmul.f32 %v3493, %v3495
    %v3501 = vperm.slane %v2917, 0
    %v3503 = vadd.f32 %v3497, %v3501
    %v3504 = vadd.f32 %v3498, %v3501
    %v3505 = vadd.f32 %v3499, %v3501
    %v3507 = vperm.slane %v2902, 0
    %v3510 = vsel %vm321, %v3503, 0
    %v3513 = vsel %vm321, %v3504, 0
    %v3516 = vsel %vm321, %v3505, 0
    %3518 = vmatpush.msra.mxu0 0.0
    %3519 = vmatpush.msra.mxu0 0.0
    %3520 = vmatpush.msra.mxu0 0.0
    %3521 = vmatpush.msra.mxu0 0.0
    %3522 = vmatpush.msra.mxu0 0.0
    %3523 = vmatpush.msra.mxu0 0.0
    %3524 = vmatpush.msra.mxu0 0.0
    %3525 = vmatpush.msra.mxu0 0.0
    %3526 = vmatpush.msra.mxu0 0.0
    %3527 = vmatpush.msra.mxu0 0.0
    %3528 = vmatpush.msra.mxu0 0.0
    %3529 = vmatpush.msra.mxu0 0.0
    %3530 = vmatpush.msra.mxu0 %v2900
    %3531 = vmatpush.msra.mxu0 %v2899
    %3532 = vmatpush.msra.mxu0 %v2898
    %3533 = vmatpush.msra.mxu0 %v2897
    %3534 = vmatmul.f32.gmra.mxu0 %v3510
    %v3535 = vpop.f32.mrf.mxu0
    %v3536 = vadd.f32 %v3507, %v3535
    %3537 = vmatmul.f32.gmra.mxu0 %v3513
    %v3538 = vpop.f32.mrf.mxu0
    %v3539 = vadd.f32 %v3507, %v3538
    %3540 = vmatmul.f32.gmra.mxu0 %v3516
    %v3541 = vpop.f32.mrf.mxu0
    %v3542 = vadd.f32 %v3507, %v3541
    %3543 = vdwg.mxu0
    %v3544 = vmul.f32 %v3536, 0.5
    %v3545 = vmul.f32 %v3539, 0.5
    %v3546 = vmul.f32 %v3542, 0.5
    %v3547 = vmul.f32 %v3536, 0.044715
    %v3548 = vmul.f32 %v3539, 0.044715
    %v3549 = vmul.f32 %v3542, 0.044715
    %v3550 = vmul.f32 %v3547, %v3536
    %v3551 = vmul.f32 %v3548, %v3539
    %v3552 = vmul.f32 %v3549, %v3542
    %v3553 = vmul.f32 %v3550, %v3536
    %v3554 = vmul.f32 %v3551, %v3539
    %v3555 = vmul.f32 %v3552, %v3542
    %v3556 = vadd.f32 %v3536, %v3553
    %v3557 = vadd.f32 %v3539, %v3554
    %v3558 = vadd.f32 %v3542, %v3555
    %v3559 = vmul.f32 %v3556, 0.7978846
    %v3560 = vmul.f32 %v3557, 0.7978846
    %v3561 = vmul.f32 %v3558, 0.7978846
    %v3562 = vtanh.pop %v3559
    %v3563 = vtanh.pop %v3560
    %v3564 = vtanh.pop %v3561
    %v3565 = vadd.f32 %v3562, 1.0
    %v3566 = vadd.f32 %v3563, 1.0
    %v3567 = vadd.f32 %v3564, 1.0
    %v3568 = vmul.f32 %v3544, %v3565
    %v3569 = vmul.f32 %v3545, %v3566
    %v3570 = vmul.f32 %v3546, %v3567
    %v3572 = vperm.slane %v2913, 0
    %v3575 = vsel %vm984, %v3568, 0
    %v3578 = vsel %vm984, %v3569, 0
    %v3581 = vsel %vm984, %v3570, 0
    %3583 = vmatpush.msra.mxu0 0.0
    %3584 = vmatpush.msra.mxu0 0.0
    %3585 = vmatpush.msra.mxu0 0.0
    %3586 = vmatpush.msra.mxu0 0.0
    %3587 = vmatpush.msra.mxu0 0.0
    %3588 = vmatpush.msra.mxu0 0.0
    %3589 = vmatpush.msra.mxu0 0.0
    %3590 = vmatpush.msra.mxu0 0.0
    %3591 = vmatpush.msra.mxu0 %v2911
    %3592 = vmatpush.msra.mxu0 %v2910
    %3593 = vmatpush.msra.mxu0 %v2909
    %3594 = vmatpush.msra.mxu0 %v2908
    %3595 = vmatpush.msra.mxu0 %v2907
    %3596 = vmatpush.msra.mxu0 %v2906
    %3597 = vmatpush.msra.mxu0 %v2905
    %3598 = vmatpush.msra.mxu0 %v2904
    %3599 = vmatmul.f32.gmra.mxu0 %v3575
    %v3600 = vpop.f32.mrf.mxu0
    %v3601 = vadd.f32 %v3572, %v3600
    %3602 = vmatmul.f32.gmra.mxu0 %v3578
    %v3603 = vpop.f32.mrf.mxu0
    %v3604 = vadd.f32 %v3572, %v3603
    %3605 = vmatmul.f32.gmra.mxu0 %v3581
    %v3606 = vpop.f32.mrf.mxu0
    %v3607 = vadd.f32 %v3572, %v3606
    %3608 = vdwg.mxu0
    %v3609 = vadd.f32 %v3503, %v3601
    %v3610 = vadd.f32 %v3504, %v3604
    %v3611 = vadd.f32 %v3505, %v3607
    %v3612 = vsel %vm321, %v3609, 0.0
    %3613 = vadd.xlane.f32.xlu0 %v3612
    %v3614 = vpop.xlane.xlu0 %3613
    %v3615 = vsel %vm321, %v3610, 0.0
    %3616 = vadd.xlane.f32.xlu0 %v3615
    %v3617 = vpop.xlane.xlu0 %3616
    %v3618 = vsel %vm2565, %v3611, 0.0
    %3619 = vadd.xlane.f32.xlu0 %v3618
    %v3620 = vpop.xlane.xlu0 %3619
    %v3621 = vmul.f32 %v3614, %v846
    %v3622 = vmul.f32 %v3617, %v846
    %v3623 = vmul.f32 %v3620, %v846
    %v3624 = vsub.f32 %v3609, %v3621
    %v3625 = vsub.f32 %v3610, %v3622
    %v3626 = vsub.f32 %v3611, %v3623
    %v3627 = vmul.f32 %v3624, %v3624
    %v3628 = vmul.f32 %v3625, %v3625
    %v3629 = vmul.f32 %v3626, %v3626
    %v3630 = vsel %vm321, %v3627, 0.0
    %3631 = vadd.xlane.f32.xlu0 %v3630
    %v3632 = vpop.xlane.xlu0 %3631
    %v3633 = vsel %vm321, %v3628, 0.0
    %3634 = vadd.xlane.f32.xlu0 %v3633
    %v3635 = vpop.xlane.xlu0 %3634
    %v3636 = vsel %vm2565, %v3629, 0.0
    %3637 = vadd.xlane.f32.xlu0 %v3636
    %v3638 = vpop.xlane.xlu0 %3637
    %v3639 = vmul.f32 %v3632, %v846
    %v3640 = vmul.f32 %v3635, %v846
    %v3641 = vmul.f32 %v3638, %v846
    %v3642 = vadd.f32 %v3639, 1e-05
    %v3643 = vadd.f32 %v3640, 1e-05
    %v3644 = vadd.f32 %v3641, 1e-05
    %v3645 = vrsqrt.pop %v3642
    %v3646 = vmul.f32 %v3645, %v3642
    %v3647 = vmul.f32 %v3646, %v3645
    %v3648 = vmul.f32 0.5, %v3647
    %v3649 = vsub.f32 1.5, %v3648
    %v3650 = vmul.f32 %v3645, %v3649
    %vm3651 = vweird.f32 %v3642
    %vm3652 = vweird.f32 %v3645
    %vm3653 = vmor %vm3651, %vm3652
    %v3654 = vsel %vm3653, %v3645, %v3650
    %v3655 = vrsqrt.pop %v3643
    %v3656 = vmul.f32 %v3655, %v3643
    %v3657 = vmul.f32 %v3656, %v3655
    %v3658 = vmul.f32 0.5, %v3657
    %v3659 = vsub.f32 1.5, %v3658
    %v3660 = vmul.f32 %v3655, %v3659
    %vm3661 = vweird.f32 %v3643
    %vm3662 = vweird.f32 %v3655
    %vm3663 = vmor %vm3661, %vm3662
    %v3664 = vsel %vm3663, %v3655, %v3660
    %v3665 = vrsqrt.pop %v3644
    %v3666 = vmul.f32 %v3665, %v3644
    %v3667 = vmul.f32 %v3666, %v3665
    %v3668 = vmul.f32 0.5, %v3667
    %v3669 = vsub.f32 1.5, %v3668
    %v3670 = vmul.f32 %v3665, %v3669
    %vm3671 = vweird.f32 %v3644
    %vm3672 = vweird.f32 %v3665
    %vm3673 = vmor %vm3671, %vm3672
    %v3674 = vsel %vm3673, %v3665, %v3670
    %v3675 = vmul.f32 %v3624, %v3654
    %v3676 = vmul.f32 %v3625, %v3664
    %v3677 = vmul.f32 %v3626, %v3674
    %v3679 = vperm.slane %v2919, 0
    %v3681 = vmul.f32 %v3675, %v3679
    %v3682 = vmul.f32 %v3676, %v3679
    %v3683 = vmul.f32 %v3677, %v3679
    %v3685 = vperm.slane %v2921, 0
    %v3687 = vadd.f32 %v3681, %v3685
    %v3688 = vadd.f32 %v3682, %v3685
    %v3689 = vadd.f32 %v3683, %v3685
    %v3692 = vrot.slane %v3687, 1
    %v3693 = vrot.slane %v3688, 1
    %v3694 = vsel %vm2824, %v3692, %v3693
    %v3697 = vrot.slane %v3688, 2
    %v3698 = vrot.slane %v3689, 2
    %v3699 = vsel %vm221, %v3697, %v3698
    %v3701 = vsel %vm258, %v3693, %v3699
    %v3703 = vrot.slane %v3694, 4
    %v3704 = vrot.slane %v3701, 4
    %v3705 = vsel %vm271, %v3703, %v3704
    %v3707 = vsel %vm221, %v3705, %v3701
    %v3708 = vld [vmem:[%s25] sm:$0xff]
    %v3709 = vld [vmem:[%s25 + $0x8] sm:$0xff]
    %v3710 = vld [vmem:[%s25 + $0x10] sm:$0xff]
    %v3711 = vld [vmem:[%s25 + $0x18] sm:$0xff]
    %v3712 = vld [vmem:[%s27] sm:$0x1]
    %v3714 = vperm.slane %v3712, 0
    %v3717 = vsel %vm321, %v3707, 0
    %v3719 = vsel %vm321, %v3698, 0
    %3721 = vmatpush.msra.mxu0 0.0
    %3722 = vmatpush.msra.mxu0 0.0
    %3723 = vmatpush.msra.mxu0 0.0
    %3724 = vmatpush.msra.mxu0 0.0
    %3725 = vmatpush.msra.mxu0 0.0
    %3726 = vmatpush.msra.mxu0 0.0
    %3727 = vmatpush.msra.mxu0 0.0
    %3728 = vmatpush.msra.mxu0 0.0
    %3729 = vmatpush.msra.mxu0 0.0
    %3730 = vmatpush.msra.mxu0 0.0
    %3731 = vmatpush.msra.mxu0 0.0
    %3732 = vmatpush.msra.mxu0 0.0
    %3733 = vmatpush.msra.mxu0 %v3711
    %3734 = vmatpush.msra.mxu0 %v3710
    %3735 = vmatpush.msra.mxu0 %v3709
    %3736 = vmatpush.msra.mxu0 %v3708
    %3737 = vmatmul.f32.gmra.mxu0 %v3717
    %v3738 = vpop.f32.mrf.mxu0
    %v3739 = vadd.f32 %v3714, %v3738
    %3740 = vmatmul.f32.gmra.mxu0 %v3719
    %v3741 = vpop.f32.mrf.mxu0
    %v3742 = vadd.f32 %v3714, %v3741
    %3743 = vdwg.mxu0
    %v3744 = vperm.slane %v174, 3
    %v3745 = vadd.f32 %v3739, %v3744
    %vm3746 = vcmask 46080
    %3747 = vst.msk [vmem:[%s81] sm:$0x3f] %vm3746, %v3745
    %v3748 = vperm.slane %v175, 5
    %v3749 = vadd.f32 %v3739, %v3748
    %v3750 = vadd.f32 %v3742, %v3748
    %s3751 = scalar_lea.vmem %s81, 8
    %vm3752 = vcmask 48134
    %3753 = vst.msk [vmem:[%s3751 - $0x6] sm:$0xc0] %vm3752, %v3749
    %vm3754 = vcmask 44032
    %3755 = vst.msk [vmem:[%s3751 + $0x2] sm:$0xf] %vm3754, %v3750
    // Predicated region
    $region162: #{vae_forward.1} parent=1 // pred_check
      _
    $region163: #{vae_forward.1} parent=1 // pred_check_branch
      %3757 = sbr.rel (0) target = $region165
    $region164: #{vae_forward.1} parent=1 // pred_region
      _
    $region165: #{vae_forward.1} parent=1 // pred_fallthru
      _
    // Predicated region
    $region166: #{vae_forward.1} parent=1 // pred_check
      _
    $region167: #{vae_forward.1} parent=1 // pred_check_branch
      %3759 = sbr.rel (0) target = $region169
    $region168: #{vae_forward.1} parent=1 // pred_region
      %3761 = vsyncadd [#allocation3], 0
      %s3763 = sshll.u32 [#allocation2], 4
      %s3764 = int_to_ptr.vmem [resolvable:$true] %s3763
      %s3765 = sshll.u32 %s83, 4
      %s3766 = int_to_ptr.hbm [resolvable:$true] %s3765
      %3768 = dma.vmem_to_hbm [thread:$0]  %s3764, 32, %s3766, [#allocation3]
    $region169: #{vae_forward.1} parent=1 // pred_fallthru
      _
    // Predicated region
    $region170: #{vae_forward.1} parent=1 // pred_check
      _
    $region171: #{vae_forward.1} parent=1 // pred_check_branch
      %3770 = sbr.rel (0) target = $region173
    $region172: #{vae_forward.1} parent=1 // pred_region
      %3772 = vsyncadd [#allocation5], 0
      %s3774 = sshll.u32 [#allocation4], 4
      %s3775 = int_to_ptr.vmem [resolvable:$true] %s3774
      %s3776 = sshll.u32 %s85, 4
      %s3777 = int_to_ptr.hbm [resolvable:$true] %s3776
      %3779 = dma.vmem_to_hbm [thread:$0]  %s3775, 32, %s3777, [#allocation5]
    $region173: #{vae_forward.1} parent=1 // pred_fallthru
      _
    // Predicated region
    $region174: #{vae_forward.1} parent=1 // pred_check
      _
    $region175: #{vae_forward.1} parent=1 // pred_check_branch
      %3781 = sbr.rel (0) target = $region177
    $region176: #{vae_forward.1} parent=1 // pred_region
      _
    $region177: #{vae_forward.1} parent=1 // pred_fallthru
      _
    // Predicated region
    $region178: #{vae_forward.1} parent=1 // pred_check
      _
    $region179: #{vae_forward.1} parent=1 // pred_check_branch
      %3783 = sbr.rel (0) target = $region181
    $region180: #{vae_forward.1} parent=1 // pred_region
      %3785 = dma.done [#allocation3], 32
    $region181: #{vae_forward.1} parent=1 // pred_fallthru
      _
    // Predicated region
    $region182: #{vae_forward.1} parent=1 // pred_check
      _
    $region183: #{vae_forward.1} parent=1 // pred_check_branch
      %3787 = sbr.rel (0) target = $region185
    $region184: #{vae_forward.1} parent=1 // pred_region
      %3789 = dma.done [#allocation5], 32
    $region185: #{vae_forward.1} parent=1 // pred_fallthru
      _
    %3790 = vsyncpa [#allocation3], 1
    %3791 = vsyncpa [#allocation5], 1

</llo_original>
